<compile_context>
chip_gen: v6e
topology: v6e:2x2x1
jax: 0.10.0
libtpu: 0.0.40
codegen_flags: <defaults>
</compile_context>

<pallas_src>
import functools

import jax
import jax.numpy as jnp
from jax.experimental import pallas as pl
from jax.experimental.pallas import tpu as pltpu


# --------------------------------------------------------------------------------------
# Kernel
# --------------------------------------------------------------------------------------
def _bottleneck_kernel(*refs, has_halo):
    if has_halo:
        (xc_ref, xt_ref, xb_ref,                  # (TH,W,Cin) / (1,W,Cin) / (1,W,Cin)  bf16
         w1_ref, w2_ref, w3_ref,                  # (Cin,P) / (9P,P) / (P,Cout)         bf16
         s1_ref, b1_ref, s2_ref, b2_ref, s3_ref, b3_ref,   # (1,P)/(1,P)/(1,P)/(1,P)/(1,Cout)/(1,Cout) f32
         out_ref,                                 # (TH,W,Cout) bf16
         pad_ref) = refs                          # scratch (TH+2, W+2, P) bf16
    else:
        (xc_ref,
         w1_ref, w2_ref, w3_ref,
         s1_ref, b1_ref, s2_ref, b2_ref, s3_ref, b3_ref,
         out_ref,
         pad_ref) = refs

    TH, W, Cin = xc_ref.shape
    P = w1_ref.shape[1]
    Cout = w3_ref.shape[1]
    f32 = jnp.float32
    bf16 = jnp.bfloat16

    # ---- zero the two 1-wide W-border columns of the padded conv2 input ------------------
    # Every interior row is rewritten below, so nothing stale survives across grid steps even
    # though the scratch persists per core ("parallel" grid semantics stay safe).
    pad_ref[:, 0:1, :] = jnp.zeros((TH + 2, 1, P), bf16)
    pad_ref[:, W + 1:W + 2, :] = jnp.zeros((TH + 2, 1, P), bf16)

    # ---- conv1 (1x1) + LSBN1 + ReLU : ONE fused matmul over halo+center+halo rows --------
    if has_halo:
        xin = jnp.concatenate([xt_ref[...], xc_ref[...], xb_ref[...]], axis=0)  # (TH+2,W,Cin) bf16
        rows, row0 = TH + 2, 0
    else:
        xin = xc_ref[...]                                                       # (TH,W,Cin) bf16
        rows, row0 = TH, 1

    h1 = jnp.dot(xin.reshape(rows * W, Cin), w1_ref[...], preferred_element_type=f32)
    h1 = jnp.maximum(h1 * s1_ref[...] + b1_ref[...], 0.0)
    pad_ref[row0:row0 + rows, 1:W + 1, :] = h1.reshape(rows, W, P).astype(bf16)

    # Halo rows that fall outside the image must act as conv2's zero padding (the halo
    # BlockSpecs clamp to a valid row, so zero the corresponding pad row on the boundary tiles).
    if has_halo:
        i = pl.program_id(1)

        @pl.when(i == 0)
        def _():
            pad_ref[0:1, 1:W + 1, :] = jnp.zeros((1, W, P), bf16)

        @pl.when(i == pl.num_programs(1) - 1)
        def _():
            pad_ref[TH + 1:TH + 2, 1:W + 1, :] = jnp.zeros((1, W, P), bf16)
    else:
        pad_ref[0:1, 1:W + 1, :] = jnp.zeros((1, W, P), bf16)
        pad_ref[TH + 1:TH + 2, 1:W + 1, :] = jnp.zeros((1, W, P), bf16)

    # ---- conv2 (3x3, stride=1, pad=1) + LSBN2 + ReLU : 9 accumulating K=P matmuls ---------
    # No im2col patch buffer: reads shifted bf16 pad views directly, accumulates in f32.
    h2 = jnp.zeros((TH * W, P), f32)
    for k in range(9):
        dh, dw = divmod(k, 3)
        h2 = h2 + jnp.dot(
            pad_ref[dh:dh + TH, dw:dw + W, :].reshape(TH * W, P),
            w2_ref[k * P:(k + 1) * P, :],
            preferred_element_type=f32)
    h2 = jnp.maximum(h2 * s2_ref[...] + b2_ref[...], 0.0)

    # ---- conv3 (1x1) + LSBN3 + residual add + ReLU (all elementwise math in f32) ----------
    h3 = jnp.dot(h2.astype(bf16), w3_ref[...], preferred_element_type=f32)
    h3 = h3 * s3_ref[...] + b3_ref[...]
    res = xc_ref[...].astype(f32)   # re-read residual: data already sits in the input buffer
    out_ref[...] = jnp.maximum(h3.reshape(TH, W, Cout) + res, 0.0).astype(out_ref.dtype)


# --------------------------------------------------------------------------------------
# Generation-aware VMEM budget & tile-size selection
# --------------------------------------------------------------------------------------
def _vmem_budget_bytes():
    """~3/4 of the physical per-core VMEM: ~48 MiB on v7x (64 MiB/TC), ~96 MiB on v5e/v6e."""
    try:
        cap = int(pltpu.get_tpu_info().vmem_capacity_bytes)
    except Exception:
        cap = 64 * 1024 * 1024          # conservative (v7x per-TC) fallback
    budget = (cap * 3) // 4
    return int(min(max(budget, 24 * 1024 * 1024), 100 * 1024 * 1024))


def _estimate_vmem_bytes(TH, H, W, Cin, P, Cout):
    f32b, bf16b = 4, 2
    halo = TH < H
    rows = TH + 2 if halo else TH
    xio = 2 * TH * W * Cin * bf16b + 2 * TH * W * Cout * bf16b       # double-buffered in / out
    halo_io = (2 * 2 * W * Cin * bf16b) if halo else 0               # double-buffered halo rows
    pad = (TH + 2) * (W + 2) * P * bf16b                             # bf16 padded conv2 input
    weights = 2 * (Cin * P + 9 * P * P + P * Cout) * bf16b + 2 * 6 * max(P, Cout) * f32b
    live = (rows * W * Cin * bf16b                                   # fused conv1 input staging
            + rows * W * P * f32b                                    # conv1 f32 output
            + TH * W * P * f32b                                      # conv2 accumulator
            + TH * W * Cout * f32b)                                  # conv3 output before store
    return xio + halo_io + pad + weights + live


def _pick_tile_h(N, H, W, Cin, P, Cout, budget_bytes):
    fitting = [d for d in range(1, H + 1)
               if H % d == 0 and _estimate_vmem_bytes(d, H, W, Cin, P, Cout) <= budget_bytes]
    if not fitting:
        return 1
    best = max(fitting)
    # v7x has 2 TensorCores: keep >= 2 "parallel" grid points when possible so a batch-1
    # whole-image tile does not leave one core idle (no-op on v5e/v6e's single core).
    if N * (H // best) < 2:
        multi = [d for d in fitting if (H // d) >= 2]
        if multi:
            best = max(multi)
    return best


# --------------------------------------------------------------------------------------
# Wrappers
# --------------------------------------------------------------------------------------
def bottleneck_forward_nhwc(x, condition_label, params, *, tile_h=None):
    """x: (N, H, W, Cin) NHWC.  Activations are carried in bf16 at the HBM boundary.
    Returns (out_nhwc bf16, condition_label)."""
    x = x.astype(jnp.bfloat16)
    N, H, W, Cin = x.shape
    P = params["w1"].shape[1]
    Cout = params["w3"].shape[1]
    assert Cin == Cout, "downsample=None requires inplanes == planes * expansion"

    budget = _vmem_budget_bytes()
    if tile_h is None:
        tile_h = _pick_tile_h(N, H, W, Cin, P, Cout, budget)
    TH = int(tile_h)
    if H % TH != 0:
        raise ValueError(f"tile_h={TH} must divide H={H}")
    HB = H // TH
    has_halo = TH < H

    # Select the LSBN condition once, on the tiny per-channel vectors, so only the chosen
    # condition's (scale, bias) row is ever DMA'd and no dynamic indexing sits in the kernel.
    cond = jnp.asarray(condition_label, dtype=jnp.int32)
    s1 = params["s1"][cond][None, :]
    b1 = params["b1"][cond][None, :]
    s2 = params["s2"][cond][None, :]
    b2 = params["b2"][cond][None, :]
    s3 = params["s3"][cond][None, :]
    b3 = params["b3"][cond][None, :]

    # bf16 MXU inputs; conv2 weight pre-reshaped to im2col layout (kh, kw, cin) x cout.
    w1 = params["w1"].astype(jnp.bfloat16)                              # (Cin, P)
    w2 = params["w2"].astype(jnp.bfloat16).reshape(9 * P, P)            # (9P, P)
    w3 = params["w3"].astype(jnp.bfloat16)                              # (P, Cout)

    def full_spec(arr):
        return pl.BlockSpec(arr.shape, lambda n, i: (0, 0))

    center_spec = pl.BlockSpec((None, TH, W, Cin), lambda n, i: (n, i, 0, 0))
    if has_halo:
        # 1-row halos (H block size 1 => block index == row index), clamped at the image
        # boundary; the corresponding pad row is zeroed inside the kernel on boundary tiles.
        x_specs = [
            center_spec,
            pl.BlockSpec((None, 1, W, Cin),
                         lambda n, i: (n, jnp.maximum(i * TH - 1, 0), 0, 0)),
            pl.BlockSpec((None, 1, W, Cin),
                         lambda n, i: (n, jnp.minimum(i * TH + TH, H - 1), 0, 0)),
        ]
        x_args = (x, x, x)
    else:
        x_specs = [center_spec]
        x_args = (x,)

    out_nhwc = pl.pallas_call(
        functools.partial(_bottleneck_kernel, has_halo=has_halo),
        out_shape=jax.ShapeDtypeStruct((N, H, W, Cout), jnp.bfloat16),
        grid_spec=pltpu.PrefetchScalarGridSpec(
            num_scalar_prefetch=0,
            grid=(N, HB),
            in_specs=x_specs + [
                full_spec(w1), full_spec(w2), full_spec(w3),
                full_spec(s1), full_spec(b1),
                full_spec(s2), full_spec(b2),
                full_spec(s3), full_spec(b3),
            ],
            out_specs=pl.BlockSpec((None, TH, W, Cout), lambda n, i: (n, i, 0, 0)),
            scratch_shapes=[
                pltpu.VMEM((TH + 2, W + 2, P), jnp.bfloat16),   # zero-padded bf16 conv2 input
            ],
        ),
        compiler_params=pltpu.CompilerParams(
            dimension_semantics=("parallel", "parallel"),       # megacore split on v7x
            vmem_limit_bytes=budget,                            # matches the tile picker budget
        ),
    )(*x_args, w1, w2, w3, s1, b1, s2, b2, s3, b3)

    return out_nhwc, condition_label


def bottleneck_forward(x_nchw, condition_label, params, *, tile_h=None):
    """PyTorch-interface wrapper: (N, Cin, H, W) in / out.  A real NHWC (bf16) model should
    call bottleneck_forward_nhwc directly and pay the layout transpose once at the boundary."""
    x = jnp.transpose(x_nchw, (0, 2, 3, 1))
    out_nhwc, cond = bottleneck_forward_nhwc(x, condition_label, params, tile_h=tile_h)
    return jnp.transpose(out_nhwc, (0, 3, 1, 2)), cond


# --------------------------------------------------------------------------------------
# Parameters / reference
# --------------------------------------------------------------------------------------
def init_params(key, inplanes, planes, num_conditions, eps=1e-5):
    """Deterministic synthetic parameters (shapes match the PyTorch module).
    Conv weights stored in kernel layout:
      conv1.weight (P,Cin,1,1) -> w1 (Cin, P)
      conv2.weight (P,P,3,3)   -> w2 (3, 3, P, P)   (kh, kw, in, out)
      conv3.weight (4P,P,1,1)  -> w3 (P, 4P)
    """
    exp = 4
    ks = jax.random.split(key, 15)
    w1 = jax.random.normal(ks[0], (inplanes, planes), jnp.float32) * (1.0 / inplanes) ** 0.5
    w2 = jax.random.normal(ks[1], (3, 3, planes, planes), jnp.float32) * (1.0 / (9 * planes)) ** 0.5
    w3 = jax.random.normal(ks[2], (planes, planes * exp), jnp.float32) * (1.0 / planes) ** 0.5

    def bn_fold(kg, kb, km, kv, channels):
        gamma = 1.0 + 0.1 * jax.random.normal(kg, (num_conditions, channels), jnp.float32)
        beta = 0.1 * jax.random.normal(kb, (num_conditions, channels), jnp.float32)
        mean = 0.1 * jax.random.normal(km, (num_conditions, channels), jnp.float32)
        var = 1.0 + 0.1 * jax.random.uniform(kv, (num_conditions, channels), jnp.float32)
        scale = gamma * jax.lax.rsqrt(var + eps)
        bias = beta - mean * scale
        return scale, bias

    s1, b1 = bn_fold(ks[3], ks[4], ks[5], ks[6], planes)
    s2, b2 = bn_fold(ks[7], ks[8], ks[9], ks[10], planes)
    s3, b3 = bn_fold(ks[11], ks[12], ks[13], ks[14], planes * exp)
    return dict(w1=w1, w2=w2, w3=w3, s1=s1, b1=b1, s2=s2, b2=b2, s3=s3, b3=b3)


def _reference(x_nchw, cond, p):
    """Pure-JAX reference with the same bf16-at-HBM / f32-accumulate mixed precision."""
    f32, bf16 = jnp.float32, jnp.bfloat16
    x = jnp.transpose(x_nchw, (0, 2, 3, 1)).astype(bf16)   # matches the kernel's HBM activations
    w1 = p["w1"].astype(bf16)
    w2 = p["w2"].astype(bf16)
    w3 = p["w3"].astype(bf16)
    h1 = jnp.einsum("nhwc,cp->nhwp", x, w1, preferred_element_type=f32)
    h1 = jnp.maximum(h1 * p["s1"][cond] + p["b1"][cond], 0.0)
    h2 = jax.lax.conv_general_dilated(
        h1.astype(bf16), w2, window_strides=(1, 1), padding="SAME",
        dimension_numbers=("NHWC", "HWIO", "NHWC"), preferred_element_type=f32)
    h2 = jnp.maximum(h2 * p["s2"][cond] + p["b2"][cond], 0.0)
    h3 = jnp.einsum("nhwp,po->nhwo", h2.astype(bf16), w3, preferred_element_type=f32)
    h3 = h3 * p["s3"][cond] + p["b3"][cond]
    out = jnp.maximum(h3 + x.astype(f32), 0.0)
    return jnp.transpose(out, (0, 3, 1, 2))


# --------------------------------------------------------------------------------------
# Self-test
# --------------------------------------------------------------------------------------
if __name__ == "__main__":
    key = jax.random.PRNGKey(0)
    kx, kp = jax.random.split(key)

    # Small shapes consistent with the module: inplanes = planes * expansion (downsample=None).
    N, H, W = 2, 16, 16
    planes = 32
    inplanes = planes * 4            # 128
    num_conditions = 2
    condition_label = 1

    x = jax.random.normal(kx, (N, inplanes, H, W), jnp.float32)   # PyTorch-style NCHW input
    params = init_params(kp, inplanes, planes, num_conditions)
    ref = _reference(x, condition_label, params)

    # Explicit row tiling: grid = (N, 2) — exercises the halo / masking path.
    out, cond_out = bottleneck_forward(x, condition_label, params, tile_h=8)
    out = jax.block_until_ready(out)
    assert out.shape == (N, planes * 4, H, W)
    assert cond_out == condition_label
    out_f32 = out.astype(jnp.float32)
    err = float(jnp.max(jnp.abs(out_f32 - ref)))
    assert jnp.allclose(out_f32, ref, atol=2e-2, rtol=2e-2), f"max abs err (tiled) = {err}"

    # Auto tile size: whole-image zero-halo fast path under the generation-aware VMEM budget.
    out2, _ = bottleneck_forward(x, condition_label, params)
    out2 = jax.block_until_ready(out2)
    out2_f32 = out2.astype(jnp.float32)
    err2 = float(jnp.max(jnp.abs(out2_f32 - ref)))
    assert jnp.allclose(out2_f32, ref, atol=2e-2, rtol=2e-2), f"max abs err (auto) = {err2}"

    print("KERNEL_OK")
</pallas_src>

<mosaic_0001>
module attributes {stable_mosaic.version = 11 : i64} {
  func.func @_bottleneck_kernel(%arg0: i32, %arg1: i32, %arg2: memref<1x8x16x128xbf16, #tpu.memory_space<vmem>>, %arg3: memref<1x1x16x128xbf16, #tpu.memory_space<vmem>>, %arg4: memref<1x1x16x128xbf16, #tpu.memory_space<vmem>>, %arg5: memref<128x32xbf16, #tpu.memory_space<vmem>>, %arg6: memref<288x32xbf16, #tpu.memory_space<vmem>>, %arg7: memref<32x128xbf16, #tpu.memory_space<vmem>>, %arg8: memref<1x32xf32, #tpu.memory_space<vmem>>, %arg9: memref<1x32xf32, #tpu.memory_space<vmem>>, %arg10: memref<1x32xf32, #tpu.memory_space<vmem>>, %arg11: memref<1x32xf32, #tpu.memory_space<vmem>>, %arg12: memref<1x128xf32, #tpu.memory_space<vmem>>, %arg13: memref<1x128xf32, #tpu.memory_space<vmem>>, %arg14: memref<1x8x16x128xbf16, #tpu.memory_space<vmem>>, %arg15: memref<10x18x32xbf16, #tpu.memory_space<vmem>>) attributes {dimension_semantics = [#tpu.dimension_semantics<parallel>, #tpu.dimension_semantics<parallel>], iteration_bounds = array<i64: 2, 2>, scalar_prefetch = 0 : i64, scratch_operands = 1 : i64, tpu.core_type = #tpu.core_type<tc>, window_params = [{transform_indices = @transform_0, window_bounds = array<i64: 1, 8, 16, 128>}, {transform_indices = @transform_1, window_bounds = array<i64: 1, 1, 16, 128>}, {transform_indices = @transform_2, window_bounds = array<i64: 1, 1, 16, 128>}, {pipeline_mode = #tpu.pipeline_mode<synchronous>, transform_indices = @transform_3, window_bounds = array<i64: 128, 32>}, {pipeline_mode = #tpu.pipeline_mode<synchronous>, transform_indices = @transform_4, window_bounds = array<i64: 288, 32>}, {pipeline_mode = #tpu.pipeline_mode<synchronous>, transform_indices = @transform_5, window_bounds = array<i64: 32, 128>}, {pipeline_mode = #tpu.pipeline_mode<synchronous>, transform_indices = @transform_6, window_bounds = array<i64: 1, 32>}, {pipeline_mode = #tpu.pipeline_mode<synchronous>, transform_indices = @transform_7, window_bounds = array<i64: 1, 32>}, {pipeline_mode = #tpu.pipeline_mode<synchronous>, transform_indices = @transform_8, window_bounds = array<i64: 1, 32>}, {pipeline_mode = #tpu.pipeline_mode<synchronous>, transform_indices = @transform_9, window_bounds = array<i64: 1, 32>}, {pipeline_mode = #tpu.pipeline_mode<synchronous>, transform_indices = @transform_10, window_bounds = array<i64: 1, 128>}, {pipeline_mode = #tpu.pipeline_mode<synchronous>, transform_indices = @transform_11, window_bounds = array<i64: 1, 128>}, {transform_indices = @transform_12, window_bounds = array<i64: 1, 8, 16, 128>}]} {
    %cst = arith.constant 0.000000e+00 : bf16
    %0 = vector.broadcast %cst : bf16 to vector<10x1x32xbf16>
    %c0 = arith.constant 0 : index
    %c0_0 = arith.constant 0 : index
    %c0_1 = arith.constant 0 : index
    %1 = vector.load %arg15[%c0, %c0_0, %c0_1] : memref<10x18x32xbf16, #tpu.memory_space<vmem>>, vector<10x1x32xbf16>
    tpu.vector_store %arg15[%c0, %c0_0, %c0_1], %0 {strides = array<i32>} : memref<10x18x32xbf16, #tpu.memory_space<vmem>>, vector<10x1x32xbf16>,
    %cst_2 = arith.constant 0.000000e+00 : bf16
    %2 = vector.broadcast %cst_2 : bf16 to vector<10x1x32xbf16>
    %c0_3 = arith.constant 0 : index
    %c17 = arith.constant 17 : index
    %c0_4 = arith.constant 0 : index
    %3 = vector.load %arg15[%c0_3, %c17, %c0_4] : memref<10x18x32xbf16, #tpu.memory_space<vmem>>, vector<10x1x32xbf16>
    tpu.vector_store %arg15[%c0_3, %c17, %c0_4], %2 {strides = array<i32>} : memref<10x18x32xbf16, #tpu.memory_space<vmem>>, vector<10x1x32xbf16>,
    %c0_5 = arith.constant 0 : index
    %c0_6 = arith.constant 0 : index
    %c0_7 = arith.constant 0 : index
    %c0_8 = arith.constant 0 : index
    %4 = vector.load %arg3[%c0_5, %c0_6, %c0_7, %c0_8] : memref<1x1x16x128xbf16, #tpu.memory_space<vmem>>, vector<1x1x16x128xbf16>
    %5 = vector.shape_cast %4 : vector<1x1x16x128xbf16> to vector<1x16x128xbf16>
    %c0_9 = arith.constant 0 : index
    %c0_10 = arith.constant 0 : index
    %c0_11 = arith.constant 0 : index
    %c0_12 = arith.constant 0 : index
    %6 = vector.load %arg2[%c0_9, %c0_10, %c0_11, %c0_12] : memref<1x8x16x128xbf16, #tpu.memory_space<vmem>>, vector<1x8x16x128xbf16>
    %7 = vector.shape_cast %6 : vector<1x8x16x128xbf16> to vector<8x16x128xbf16>
    %c0_13 = arith.constant 0 : index
    %c0_14 = arith.constant 0 : index
    %c0_15 = arith.constant 0 : index
    %c0_16 = arith.constant 0 : index
    %8 = vector.load %arg4[%c0_13, %c0_14, %c0_15, %c0_16] : memref<1x1x16x128xbf16, #tpu.memory_space<vmem>>, vector<1x1x16x128xbf16>
    %9 = vector.shape_cast %8 : vector<1x1x16x128xbf16> to vector<1x16x128xbf16>
    %10 = tpu.concatenate %5, %7, %9 in 0 : vector<1x16x128xbf16>, vector<8x16x128xbf16>, vector<1x16x128xbf16> -> vector<10x16x128xbf16>
    %11 = vector.shape_cast %10 : vector<10x16x128xbf16> to vector<160x128xbf16>
    %c0_17 = arith.constant 0 : index
    %c0_18 = arith.constant 0 : index
    %12 = vector.load %arg5[%c0_17, %c0_18] : memref<128x32xbf16, #tpu.memory_space<vmem>>, vector<128x32xbf16>
    %cst_19 = arith.constant dense<0.000000e+00> : vector<160x32xf32>
    %13 = tpu.matmul %11, %12, %cst_19 {dimension_numbers = #tpu.dot_dimension_numbers<[1], [0], [0], [1], [0, 0, 1, 1], [], []>} : vector<160x128xbf16>, vector<128x32xbf16>, vector<160x32xf32> -> vector<160x32xf32>
    %c0_20 = arith.constant 0 : index
    %c0_21 = arith.constant 0 : index
    %14 = vector.load %arg8[%c0_20, %c0_21] : memref<1x32xf32, #tpu.memory_space<vmem>>, vector<1x32xf32>
    %15 = vector.broadcast %14 : vector<1x32xf32> to vector<160x32xf32>
    %16 = arith.mulf %13, %15 : vector<160x32xf32>
    %c0_22 = arith.constant 0 : index
    %c0_23 = arith.constant 0 : index
    %17 = vector.load %arg9[%c0_22, %c0_23] : memref<1x32xf32, #tpu.memory_space<vmem>>, vector<1x32xf32>
    %18 = vector.broadcast %17 : vector<1x32xf32> to vector<160x32xf32>
    %19 = arith.addf %16, %18 : vector<160x32xf32>
    %cst_24 = arith.constant 0.000000e+00 : f32
    %20 = vector.broadcast %cst_24 : f32 to vector<160x32xf32>
    %21 = arith.maximumf %19, %20 : vector<160x32xf32>
    %22 = vector.shape_cast %21 : vector<160x32xf32> to vector<10x16x32xf32>
    %23 = arith.truncf %22 : vector<10x16x32xf32> to vector<10x16x32xbf16>
    %c0_25 = arith.constant 0 : index
    %c1 = arith.constant 1 : index
    %c0_26 = arith.constant 0 : index
    %24 = vector.load %arg15[%c0_25, %c1, %c0_26] : memref<10x18x32xbf16, #tpu.memory_space<vmem>>, vector<10x16x32xbf16>
    tpu.vector_store %arg15[%c0_25, %c1, %c0_26], %23 {strides = array<i32>} : memref<10x18x32xbf16, #tpu.memory_space<vmem>>, vector<10x16x32xbf16>,
    %c0_i32 = arith.constant 0 : i32
    %25 = arith.cmpi eq, %arg1, %c0_i32 : i32
    %26 = arith.extui %25 : i1 to i32
    %c0_i32_27 = arith.constant 0 : i32
    %27 = arith.cmpi ne, %26, %c0_i32_27 : i32
    scf.if %27 {
      %cst_96 = arith.constant 0.000000e+00 : bf16
      %105 = vector.broadcast %cst_96 : bf16 to vector<1x16x32xbf16>
      %c0_97 = arith.constant 0 : index
      %c1_98 = arith.constant 1 : index
      %c0_99 = arith.constant 0 : index
      %106 = vector.load %arg15[%c0_97, %c1_98, %c0_99] : memref<10x18x32xbf16, #tpu.memory_space<vmem>>, vector<1x16x32xbf16>
      tpu.vector_store %arg15[%c0_97, %c1_98, %c0_99], %105 {strides = array<i32>} : memref<10x18x32xbf16, #tpu.memory_space<vmem>>, vector<1x16x32xbf16>,
    } else {
    }
    %c1_i32 = arith.constant 1 : i32
    %28 = arith.cmpi eq, %arg1, %c1_i32 : i32
    %29 = arith.extui %28 : i1 to i32
    %c0_i32_28 = arith.constant 0 : i32
    %30 = arith.cmpi ne, %29, %c0_i32_28 : i32
    scf.if %30 {
      %cst_96 = arith.constant 0.000000e+00 : bf16
      %105 = vector.broadcast %cst_96 : bf16 to vector<1x16x32xbf16>
      %c9 = arith.constant 9 : index
      %c1_97 = arith.constant 1 : index
      %c0_98 = arith.constant 0 : index
      %106 = vector.load %arg15[%c9, %c1_97, %c0_98] : memref<10x18x32xbf16, #tpu.memory_space<vmem>>, vector<1x16x32xbf16>
      tpu.vector_store %arg15[%c9, %c1_97, %c0_98], %105 {strides = array<i32>} : memref<10x18x32xbf16, #tpu.memory_space<vmem>>, vector<1x16x32xbf16>,
    } else {
    }
    %cst_29 = arith.constant 0.000000e+00 : f32
    %31 = vector.broadcast %cst_29 : f32 to vector<128x32xf32>
    %c0_30 = arith.constant 0 : index
    %c0_31 = arith.constant 0 : index
    %c0_32 = arith.constant 0 : index
    %32 = vector.load %arg15[%c0_30, %c0_31, %c0_32] : memref<10x18x32xbf16, #tpu.memory_space<vmem>>, vector<8x16x32xbf16>
    %33 = vector.shape_cast %32 : vector<8x16x32xbf16> to vector<128x32xbf16>
    %c0_33 = arith.constant 0 : index
    %c0_34 = arith.constant 0 : index
    %34 = vector.load %arg6[%c0_33, %c0_34] : memref<288x32xbf16, #tpu.memory_space<vmem>>, vector<32x32xbf16>
    %cst_35 = arith.constant dense<0.000000e+00> : vector<128x32xf32>
    %35 = tpu.matmul %33, %34, %cst_35 {dimension_numbers = #tpu.dot_dimension_numbers<[1], [0], [0], [1], [0, 0, 1, 1], [], []>} : vector<128x32xbf16>, vector<32x32xbf16>, vector<128x32xf32> -> vector<128x32xf32>
    %36 = arith.addf %31, %35 : vector<128x32xf32>
    %c0_36 = arith.constant 0 : index
    %c1_37 = arith.constant 1 : index
    %c0_38 = arith.constant 0 : index
    %37 = vector.load %arg15[%c0_36, %c1_37, %c0_38] : memref<10x18x32xbf16, #tpu.memory_space<vmem>>, vector<8x16x32xbf16>
    %38 = vector.shape_cast %37 : vector<8x16x32xbf16> to vector<128x32xbf16>
    %c32 = arith.constant 32 : index
    %c0_39 = arith.constant 0 : index
    %39 = vector.load %arg6[%c32, %c0_39] : memref<288x32xbf16, #tpu.memory_space<vmem>>, vector<32x32xbf16>
    %cst_40 = arith.constant dense<0.000000e+00> : vector<128x32xf32>
    %40 = tpu.matmul %38, %39, %cst_40 {dimension_numbers = #tpu.dot_dimension_numbers<[1], [0], [0], [1], [0, 0, 1, 1], [], []>} : vector<128x32xbf16>, vector<32x32xbf16>, vector<128x32xf32> -> vector<128x32xf32>
    %41 = arith.addf %36, %40 : vector<128x32xf32>
    %c0_41 = arith.constant 0 : index
    %c2 = arith.constant 2 : index
    %c0_42 = arith.constant 0 : index
    %42 = vector.load %arg15[%c0_41, %c2, %c0_42] : memref<10x18x32xbf16, #tpu.memory_space<vmem>>, vector<8x16x32xbf16>
    %43 = vector.shape_cast %42 : vector<8x16x32xbf16> to vector<128x32xbf16>
    %c64 = arith.constant 64 : index
    %c0_43 = arith.constant 0 : index
    %44 = vector.load %arg6[%c64, %c0_43] : memref<288x32xbf16, #tpu.memory_space<vmem>>, vector<32x32xbf16>
    %cst_44 = arith.constant dense<0.000000e+00> : vector<128x32xf32>
    %45 = tpu.matmul %43, %44, %cst_44 {dimension_numbers = #tpu.dot_dimension_numbers<[1], [0], [0], [1], [0, 0, 1, 1], [], []>} : vector<128x32xbf16>, vector<32x32xbf16>, vector<128x32xf32> -> vector<128x32xf32>
    %46 = arith.addf %41, %45 : vector<128x32xf32>
    %c1_45 = arith.constant 1 : index
    %c0_46 = arith.constant 0 : index
    %c0_47 = arith.constant 0 : index
    %47 = vector.load %arg15[%c1_45, %c0_46, %c0_47] : memref<10x18x32xbf16, #tpu.memory_space<vmem>>, vector<8x16x32xbf16>
    %48 = vector.shape_cast %47 : vector<8x16x32xbf16> to vector<128x32xbf16>
    %c96 = arith.constant 96 : index
    %c0_48 = arith.constant 0 : index
    %49 = vector.load %arg6[%c96, %c0_48] : memref<288x32xbf16, #tpu.memory_space<vmem>>, vector<32x32xbf16>
    %cst_49 = arith.constant dense<0.000000e+00> : vector<128x32xf32>
    %50 = tpu.matmul %48, %49, %cst_49 {dimension_numbers = #tpu.dot_dimension_numbers<[1], [0], [0], [1], [0, 0, 1, 1], [], []>} : vector<128x32xbf16>, vector<32x32xbf16>, vector<128x32xf32> -> vector<128x32xf32>
    %51 = arith.addf %46, %50 : vector<128x32xf32>
    %c1_50 = arith.constant 1 : index
    %c1_51 = arith.constant 1 : index
    %c0_52 = arith.constant 0 : index
    %52 = vector.load %arg15[%c1_50, %c1_51, %c0_52] : memref<10x18x32xbf16, #tpu.memory_space<vmem>>, vector<8x16x32xbf16>
    %53 = vector.shape_cast %52 : vector<8x16x32xbf16> to vector<128x32xbf16>
    %c128 = arith.constant 128 : index
    %c0_53 = arith.constant 0 : index
    %54 = vector.load %arg6[%c128, %c0_53] : memref<288x32xbf16, #tpu.memory_space<vmem>>, vector<32x32xbf16>
    %cst_54 = arith.constant dense<0.000000e+00> : vector<128x32xf32>
    %55 = tpu.matmul %53, %54, %cst_54 {dimension_numbers = #tpu.dot_dimension_numbers<[1], [0], [0], [1], [0, 0, 1, 1], [], []>} : vector<128x32xbf16>, vector<32x32xbf16>, vector<128x32xf32> -> vector<128x32xf32>
    %56 = arith.addf %51, %55 : vector<128x32xf32>
    %c1_55 = arith.constant 1 : index
    %c2_56 = arith.constant 2 : index
    %c0_57 = arith.constant 0 : index
    %57 = vector.load %arg15[%c1_55, %c2_56, %c0_57] : memref<10x18x32xbf16, #tpu.memory_space<vmem>>, vector<8x16x32xbf16>
    %58 = vector.shape_cast %57 : vector<8x16x32xbf16> to vector<128x32xbf16>
    %c160 = arith.constant 160 : index
    %c0_58 = arith.constant 0 : index
    %59 = vector.load %arg6[%c160, %c0_58] : memref<288x32xbf16, #tpu.memory_space<vmem>>, vector<32x32xbf16>
    %cst_59 = arith.constant dense<0.000000e+00> : vector<128x32xf32>
    %60 = tpu.matmul %58, %59, %cst_59 {dimension_numbers = #tpu.dot_dimension_numbers<[1], [0], [0], [1], [0, 0, 1, 1], [], []>} : vector<128x32xbf16>, vector<32x32xbf16>, vector<128x32xf32> -> vector<128x32xf32>
    %61 = arith.addf %56, %60 : vector<128x32xf32>
    %c2_60 = arith.constant 2 : index
    %c0_61 = arith.constant 0 : index
    %c0_62 = arith.constant 0 : index
    %62 = vector.load %arg15[%c2_60, %c0_61, %c0_62] : memref<10x18x32xbf16, #tpu.memory_space<vmem>>, vector<8x16x32xbf16>
    %63 = vector.shape_cast %62 : vector<8x16x32xbf16> to vector<128x32xbf16>
    %c192 = arith.constant 192 : index
    %c0_63 = arith.constant 0 : index
    %64 = vector.load %arg6[%c192, %c0_63] : memref<288x32xbf16, #tpu.memory_space<vmem>>, vector<32x32xbf16>
    %cst_64 = arith.constant dense<0.000000e+00> : vector<128x32xf32>
    %65 = tpu.matmul %63, %64, %cst_64 {dimension_numbers = #tpu.dot_dimension_numbers<[1], [0], [0], [1], [0, 0, 1, 1], [], []>} : vector<128x32xbf16>, vector<32x32xbf16>, vector<128x32xf32> -> vector<128x32xf32>
    %66 = arith.addf %61, %65 : vector<128x32xf32>
    %c2_65 = arith.constant 2 : index
    %c1_66 = arith.constant 1 : index
    %c0_67 = arith.constant 0 : index
    %67 = vector.load %arg15[%c2_65, %c1_66, %c0_67] : memref<10x18x32xbf16, #tpu.memory_space<vmem>>, vector<8x16x32xbf16>
    %68 = vector.shape_cast %67 : vector<8x16x32xbf16> to vector<128x32xbf16>
    %c224 = arith.constant 224 : index
    %c0_68 = arith.constant 0 : index
    %69 = vector.load %arg6[%c224, %c0_68] : memref<288x32xbf16, #tpu.memory_space<vmem>>, vector<32x32xbf16>
    %cst_69 = arith.constant dense<0.000000e+00> : vector<128x32xf32>
    %70 = tpu.matmul %68, %69, %cst_69 {dimension_numbers = #tpu.dot_dimension_numbers<[1], [0], [0], [1], [0, 0, 1, 1], [], []>} : vector<128x32xbf16>, vector<32x32xbf16>, vector<128x32xf32> -> vector<128x32xf32>
    %71 = arith.addf %66, %70 : vector<128x32xf32>
    %c2_70 = arith.constant 2 : index
    %c2_71 = arith.constant 2 : index
    %c0_72 = arith.constant 0 : index
    %72 = vector.load %arg15[%c2_70, %c2_71, %c0_72] : memref<10x18x32xbf16, #tpu.memory_space<vmem>>, vector<8x16x32xbf16>
    %73 = vector.shape_cast %72 : vector<8x16x32xbf16> to vector<128x32xbf16>
    %c256 = arith.constant 256 : index
    %c0_73 = arith.constant 0 : index
    %74 = vector.load %arg6[%c256, %c0_73] : memref<288x32xbf16, #tpu.memory_space<vmem>>, vector<32x32xbf16>
    %cst_74 = arith.constant dense<0.000000e+00> : vector<128x32xf32>
    %75 = tpu.matmul %73, %74, %cst_74 {dimension_numbers = #tpu.dot_dimension_numbers<[1], [0], [0], [1], [0, 0, 1, 1], [], []>} : vector<128x32xbf16>, vector<32x32xbf16>, vector<128x32xf32> -> vector<128x32xf32>
    %76 = arith.addf %71, %75 : vector<128x32xf32>
    %c0_75 = arith.constant 0 : index
    %c0_76 = arith.constant 0 : index
    %77 = vector.load %arg10[%c0_75, %c0_76] : memref<1x32xf32, #tpu.memory_space<vmem>>, vector<1x32xf32>
    %78 = vector.broadcast %77 : vector<1x32xf32> to vector<128x32xf32>
    %79 = arith.mulf %76, %78 : vector<128x32xf32>
    %c0_77 = arith.constant 0 : index
    %c0_78 = arith.constant 0 : index
    %80 = vector.load %arg11[%c0_77, %c0_78] : memref<1x32xf32, #tpu.memory_space<vmem>>, vector<1x32xf32>
    %81 = vector.broadcast %80 : vector<1x32xf32> to vector<128x32xf32>
    %82 = arith.addf %79, %81 : vector<128x32xf32>
    %cst_79 = arith.constant 0.000000e+00 : f32
    %83 = vector.broadcast %cst_79 : f32 to vector<128x32xf32>
    %84 = arith.maximumf %82, %83 : vector<128x32xf32>
    %85 = arith.truncf %84 : vector<128x32xf32> to vector<128x32xbf16>
    %c0_80 = arith.constant 0 : index
    %c0_81 = arith.constant 0 : index
    %86 = vector.load %arg7[%c0_80, %c0_81] : memref<32x128xbf16, #tpu.memory_space<vmem>>, vector<32x128xbf16>
    %cst_82 = arith.constant dense<0.000000e+00> : vector<128x128xf32>
    %87 = tpu.matmul %85, %86, %cst_82 {dimension_numbers = #tpu.dot_dimension_numbers<[1], [0], [0], [1], [0, 0, 1, 1], [], []>} : vector<128x32xbf16>, vector<32x128xbf16>, vector<128x128xf32> -> vector<128x128xf32>
    %c0_83 = arith.constant 0 : index
    %c0_84 = arith.constant 0 : index
    %88 = vector.load %arg12[%c0_83, %c0_84] : memref<1x128xf32, #tpu.memory_space<vmem>>, vector<1x128xf32>
    %89 = vector.broadcast %88 : vector<1x128xf32> to vector<128x128xf32>
    %90 = arith.mulf %87, %89 : vector<128x128xf32>
    %c0_85 = arith.constant 0 : index
    %c0_86 = arith.constant 0 : index
    %91 = vector.load %arg13[%c0_85, %c0_86] : memref<1x128xf32, #tpu.memory_space<vmem>>, vector<1x128xf32>
    %92 = vector.broadcast %91 : vector<1x128xf32> to vector<128x128xf32>
    %93 = arith.addf %90, %92 : vector<128x128xf32>
    %c0_87 = arith.constant 0 : index
    %c0_88 = arith.constant 0 : index
    %c0_89 = arith.constant 0 : index
    %c0_90 = arith.constant 0 : index
    %94 = vector.load %arg2[%c0_87, %c0_88, %c0_89, %c0_90] : memref<1x8x16x128xbf16, #tpu.memory_space<vmem>>, vector<1x8x16x128xbf16>
    %95 = vector.shape_cast %94 : vector<1x8x16x128xbf16> to vector<8x16x128xbf16>
    %96 = arith.extf %95 : vector<8x16x128xbf16> to vector<8x16x128xf32>
    %97 = vector.shape_cast %93 : vector<128x128xf32> to vector<8x16x128xf32>
    %98 = arith.addf %97, %96 : vector<8x16x128xf32>
    %cst_91 = arith.constant 0.000000e+00 : f32
    %99 = vector.broadcast %cst_91 : f32 to vector<8x16x128xf32>
    %100 = arith.maximumf %98, %99 : vector<8x16x128xf32>
    %101 = arith.truncf %100 : vector<8x16x128xf32> to vector<8x16x128xbf16>
    %c0_92 = arith.constant 0 : index
    %c0_93 = arith.constant 0 : index
    %c0_94 = arith.constant 0 : index
    %c0_95 = arith.constant 0 : index
    %102 = vector.load %arg14[%c0_92, %c0_93, %c0_94, %c0_95] : memref<1x8x16x128xbf16, #tpu.memory_space<vmem>>, vector<1x8x16x128xbf16>
    %103 = vector.shape_cast %102 : vector<1x8x16x128xbf16> to vector<8x16x128xbf16>
    %104 = vector.shape_cast %101 : vector<8x16x128xbf16> to vector<1x8x16x128xbf16>
    tpu.vector_store %arg14[%c0_92, %c0_93, %c0_94, %c0_95], %104 {strides = array<i32>} : memref<1x8x16x128xbf16, #tpu.memory_space<vmem>>, vector<1x8x16x128xbf16>,
    return
  }
  func.func @transform_0(%arg0: i32, %arg1: i32) -> (i32, i32, i32, i32) {
    %c0_i32 = arith.constant 0 : i32
    %c0_i32_0 = arith.constant 0 : i32
    %c0_i32_1 = arith.constant 0 : i32
    return %arg0, %arg1, %c0_i32, %c0_i32_0 : i32, i32, i32, i32
  }
  func.func @transform_1(%arg0: i32, %arg1: i32) -> (i32, i32, i32, i32) {
    %c8_i32 = arith.constant 8 : i32
    %0 = arith.muli %arg1, %c8_i32 : i32
    %c1_i32 = arith.constant 1 : i32
    %1 = arith.subi %0, %c1_i32 : i32
    %c0_i32 = arith.constant 0 : i32
    %2 = arith.maxsi %1, %c0_i32 : i32
    %c0_i32_0 = arith.constant 0 : i32
    %c0_i32_1 = arith.constant 0 : i32
    %c0_i32_2 = arith.constant 0 : i32
    return %arg0, %2, %c0_i32_0, %c0_i32_1 : i32, i32, i32, i32
  }
  func.func @transform_2(%arg0: i32, %arg1: i32) -> (i32, i32, i32, i32) {
    %c8_i32 = arith.constant 8 : i32
    %0 = arith.muli %arg1, %c8_i32 : i32
    %c8_i32_0 = arith.constant 8 : i32
    %1 = arith.addi %0, %c8_i32_0 : i32
    %c15_i32 = arith.constant 15 : i32
    %2 = arith.minsi %1, %c15_i32 : i32
    %c0_i32 = arith.constant 0 : i32
    %c0_i32_1 = arith.constant 0 : i32
    %c0_i32_2 = arith.constant 0 : i32
    return %arg0, %2, %c0_i32, %c0_i32_1 : i32, i32, i32, i32
  }
  func.func @transform_3(%arg0: i32, %arg1: i32) -> (i32, i32) {
    %c0_i32 = arith.constant 0 : i32
    %c0_i32_0 = arith.constant 0 : i32
    %c0_i32_1 = arith.constant 0 : i32
    return %c0_i32, %c0_i32_0 : i32, i32
  }
  func.func @transform_4(%arg0: i32, %arg1: i32) -> (i32, i32) {
    %c0_i32 = arith.constant 0 : i32
    %c0_i32_0 = arith.constant 0 : i32
    %c0_i32_1 = arith.constant 0 : i32
    return %c0_i32, %c0_i32_0 : i32, i32
  }
  func.func @transform_5(%arg0: i32, %arg1: i32) -> (i32, i32) {
    %c0_i32 = arith.constant 0 : i32
    %c0_i32_0 = arith.constant 0 : i32
    %c0_i32_1 = arith.constant 0 : i32
    return %c0_i32, %c0_i32_0 : i32, i32
  }
  func.func @transform_6(%arg0: i32, %arg1: i32) -> (i32, i32) {
    %c0_i32 = arith.constant 0 : i32
    %c0_i32_0 = arith.constant 0 : i32
    %c0_i32_1 = arith.constant 0 : i32
    return %c0_i32, %c0_i32_0 : i32, i32
  }
  func.func @transform_7(%arg0: i32, %arg1: i32) -> (i32, i32) {
    %c0_i32 = arith.constant 0 : i32
    %c0_i32_0 = arith.constant 0 : i32
    %c0_i32_1 = arith.constant 0 : i32
    return %c0_i32, %c0_i32_0 : i32, i32
  }
  func.func @transform_8(%arg0: i32, %arg1: i32) -> (i32, i32) {
    %c0_i32 = arith.constant 0 : i32
    %c0_i32_0 = arith.constant 0 : i32
    %c0_i32_1 = arith.constant 0 : i32
    return %c0_i32, %c0_i32_0 : i32, i32
  }
  func.func @transform_9(%arg0: i32, %arg1: i32) -> (i32, i32) {
    %c0_i32 = arith.constant 0 : i32
    %c0_i32_0 = arith.constant 0 : i32
    %c0_i32_1 = arith.constant 0 : i32
    return %c0_i32, %c0_i32_0 : i32, i32
  }
  func.func @transform_10(%arg0: i32, %arg1: i32) -> (i32, i32) {
    %c0_i32 = arith.constant 0 : i32
    %c0_i32_0 = arith.constant 0 : i32
    %c0_i32_1 = arith.constant 0 : i32
    return %c0_i32, %c0_i32_0 : i32, i32
  }
  func.func @transform_11(%arg0: i32, %arg1: i32) -> (i32, i32) {
    %c0_i32 = arith.constant 0 : i32
    %c0_i32_0 = arith.constant 0 : i32
    %c0_i32_1 = arith.constant 0 : i32
    return %c0_i32, %c0_i32_0 : i32, i32
  }
  func.func @transform_12(%arg0: i32, %arg1: i32) -> (i32, i32, i32, i32) {
    %c0_i32 = arith.constant 0 : i32
    %c0_i32_0 = arith.constant 0 : i32
    %c0_i32_1 = arith.constant 0 : i32
    return %arg0, %arg1, %c0_i32, %c0_i32_0 : i32, i32, i32, i32
  }
}

</mosaic_0001>

<llo_original>
// kernel: tpu_custom_call.1
$region0: #{tpu_custom_call.1}
  #allocation0 [shape = 'u32[]', space=smem, size = 0x4, offset = 0x4, fixed_abs, tag = 'smem constant byte address 0x4 - core index']
  #allocation1 [shape = 'u32[144,128]{1,0:T(1,128)}', space=vmem, size = 0x12000, scoped, tag = 'internal scratch']
  #allocation2 [shape = 'bf16[10,18,32]{2,1,0:T(8,128)(2,1)}', space=vmem, size = 0xf000, scoped, tag = 'scratch operand']
  %s0 = inlined_call_operand.vmem [shape: bf16[2,16,16,128], index: 0, kind: input, shape index: {}]
  %s1 = inlined_call_operand.hbm [shape: bf16[2,16,16,128], index: 1, kind: input, shape index: {}]
  %s2 = inlined_call_operand.hbm [shape: bf16[2,16,16,128], index: 2, kind: input, shape index: {}]
  %s3 = inlined_call_operand.vmem [shape: bf16[128,32], index: 3, kind: input, shape index: {}]
  %s4 = inlined_call_operand.vmem [shape: bf16[288,32], index: 4, kind: input, shape index: {}]
  %s5 = inlined_call_operand.vmem [shape: bf16[32,128], index: 5, kind: input, shape index: {}]
  %s6 = inlined_call_operand.vmem [shape: f32[1,32], index: 6, kind: input, shape index: {}]
  %s7 = inlined_call_operand.vmem [shape: f32[1,32], index: 7, kind: input, shape index: {}]
  %s8 = inlined_call_operand.vmem [shape: f32[1,32], index: 8, kind: input, shape index: {}]
  %s9 = inlined_call_operand.vmem [shape: f32[1,32], index: 9, kind: input, shape index: {}]
  %s10 = inlined_call_operand.vmem [shape: f32[1,128], index: 10, kind: input, shape index: {}]
  %s11 = inlined_call_operand.vmem [shape: f32[1,128], index: 11, kind: input, shape index: {}]
  %s12 = inlined_call_operand.hbm [shape: bf16[2,16,16,128], index: 12, kind: output, shape index: {}]
  %s13 = sld [smem:[#allocation0]]
  $region97: #{tpu_custom_call.1} parent=0
    _
  %s15 = ssub.s32 1, %s13
  %s16 = scalar_select 0, %s15, %s13
  $region1: #{tpu_custom_call.1} parent=0
    #allocation3 [shape = 'u8[8192]{0}', space=vmem, size = 0x2000, scoped, tag = 'input window, operand 1']
    #allocation4 [shape = 's32[2]{0}', space=sflag, size = 0x8, scoped, tag = 'scoped memory for tpu_custom_call.1']
    #allocation5 [shape = 's32[2]{0}', space=sflag, size = 0x8, scoped, tag = 'scoped memory for tpu_custom_call.1']
    #allocation6 [shape = 'u8[8192]{0}', space=vmem, size = 0x2000, scoped, tag = 'input window, operand 2']
    #allocation7 [shape = 's32[2]{0}', space=sflag, size = 0x8, scoped, tag = 'scoped memory for tpu_custom_call.1']
    #allocation8 [shape = 'u8[65536]{0}', space=vmem, size = 0x10000, scoped, tag = 'output window, operand 0']
    %17 = vsyncpa [#allocation4], 0
    %s18 = scalar_lea.sflag [#allocation4], 1
    %19 = vsyncpa %s18, 0
    %20 = vsyncpa [#allocation7], 0
    %s21 = scalar_lea.sflag [#allocation7], 1
    %22 = vsyncpa %s21, 0
    %23 = vsyncpa [#allocation5], 0
    %s24 = scalar_lea.sflag [#allocation5], 1
    %25 = vsyncpa %s24, 0
    loop: start=0, step=1, limit=6
    $region2: #{tpu_custom_call.1} parent=1 // loop_pre_header
      _
    $region3: #{tpu_custom_call.1} parent=1 // loop_header
      %s27 = sphi 0, %s31
      %p28 = scmp.ge.s32.totalorder %s27, 6
      %s34 = sphi 0, %s46
      %s35 = sphi 0, %s42
      %s36 = sphi 0, %s34
      %s37 = sphi 0, %s35
      %s38 = sphi 0, %s36
      %s39 = sphi 0, %s37
      %s51 = sphi 0, %s53
      %s54 = sphi 0, %s51
      %s55 = sphi 0, %s54
      %s71 = sphi 0, %s55
      %s87 = sphi 0, %s89
      %s90 = sphi 0, %s87
      %s91 = sphi 0, %s90
      %s107 = sphi 0, %s91
      %s123 = sphi 0, %s125
      %s126 = sphi 0, %s123
      %s127 = sphi 0, %s126
      %s143 = sphi 0, %s127
      %s147 = sphi 0, %s147
      %s149 = sphi 0, %s147
      %s150 = sphi 0, %s149
      %s164 = sphi 0, %s150
      %s168 = sphi 0, %s168
      %s170 = sphi 0, %s168
      %s171 = sphi 0, %s170
      %s185 = sphi 0, %s171
      %s189 = sphi 0, %s189
      %s191 = sphi 0, %s189
      %s192 = sphi 0, %s191
      %s206 = sphi 0, %s192
      %s210 = sphi 0, %s210
      %s212 = sphi 0, %s210
      %s213 = sphi 0, %s212
      %s227 = sphi 0, %s213
      %s231 = sphi 0, %s231
      %s233 = sphi 0, %s231
      %s234 = sphi 0, %s233
      %s248 = sphi 0, %s234
      %s252 = sphi 0, %s252
      %s254 = sphi 0, %s252
      %s255 = sphi 0, %s254
      %s269 = sphi 0, %s255
      %s273 = sphi 0, %s273
      %s275 = sphi 0, %s273
      %s276 = sphi 0, %s275
      %s290 = sphi 0, %s276
      %s294 = sphi 0, %s294
      %s296 = sphi 0, %s294
      %s297 = sphi 0, %s296
      %s311 = sphi 0, %s297
      %s315 = sphi 0, %s315
      %s317 = sphi 0, %s315
      %s318 = sphi 0, %s317
      %s332 = sphi 0, %s318
      %s340 = sphi 0, %s342
      %s343 = sphi 0, %s340
      %s344 = sphi 0, %s343
      %s360 = sphi 0, %s344
    $region4: #{tpu_custom_call.1} parent=1 // loop_header_branch
      %30 = sbr.rel (%p28) target = $region8
    $region5: #{tpu_custom_call.1} parent=1 // loop_body
      %s32 = ssub.s32 %s27, 1
      %s33 = ssub.s32 %s27, 2
      %s40 = sadd.s32 1, %s35
      %p41 = scmp.ge.s32.totalorder %s40, 2
      %s42 = scalar_select %p41, 0, %s40
      %s43 = sadd.s32 1, %s34
      %s44 = scalar_select %p41, %s43, %s34
      %p45 = scmp.ge.s32.totalorder %s44, 2
      %s46 = scalar_select %p45, 0, %s44
      %s47 = ssub.s32 %s34, %s46
      %s48 = ssub.s32 %s35, %s42
      %s49 = sor.u32 %s47, %s48
      %p50 = scmp.eq.s32.totalorder %s49, 0
      %s52 = sadd.s32 %s51, 1
      %s53 = scalar_select %p50, %s51, %s52
      %p56 = pneg %p50
      %p57 = scmp.eq.s32.totalorder %s27, 3
      %p58 = por %p56, %p57
      %p59 = scmp.ne.s32.totalorder %s51, %s54
      %p60 = scmp.eq.s32.totalorder %s27, 0
      %p61 = por %p59, %p60
      %p62 = scmp.ne.s32.totalorder %s51, %s54
      %p63 = scmp.eq.s32.totalorder %s32, 3
      %p64 = por %p62, %p63
      %p65 = scmp.ne.s32.totalorder %s54, %s55
      %p66 = scmp.eq.s32.totalorder %s32, 0
      %p67 = por %p65, %p66
      %p68 = scmp.ne.s32.totalorder %s54, %s55
      %p69 = scmp.eq.s32.totalorder %s33, 3
      %p70 = por %p68, %p69
      %p72 = scmp.ne.s32.totalorder %s55, %s71
      %p73 = scmp.eq.s32.totalorder %s33, 0
      %p74 = por %p72, %p73
      %s75 = smul.u32 %s35, 8
      %s76 = ssub.s32 %s75, 1
      %p77 = scmp.gt.s32.totalorder %s76, 0
      %s78 = scalar_select %p77, %s76, 0
      %s79 = smul.u32 %s42, 8
      %s80 = ssub.s32 %s79, 1
      %p81 = scmp.gt.s32.totalorder %s80, 0
      %s82 = scalar_select %p81, %s80, 0
      %s83 = ssub.s32 %s34, %s46
      %s84 = ssub.s32 %s78, %s82
      %s85 = sor.u32 %s83, %s84
      %p86 = scmp.eq.s32.totalorder %s85, 0
      %s88 = sadd.s32 %s87, 1
      %s89 = scalar_select %p86, %s87, %s88
      %p92 = pneg %p86
      %p93 = scmp.eq.s32.totalorder %s27, 3
      %p94 = por %p92, %p93
      %p95 = scmp.ne.s32.totalorder %s87, %s90
      %p96 = scmp.eq.s32.totalorder %s27, 0
      %p97 = por %p95, %p96
      %p98 = scmp.ne.s32.totalorder %s87, %s90
      %p99 = scmp.eq.s32.totalorder %s32, 3
      %p100 = por %p98, %p99
      %p101 = scmp.ne.s32.totalorder %s90, %s91
      %p102 = scmp.eq.s32.totalorder %s32, 0
      %p103 = por %p101, %p102
      %p104 = scmp.ne.s32.totalorder %s90, %s91
      %p105 = scmp.eq.s32.totalorder %s33, 3
      %p106 = por %p104, %p105
      %p108 = scmp.ne.s32.totalorder %s91, %s107
      %p109 = scmp.eq.s32.totalorder %s33, 0
      %p110 = por %p108, %p109
      %s111 = smul.u32 %s35, 8
      %s112 = sadd.s32 %s111, 8
      %p113 = scmp.lt.s32.totalorder %s112, 15
      %s114 = scalar_select %p113, %s112, 15
      %s115 = smul.u32 %s42, 8
      %s116 = sadd.s32 %s115, 8
      %p117 = scmp.lt.s32.totalorder %s116, 15
      %s118 = scalar_select %p117, %s116, 15
      %s119 = ssub.s32 %s34, %s46
      %s120 = ssub.s32 %s114, %s118
      %s121 = sor.u32 %s119, %s120
      %p122 = scmp.eq.s32.totalorder %s121, 0
      %s124 = sadd.s32 %s123, 1
      %s125 = scalar_select %p122, %s123, %s124
      %p128 = pneg %p122
      %p129 = scmp.eq.s32.totalorder %s27, 3
      %p130 = por %p128, %p129
      %p131 = scmp.ne.s32.totalorder %s123, %s126
      %p132 = scmp.eq.s32.totalorder %s27, 0
      %p133 = por %p131, %p132
      %p134 = scmp.ne.s32.totalorder %s123, %s126
      %p135 = scmp.eq.s32.totalorder %s32, 3
      %p136 = por %p134, %p135
      %p137 = scmp.ne.s32.totalorder %s126, %s127
      %p138 = scmp.eq.s32.totalorder %s32, 0
      %p139 = por %p137, %p138
      %p140 = scmp.ne.s32.totalorder %s126, %s127
      %p141 = scmp.eq.s32.totalorder %s33, 3
      %p142 = por %p140, %p141
      %p144 = scmp.ne.s32.totalorder %s127, %s143
      %p145 = scmp.eq.s32.totalorder %s33, 0
      %p146 = por %p144, %p145
      %s148 = sadd.s32 %s147, 1
      %p151 = scmp.eq.s32.totalorder %s27, 3
      %p152 = scmp.ne.s32.totalorder %s147, %s149
      %p153 = scmp.eq.s32.totalorder %s27, 0
      %p154 = por %p152, %p153
      %p155 = scmp.ne.s32.totalorder %s147, %s149
      %p156 = scmp.eq.s32.totalorder %s32, 3
      %p157 = por %p155, %p156
      %p158 = scmp.ne.s32.totalorder %s149, %s150
      %p159 = scmp.eq.s32.totalorder %s32, 0
      %p160 = por %p158, %p159
      %p161 = scmp.ne.s32.totalorder %s149, %s150
      %p162 = scmp.eq.s32.totalorder %s33, 3
      %p163 = por %p161, %p162
      %p165 = scmp.ne.s32.totalorder %s150, %s164
      %p166 = scmp.eq.s32.totalorder %s33, 0
      %p167 = por %p165, %p166
      %s169 = sadd.s32 %s168, 1
      %p172 = scmp.eq.s32.totalorder %s27, 3
      %p173 = scmp.ne.s32.totalorder %s168, %s170
      %p174 = scmp.eq.s32.totalorder %s27, 0
      %p175 = por %p173, %p174
      %p176 = scmp.ne.s32.totalorder %s168, %s170
      %p177 = scmp.eq.s32.totalorder %s32, 3
      %p178 = por %p176, %p177
      %p179 = scmp.ne.s32.totalorder %s170, %s171
      %p180 = scmp.eq.s32.totalorder %s32, 0
      %p181 = por %p179, %p180
      %p182 = scmp.ne.s32.totalorder %s170, %s171
      %p183 = scmp.eq.s32.totalorder %s33, 3
      %p184 = por %p182, %p183
      %p186 = scmp.ne.s32.totalorder %s171, %s185
      %p187 = scmp.eq.s32.totalorder %s33, 0
      %p188 = por %p186, %p187
      %s190 = sadd.s32 %s189, 1
      %p193 = scmp.eq.s32.totalorder %s27, 3
      %p194 = scmp.ne.s32.totalorder %s189, %s191
      %p195 = scmp.eq.s32.totalorder %s27, 0
      %p196 = por %p194, %p195
      %p197 = scmp.ne.s32.totalorder %s189, %s191
      %p198 = scmp.eq.s32.totalorder %s32, 3
      %p199 = por %p197, %p198
      %p200 = scmp.ne.s32.totalorder %s191, %s192
      %p201 = scmp.eq.s32.totalorder %s32, 0
      %p202 = por %p200, %p201
      %p203 = scmp.ne.s32.totalorder %s191, %s192
      %p204 = scmp.eq.s32.totalorder %s33, 3
      %p205 = por %p203, %p204
      %p207 = scmp.ne.s32.totalorder %s192, %s206
      %p208 = scmp.eq.s32.totalorder %s33, 0
      %p209 = por %p207, %p208
      %s211 = sadd.s32 %s210, 1
      %p214 = scmp.eq.s32.totalorder %s27, 3
      %p215 = scmp.ne.s32.totalorder %s210, %s212
      %p216 = scmp.eq.s32.totalorder %s27, 0
      %p217 = por %p215, %p216
      %p218 = scmp.ne.s32.totalorder %s210, %s212
      %p219 = scmp.eq.s32.totalorder %s32, 3
      %p220 = por %p218, %p219
      %p221 = scmp.ne.s32.totalorder %s212, %s213
      %p222 = scmp.eq.s32.totalorder %s32, 0
      %p223 = por %p221, %p222
      %p224 = scmp.ne.s32.totalorder %s212, %s213
      %p225 = scmp.eq.s32.totalorder %s33, 3
      %p226 = por %p224, %p225
      %p228 = scmp.ne.s32.totalorder %s213, %s227
      %p229 = scmp.eq.s32.totalorder %s33, 0
      %p230 = por %p228, %p229
      %s232 = sadd.s32 %s231, 1
      %p235 = scmp.eq.s32.totalorder %s27, 3
      %p236 = scmp.ne.s32.totalorder %s231, %s233
      %p237 = scmp.eq.s32.totalorder %s27, 0
      %p238 = por %p236, %p237
      %p239 = scmp.ne.s32.totalorder %s231, %s233
      %p240 = scmp.eq.s32.totalorder %s32, 3
      %p241 = por %p239, %p240
      %p242 = scmp.ne.s32.totalorder %s233, %s234
      %p243 = scmp.eq.s32.totalorder %s32, 0
      %p244 = por %p242, %p243
      %p245 = scmp.ne.s32.totalorder %s233, %s234
      %p246 = scmp.eq.s32.totalorder %s33, 3
      %p247 = por %p245, %p246
      %p249 = scmp.ne.s32.totalorder %s234, %s248
      %p250 = scmp.eq.s32.totalorder %s33, 0
      %p251 = por %p249, %p250
      %s253 = sadd.s32 %s252, 1
      %p256 = scmp.eq.s32.totalorder %s27, 3
      %p257 = scmp.ne.s32.totalorder %s252, %s254
      %p258 = scmp.eq.s32.totalorder %s27, 0
      %p259 = por %p257, %p258
      %p260 = scmp.ne.s32.totalorder %s252, %s254
      %p261 = scmp.eq.s32.totalorder %s32, 3
      %p262 = por %p260, %p261
      %p263 = scmp.ne.s32.totalorder %s254, %s255
      %p264 = scmp.eq.s32.totalorder %s32, 0
      %p265 = por %p263, %p264
      %p266 = scmp.ne.s32.totalorder %s254, %s255
      %p267 = scmp.eq.s32.totalorder %s33, 3
      %p268 = por %p266, %p267
      %p270 = scmp.ne.s32.totalorder %s255, %s269
      %p271 = scmp.eq.s32.totalorder %s33, 0
      %p272 = por %p270, %p271
      %s274 = sadd.s32 %s273, 1
      %p277 = scmp.eq.s32.totalorder %s27, 3
      %p278 = scmp.ne.s32.totalorder %s273, %s275
      %p279 = scmp.eq.s32.totalorder %s27, 0
      %p280 = por %p278, %p279
      %p281 = scmp.ne.s32.totalorder %s273, %s275
      %p282 = scmp.eq.s32.totalorder %s32, 3
      %p283 = por %p281, %p282
      %p284 = scmp.ne.s32.totalorder %s275, %s276
      %p285 = scmp.eq.s32.totalorder %s32, 0
      %p286 = por %p284, %p285
      %p287 = scmp.ne.s32.totalorder %s275, %s276
      %p288 = scmp.eq.s32.totalorder %s33, 3
      %p289 = por %p287, %p288
      %p291 = scmp.ne.s32.totalorder %s276, %s290
      %p292 = scmp.eq.s32.totalorder %s33, 0
      %p293 = por %p291, %p292
      %s295 = sadd.s32 %s294, 1
      %p298 = scmp.eq.s32.totalorder %s27, 3
      %p299 = scmp.ne.s32.totalorder %s294, %s296
      %p300 = scmp.eq.s32.totalorder %s27, 0
      %p301 = por %p299, %p300
      %p302 = scmp.ne.s32.totalorder %s294, %s296
      %p303 = scmp.eq.s32.totalorder %s32, 3
      %p304 = por %p302, %p303
      %p305 = scmp.ne.s32.totalorder %s296, %s297
      %p306 = scmp.eq.s32.totalorder %s32, 0
      %p307 = por %p305, %p306
      %p308 = scmp.ne.s32.totalorder %s296, %s297
      %p309 = scmp.eq.s32.totalorder %s33, 3
      %p310 = por %p308, %p309
      %p312 = scmp.ne.s32.totalorder %s297, %s311
      %p313 = scmp.eq.s32.totalorder %s33, 0
      %p314 = por %p312, %p313
      %s316 = sadd.s32 %s315, 1
      %p319 = scmp.eq.s32.totalorder %s27, 3
      %p320 = scmp.ne.s32.totalorder %s315, %s317
      %p321 = scmp.eq.s32.totalorder %s27, 0
      %p322 = por %p320, %p321
      %p323 = scmp.ne.s32.totalorder %s315, %s317
      %p324 = scmp.eq.s32.totalorder %s32, 3
      %p325 = por %p323, %p324
      %p326 = scmp.ne.s32.totalorder %s317, %s318
      %p327 = scmp.eq.s32.totalorder %s32, 0
      %p328 = por %p326, %p327
      %p329 = scmp.ne.s32.totalorder %s317, %s318
      %p330 = scmp.eq.s32.totalorder %s33, 3
      %p331 = por %p329, %p330
      %p333 = scmp.ne.s32.totalorder %s318, %s332
      %p334 = scmp.eq.s32.totalorder %s33, 0
      %p335 = por %p333, %p334
      %s336 = ssub.s32 %s34, %s46
      %s337 = ssub.s32 %s35, %s42
      %s338 = sor.u32 %s336, %s337
      %p339 = scmp.eq.s32.totalorder %s338, 0
      %s341 = sadd.s32 %s340, 1
      %s342 = scalar_select %p339, %s340, %s341
      %p345 = pneg %p339
      %p346 = scmp.eq.s32.totalorder %s27, 3
      %p347 = por %p345, %p346
      %p348 = scmp.ne.s32.totalorder %s340, %s343
      %p349 = scmp.eq.s32.totalorder %s27, 0
      %p350 = por %p348, %p349
      %p351 = scmp.ne.s32.totalorder %s340, %s343
      %p352 = scmp.eq.s32.totalorder %s32, 3
      %p353 = por %p351, %p352
      %p354 = scmp.ne.s32.totalorder %s343, %s344
      %p355 = scmp.eq.s32.totalorder %s32, 0
      %p356 = por %p354, %p355
      %p357 = scmp.ne.s32.totalorder %s343, %s344
      %p358 = scmp.eq.s32.totalorder %s33, 3
      %p359 = por %p357, %p358
      %p361 = scmp.ne.s32.totalorder %s344, %s360
      %p362 = scmp.eq.s32.totalorder %s33, 0
      %p363 = por %p361, %p362
      %p364 = scmp.le.s32.totalorder 1, %s27
      %p365 = scmp.lt.s32.totalorder %s27, 5
      %p366 = pnand %p364, %p365
      %p367 = pneg %p366
      // Predicated region
      $region9: #{tpu_custom_call.1} parent=5 // pred_check
        _
      $region10: #{tpu_custom_call.1} parent=5 // pred_check_branch
        %369 = sbr.rel (%p366) target = $region12
      $region11: #{tpu_custom_call.1} parent=5 // pred_region
        %s370 = ssub.s32 %s27, 1
        // Predicated region
        $region13: #{tpu_custom_call.1} parent=11 // pred_check
          %p371 = pneg %p160
        $region14: #{tpu_custom_call.1} parent=11 // pred_check_branch
          %373 = sbr.rel (%p371) target = $region16
        $region15: #{tpu_custom_call.1} parent=11 // pred_region
          _
        $region16: #{tpu_custom_call.1} parent=11 // pred_fallthru
          _
        // Predicated region
        $region17: #{tpu_custom_call.1} parent=11 // pred_check
          %p374 = pneg %p181
        $region18: #{tpu_custom_call.1} parent=11 // pred_check_branch
          %376 = sbr.rel (%p374) target = $region20
        $region19: #{tpu_custom_call.1} parent=11 // pred_region
          _
        $region20: #{tpu_custom_call.1} parent=11 // pred_fallthru
          _
        // Predicated region
        $region21: #{tpu_custom_call.1} parent=11 // pred_check
          %p377 = pneg %p202
        $region22: #{tpu_custom_call.1} parent=11 // pred_check_branch
          %379 = sbr.rel (%p377) target = $region24
        $region23: #{tpu_custom_call.1} parent=11 // pred_region
          _
        $region24: #{tpu_custom_call.1} parent=11 // pred_fallthru
          _
        // Predicated region
        $region25: #{tpu_custom_call.1} parent=11 // pred_check
          %p380 = pneg %p223
        $region26: #{tpu_custom_call.1} parent=11 // pred_check_branch
          %382 = sbr.rel (%p380) target = $region28
        $region27: #{tpu_custom_call.1} parent=11 // pred_region
          _
        $region28: #{tpu_custom_call.1} parent=11 // pred_fallthru
          _
        // Predicated region
        $region29: #{tpu_custom_call.1} parent=11 // pred_check
          %p383 = pneg %p244
        $region30: #{tpu_custom_call.1} parent=11 // pred_check_branch
          %385 = sbr.rel (%p383) target = $region32
        $region31: #{tpu_custom_call.1} parent=11 // pred_region
          _
        $region32: #{tpu_custom_call.1} parent=11 // pred_fallthru
          _
        // Predicated region
        $region33: #{tpu_custom_call.1} parent=11 // pred_check
          %p386 = pneg %p265
        $region34: #{tpu_custom_call.1} parent=11 // pred_check_branch
          %388 = sbr.rel (%p386) target = $region36
        $region35: #{tpu_custom_call.1} parent=11 // pred_region
          _
        $region36: #{tpu_custom_call.1} parent=11 // pred_fallthru
          _
        // Predicated region
        $region37: #{tpu_custom_call.1} parent=11 // pred_check
          %p389 = pneg %p286
        $region38: #{tpu_custom_call.1} parent=11 // pred_check_branch
          %391 = sbr.rel (%p389) target = $region40
        $region39: #{tpu_custom_call.1} parent=11 // pred_region
          _
        $region40: #{tpu_custom_call.1} parent=11 // pred_fallthru
          _
        // Predicated region
        $region41: #{tpu_custom_call.1} parent=11 // pred_check
          %p392 = pneg %p307
        $region42: #{tpu_custom_call.1} parent=11 // pred_check_branch
          %394 = sbr.rel (%p392) target = $region44
        $region43: #{tpu_custom_call.1} parent=11 // pred_region
          _
        $region44: #{tpu_custom_call.1} parent=11 // pred_fallthru
          _
        // Predicated region
        $region45: #{tpu_custom_call.1} parent=11 // pred_check
          %p395 = pneg %p328
        $region46: #{tpu_custom_call.1} parent=11 // pred_check_branch
          %397 = sbr.rel (%p395) target = $region48
        $region47: #{tpu_custom_call.1} parent=11 // pred_region
          _
        $region48: #{tpu_custom_call.1} parent=11 // pred_fallthru
          _
      $region12: #{tpu_custom_call.1} parent=5 // pred_fallthru
        _
      %p398 = scmp.lt.s32.totalorder %s27, 4
      // Predicated region
      $region49: #{tpu_custom_call.1} parent=5 // pred_check
        %p399 = pneg %p398
      $region50: #{tpu_custom_call.1} parent=5 // pred_check_branch
        %401 = sbr.rel (%p399) target = $region52
      $region51: #{tpu_custom_call.1} parent=5 // pred_region
        // Predicated region
        $region53: #{tpu_custom_call.1} parent=51 // pred_check
          %p402 = pneg %p61
        $region54: #{tpu_custom_call.1} parent=51 // pred_check_branch
          %404 = sbr.rel (%p402) target = $region56
        $region55: #{tpu_custom_call.1} parent=51 // pred_region
          %s405 = smul.u32 8, %s35
          %p406 = scmp.lt.s32.totalorder %s34, 1
          %s407 = scalar_select %p406, %s34, 1
          %p408 = scmp.lt.s32.totalorder %s405, 15
          %s409 = scalar_select %p408, %s405, 15
          %s410 = smul.addr %s409, 2
          %s411 = smul.addr %s407, 32
          %s412 = sadd.s32 %s410, %s411
          %s413 = smul.addr %s412, 4
          %s414 = scalar_lea.vmem %s0, %s413
          %s415 = smul.u32 8, %s35
        $region56: #{tpu_custom_call.1} parent=51 // pred_fallthru
          _
        // Predicated region
        $region57: #{tpu_custom_call.1} parent=51 // pred_check
          %p416 = pneg %p97
        $region58: #{tpu_custom_call.1} parent=51 // pred_check_branch
          %418 = sbr.rel (%p416) target = $region60
        $region59: #{tpu_custom_call.1} parent=51 // pred_region
          %s419 = sand.u32 %s87, 1
          %s420 = scalar_lea.sflag [#allocation4], %s419
          %s421 = sand.u32 %s87, 1
          %s422 = smul.addr %s421, 8
          %s423 = scalar_lea.vmem [#allocation3], %s422
          %s424 = smul.u32 %s35, 8
          %s425 = ssub.s32 %s424, 1
          %p426 = scmp.gt.s32.totalorder %s425, 0
          %s427 = scalar_select %p426, %s425, 0
          %s429 = ssub.s32 128, 128
          %430 = vsyncadd %s420, %s429
          %s431 = smul.addr %s427, 2
          %s432 = smul.addr %s34, 32
          %s433 = sadd.s32 %s431, %s432
          %s434 = smul.addr %s433, 64
          %s435 = scalar_lea.hbm %s1, %s434
          %s436 = sshll.u32 %s423, 4
          %s437 = int_to_ptr.vmem [resolvable:$true] %s436
          %442 = dma.hbm_to_vmem [thread:$0]  %s435, 128, %s437, %s420, 64, 64, 4
        $region60: #{tpu_custom_call.1} parent=51 // pred_fallthru
          _
        // Predicated region
        $region61: #{tpu_custom_call.1} parent=51 // pred_check
          %p443 = pneg %p133
        $region62: #{tpu_custom_call.1} parent=51 // pred_check_branch
          %445 = sbr.rel (%p443) target = $region64
        $region63: #{tpu_custom_call.1} parent=51 // pred_region
          %s446 = sand.u32 %s123, 1
          %s447 = scalar_lea.sflag [#allocation7], %s446
          %s448 = sand.u32 %s123, 1
          %s449 = smul.addr %s448, 8
          %s450 = scalar_lea.vmem [#allocation6], %s449
          %s451 = smul.u32 %s35, 8
          %s452 = sadd.s32 %s451, 8
          %p453 = scmp.lt.s32.totalorder %s452, 15
          %s454 = scalar_select %p453, %s452, 15
          %s456 = ssub.s32 128, 128
          %457 = vsyncadd %s447, %s456
          %s458 = smul.addr %s454, 2
          %s459 = smul.addr %s34, 32
          %s460 = sadd.s32 %s458, %s459
          %s461 = smul.addr %s460, 64
          %s462 = scalar_lea.hbm %s2, %s461
          %s463 = sshll.u32 %s450, 4
          %s464 = int_to_ptr.vmem [resolvable:$true] %s463
          %469 = dma.hbm_to_vmem [thread:$0]  %s462, 128, %s464, %s447, 64, 64, 4
        $region64: #{tpu_custom_call.1} parent=51 // pred_fallthru
          _
      $region52: #{tpu_custom_call.1} parent=5 // pred_fallthru
        _
      %p470 = scmp.le.s32.totalorder 1, %s27
      %p471 = scmp.lt.s32.totalorder %s27, 5
      %p472 = pnand %p470, %p471
      %p473 = pneg %p472
      // Predicated region
      $region65: #{tpu_custom_call.1} parent=5 // pred_check
        _
      $region66: #{tpu_custom_call.1} parent=5 // pred_check_branch
        %475 = sbr.rel (%p472) target = $region68
      $region67: #{tpu_custom_call.1} parent=5 // pred_region
        %s476 = ssub.s32 %s27, 1
        %s477 = sand.u32 %s90, 1
        %s478 = scalar_lea.sflag [#allocation4], %s477
        %s479 = sand.u32 %s90, 1
        %s480 = smul.addr %s479, 8
        %s481 = scalar_lea.vmem [#allocation3], %s480
        // Predicated region
        $region69: #{tpu_custom_call.1} parent=67 // pred_check
          %p482 = pneg %p103
        $region70: #{tpu_custom_call.1} parent=67 // pred_check_branch
          %484 = sbr.rel (%p482) target = $region72
        $region71: #{tpu_custom_call.1} parent=67 // pred_region
          %485 = dma.done %s478, 128
        $region72: #{tpu_custom_call.1} parent=67 // pred_fallthru
          _
        %s486 = sand.u32 %s126, 1
        %s487 = scalar_lea.sflag [#allocation7], %s486
        %s488 = sand.u32 %s126, 1
        %s489 = smul.addr %s488, 8
        %s490 = scalar_lea.vmem [#allocation6], %s489
        // Predicated region
        $region73: #{tpu_custom_call.1} parent=67 // pred_check
          %p491 = pneg %p139
        $region74: #{tpu_custom_call.1} parent=67 // pred_check_branch
          %493 = sbr.rel (%p491) target = $region76
        $region75: #{tpu_custom_call.1} parent=67 // pred_region
          %494 = dma.done %s487, 128
        $region76: #{tpu_custom_call.1} parent=67 // pred_fallthru
          _
        %s495 = smul.u32 8, %s37
        %p496 = scmp.lt.s32.totalorder %s36, 1
        %s497 = scalar_select %p496, %s36, 1
        %p498 = scmp.lt.s32.totalorder %s495, 15
        %s499 = scalar_select %p498, %s495, 15
        %s500 = smul.addr %s499, 2
        %s501 = smul.addr %s497, 32
        %s502 = sadd.s32 %s500, %s501
        %s503 = smul.addr %s502, 4
        %s504 = scalar_lea.vmem %s0, %s503
        %p505 = pneg %p67
        %p506 = pneg %p64
        %s507 = sand.u32 %s90, 1
        %s508 = scalar_lea.sflag [#allocation4], %s507
        %s509 = sand.u32 %s90, 1
        %s510 = smul.addr %s509, 8
        %s511 = scalar_lea.vmem [#allocation3], %s510
        %p512 = pneg %p103
        %p513 = pneg %p100
        %s514 = sand.u32 %s126, 1
        %s515 = scalar_lea.sflag [#allocation7], %s514
        %s516 = sand.u32 %s126, 1
        %s517 = smul.addr %s516, 8
        %s518 = scalar_lea.vmem [#allocation6], %s517
        %p519 = pneg %p139
        %p520 = pneg %p136
        %p521 = pneg %p160
        %p522 = pneg %p157
        %p523 = pneg %p181
        %p524 = pneg %p178
        %p525 = pneg %p202
        %p526 = pneg %p199
        %p527 = pneg %p223
        %p528 = pneg %p220
        %p529 = pneg %p244
        %p530 = pneg %p241
        %p531 = pneg %p265
        %p532 = pneg %p262
        %p533 = pneg %p286
        %p534 = pneg %p283
        %p535 = pneg %p307
        %p536 = pneg %p304
        %p537 = pneg %p328
        %p538 = pneg %p325
        %p539 = pneg %p356
        %p540 = pneg %p353
        %s541 = sand.u32 %s343, 1
        %s542 = scalar_lea.sflag [#allocation5], %s541
        %s543 = sand.u32 %s343, 1
        %s544 = smul.addr %s543, 64
        %s545 = scalar_lea.vmem [#allocation8], %s544
        %s546 = smul.u32 8, %s37
        %p547 = scmp.lt.s32.totalorder %s36, 1
        %s548 = scalar_select %p547, %s36, 1
        %p549 = scmp.lt.s32.totalorder %s546, 15
        %s550 = scalar_select %p549, %s546, 15
        %s551 = smul.addr %s550, 2
        %s552 = smul.addr %s548, 32
        %s553 = sadd.s32 %s551, %s552
        %s554 = smul.addr %s553, 4
        %s555 = scalar_lea.vmem %s0, %s554
        %s556 = smul.u32 8, %s37
        %s557 = smul.u32 %s37, 8
        %s558 = ssub.s32 %s557, 1
        %p559 = scmp.gt.s32.totalorder %s558, 0
        %s560 = scalar_select %p559, %s558, 0
        %s561 = smul.u32 %s37, 8
        %s562 = sadd.s32 %s561, 8
        %p563 = scmp.lt.s32.totalorder %s562, 15
        %s564 = scalar_select %p563, %s562, 15
        %s565 = smul.u32 8, %s37
        %vm567 = vcmask 253952
        %vm568 = vsmask.f32 256
        %vm569 = vmand %vm567, %vm568
        %v570 = vld [vmem:[#allocation2] sm:$0x1]
        %v571 = vsel %vm569, 0, %v570
        %572 = vst [vmem:[#allocation2] sm:$0x1] %v571
        %v573 = vld [vmem:[#allocation2 + $0xc] sm:$0x1]
        %v574 = vsel %vm569, 0, %v573
        %575 = vst [vmem:[#allocation2 + $0xc] sm:$0x1] %v574
        %v576 = vld [vmem:[#allocation2 + $0x18] sm:$0x1]
        %v577 = vsel %vm569, 0, %v576
        %578 = vst [vmem:[#allocation2 + $0x18] sm:$0x1] %v577
        %v579 = vld [vmem:[#allocation2 + $0x24] sm:$0x1]
        %v580 = vsel %vm569, 0, %v579
        %581 = vst [vmem:[#allocation2 + $0x24] sm:$0x1] %v580
        %v582 = vld [vmem:[#allocation2 + $0x30] sm:$0x1]
        %v583 = vsel %vm569, 0, %v582
        %584 = vst [vmem:[#allocation2 + $0x30] sm:$0x1] %v583
        %v585 = vld [vmem:[#allocation2 + $0x3c] sm:$0x1]
        %v586 = vsel %vm569, 0, %v585
        %587 = vst [vmem:[#allocation2 + $0x3c] sm:$0x1] %v586
        %v588 = vld [vmem:[#allocation2 + $0x48] sm:$0x1]
        %v589 = vsel %vm569, 0, %v588
        %590 = vst [vmem:[#allocation2 + $0x48] sm:$0x1] %v589
        %v591 = vld [vmem:[#allocation2 + $0x54] sm:$0x1]
        %v592 = vsel %vm569, 0, %v591
        %593 = vst [vmem:[#allocation2 + $0x54] sm:$0x1] %v592
        %v594 = vld [vmem:[#allocation2 + $0x60] sm:$0x1]
        %v595 = vsel %vm569, 0, %v594
        %596 = vst [vmem:[#allocation2 + $0x60] sm:$0x1] %v595
        %v597 = vld [vmem:[#allocation2 + $0x6c] sm:$0x1]
        %v598 = vsel %vm569, 0, %v597
        %599 = vst [vmem:[#allocation2 + $0x6c] sm:$0x1] %v598
        %vm600 = vsmask.f32 7938
        %vm601 = vmand %vm567, %vm600
        %v602 = vld [vmem:[#allocation2 + $0x8] sm:$0x1]
        %v603 = vsel %vm601, 0, %v602
        %604 = vst [vmem:[#allocation2 + $0x8] sm:$0x1] %v603
        %v605 = vld [vmem:[#allocation2 + $0x14] sm:$0x1]
        %v606 = vsel %vm601, 0, %v605
        %607 = vst [vmem:[#allocation2 + $0x14] sm:$0x1] %v606
        %v608 = vld [vmem:[#allocation2 + $0x20] sm:$0x1]
        %v609 = vsel %vm601, 0, %v608
        %610 = vst [vmem:[#allocation2 + $0x20] sm:$0x1] %v609
        %v611 = vld [vmem:[#allocation2 + $0x2c] sm:$0x1]
        %v612 = vsel %vm601, 0, %v611
        %613 = vst [vmem:[#allocation2 + $0x2c] sm:$0x1] %v612
        %v614 = vld [vmem:[#allocation2 + $0x38] sm:$0x1]
        %v615 = vsel %vm601, 0, %v614
        %616 = vst [vmem:[#allocation2 + $0x38] sm:$0x1] %v615
        %v617 = vld [vmem:[#allocation2 + $0x44] sm:$0x1]
        %v618 = vsel %vm601, 0, %v617
        %619 = vst [vmem:[#allocation2 + $0x44] sm:$0x1] %v618
        %v620 = vld [vmem:[#allocation2 + $0x50] sm:$0x1]
        %v621 = vsel %vm601, 0, %v620
        %622 = vst [vmem:[#allocation2 + $0x50] sm:$0x1] %v621
        %v623 = vld [vmem:[#allocation2 + $0x5c] sm:$0x1]
        %v624 = vsel %vm601, 0, %v623
        %625 = vst [vmem:[#allocation2 + $0x5c] sm:$0x1] %v624
        %v626 = vld [vmem:[#allocation2 + $0x68] sm:$0x1]
        %v627 = vsel %vm601, 0, %v626
        %628 = vst [vmem:[#allocation2 + $0x68] sm:$0x1] %v627
        %v629 = vld [vmem:[#allocation2 + $0x74] sm:$0x1]
        %v630 = vsel %vm601, 0, %v629
        %631 = vst [vmem:[#allocation2 + $0x74] sm:$0x1] %v630
        %v632 = vld [vmem:[%s481] sm:$0xf]
        %v633 = vld [vmem:[%s481 + $0x4] sm:$0xf]
        %v634 = vld [vmem:[%s555] sm:$0xf]
        %v635 = vld [vmem:[%s555 + $0x4] sm:$0xf]
        %v636 = vld [vmem:[%s555 + $0x8] sm:$0xf]
        %v637 = vld [vmem:[%s555 + $0xc] sm:$0xf]
        %v638 = vld [vmem:[%s555 + $0x10] sm:$0xf]
        %v639 = vld [vmem:[%s555 + $0x14] sm:$0xf]
        %v640 = vld [vmem:[%s555 + $0x18] sm:$0xf]
        %v641 = vld [vmem:[%s555 + $0x1c] sm:$0xf]
        %v642 = vld [vmem:[%s555 + $0x20] sm:$0xf]
        %v643 = vld [vmem:[%s555 + $0x24] sm:$0xf]
        %v644 = vld [vmem:[%s555 + $0x28] sm:$0xf]
        %v645 = vld [vmem:[%s555 + $0x2c] sm:$0xf]
        %v646 = vld [vmem:[%s555 + $0x30] sm:$0xf]
        %v647 = vld [vmem:[%s555 + $0x34] sm:$0xf]
        %v648 = vld [vmem:[%s555 + $0x38] sm:$0xf]
        %v649 = vld [vmem:[%s555 + $0x3c] sm:$0xf]
        %v650 = vld [vmem:[%s490] sm:$0xf]
        %v651 = vld [vmem:[%s490 + $0x4] sm:$0xf]
        %v652 = vld [vmem:[%s3] sm:$0xf]
        %v653 = vld [vmem:[%s3 + $0x4] sm:$0xf]
        %v654 = vld [vmem:[%s3 + $0x8] sm:$0xf]
        %v655 = vld [vmem:[%s3 + $0xc] sm:$0xf]
        %v656 = vld [vmem:[%s3 + $0x10] sm:$0xf]
        %v657 = vld [vmem:[%s3 + $0x14] sm:$0xf]
        %v658 = vld [vmem:[%s3 + $0x18] sm:$0xf]
        %v659 = vld [vmem:[%s3 + $0x1c] sm:$0xf]
        %v660 = vld [vmem:[%s3 + $0x20] sm:$0xf]
        %v661 = vld [vmem:[%s3 + $0x24] sm:$0xf]
        %v662 = vld [vmem:[%s3 + $0x28] sm:$0xf]
        %v663 = vld [vmem:[%s3 + $0x2c] sm:$0xf]
        %v664 = vld [vmem:[%s3 + $0x30] sm:$0xf]
        %v665 = vld [vmem:[%s3 + $0x34] sm:$0xf]
        %v666 = vld [vmem:[%s3 + $0x38] sm:$0xf]
        %v667 = vld [vmem:[%s3 + $0x3c] sm:$0xf]
        %v688 = vunpack.c.l.b16 %v632
        %v689 = vunpack.c.l.b16 %v633
        %v690 = vunpack.c.l.b16 %v634
        %v691 = vunpack.c.l.b16 %v635
        %v692 = vunpack.c.l.b16 %v636
        %v693 = vunpack.c.l.b16 %v637
        %v694 = vunpack.c.l.b16 %v638
        %v695 = vunpack.c.l.b16 %v639
        %v696 = vunpack.c.l.b16 %v640
        %v697 = vunpack.c.l.b16 %v641
        %v698 = vunpack.c.l.b16 %v642
        %v699 = vunpack.c.l.b16 %v643
        %v700 = vunpack.c.l.b16 %v644
        %v701 = vunpack.c.l.b16 %v645
        %v702 = vunpack.c.l.b16 %v646
        %v703 = vunpack.c.l.b16 %v647
        %v704 = vunpack.c.l.b16 %v648
        %v705 = vunpack.c.l.b16 %v649
        %v706 = vunpack.c.l.b16 %v650
        %v707 = vunpack.c.l.b16 %v651
        %v708 = vpack.c.b16 %v689, %v688
        %v709 = vpack.c.b16 %v691, %v690
        %v710 = vpack.c.b16 %v693, %v692
        %v711 = vpack.c.b16 %v695, %v694
        %v712 = vpack.c.b16 %v697, %v696
        %v713 = vpack.c.b16 %v699, %v698
        %v714 = vpack.c.b16 %v701, %v700
        %v715 = vpack.c.b16 %v703, %v702
        %v716 = vpack.c.b16 %v705, %v704
        %v717 = vpack.c.b16 %v707, %v706
        %v744 = vunpack.c.l.b16 %v652
        %v745 = vunpack.c.l.b16 %v653
        %v746 = vunpack.c.l.b16 %v654
        %v747 = vunpack.c.l.b16 %v655
        %v748 = vunpack.c.l.b16 %v656
        %v749 = vunpack.c.l.b16 %v657
        %v750 = vunpack.c.l.b16 %v658
        %v751 = vunpack.c.l.b16 %v659
        %v752 = vunpack.c.l.b16 %v660
        %v753 = vunpack.c.l.b16 %v661
        %v754 = vunpack.c.l.b16 %v662
        %v755 = vunpack.c.l.b16 %v663
        %v756 = vunpack.c.l.b16 %v664
        %v757 = vunpack.c.l.b16 %v665
        %v758 = vunpack.c.l.b16 %v666
        %v759 = vunpack.c.l.b16 %v667
        %v760 = vpack.c.b16 %v745, %v744
        %v761 = vpack.c.b16 %v747, %v746
        %v762 = vpack.c.b16 %v749, %v748
        %v763 = vpack.c.b16 %v751, %v750
        %v764 = vpack.c.b16 %v753, %v752
        %v765 = vpack.c.b16 %v755, %v754
        %v766 = vpack.c.b16 %v757, %v756
        %v767 = vpack.c.b16 %v759, %v758
        %776 = vmatprep.subr.bf16.mxu0 0
        %777 = vmatpush1.bf16.msra.mxu0 %v767
        %778 = vmatprep.subr.bf16.mxu0 0
        %779 = vmatpush1.bf16.msra.mxu0 %v766
        %780 = vmatprep.subr.bf16.mxu0 0
        %781 = vmatpush1.bf16.msra.mxu0 %v765
        %782 = vmatprep.subr.bf16.mxu0 0
        %783 = vmatpush1.bf16.msra.mxu0 %v764
        %784 = vmatprep.subr.bf16.mxu0 0
        %785 = vmatpush1.bf16.msra.mxu0 %v763
        %786 = vmatprep.subr.bf16.mxu0 0
        %787 = vmatpush1.bf16.msra.mxu0 %v762
        %788 = vmatprep.subr.bf16.mxu0 0
        %789 = vmatpush1.bf16.msra.mxu0 %v761
        %790 = vmatprep.subr.bf16.mxu0 0
        %791 = vmatpush1.bf16.msra.mxu0 %v760
        %792 = vmatprep.subr.bf16.mxu0 0
        %793 = vmatpush2.bf16.msra.mxu0 0
        %794 = vmatprep.subr.bf16.mxu0 0
        %795 = vmatpush2.bf16.msra.mxu0 0
        %796 = vmatprep.subr.bf16.mxu0 0
        %797 = vmatpush2.bf16.msra.mxu0 0
        %798 = vmatprep.subr.bf16.mxu0 0
        %799 = vmatpush2.bf16.msra.mxu0 0
        %800 = vmatprep.subr.bf16.mxu0 0
        %801 = vmatpush2.bf16.msra.mxu0 0
        %802 = vmatprep.subr.bf16.mxu0 0
        %803 = vmatpush2.bf16.msra.mxu0 0
        %804 = vmatprep.subr.bf16.mxu0 0
        %805 = vmatpush2.bf16.msra.mxu0 0
        %806 = vmatprep.subr.bf16.mxu0 0
        %807 = vmatpush2.bf16.msra.mxu0 0
        %808 = vmatprep.mubr.bf16.mxu0 0
        %809 = vmatmul.mubr.bf16.gmra.mxu0 %v708
        %v810 = vpop.f32.mrf.mxu0
        %v811 = vadd.f32 0.0, %v810
        %v812 = vpop.f32.mrf.mxu0
        %v813 = vpop.f32.mrf.mxu0
        %v814 = vadd.f32 0.0, %v813
        %v815 = vpop.f32.mrf.mxu0
        %816 = vmatprep.mubr.bf16.mxu0 0
        %817 = vmatmul.mubr.bf16.gmra.mxu0 %v709
        %v818 = vpop.f32.mrf.mxu0
        %v819 = vadd.f32 0.0, %v818
        %v820 = vpop.f32.mrf.mxu0
        %v821 = vpop.f32.mrf.mxu0
        %v822 = vadd.f32 0.0, %v821
        %v823 = vpop.f32.mrf.mxu0
        %824 = vmatprep.mubr.bf16.mxu0 0
        %825 = vmatmul.mubr.bf16.gmra.mxu0 %v710
        %v826 = vpop.f32.mrf.mxu0
        %v827 = vadd.f32 0.0, %v826
        %v828 = vpop.f32.mrf.mxu0
        %v829 = vpop.f32.mrf.mxu0
        %v830 = vadd.f32 0.0, %v829
        %v831 = vpop.f32.mrf.mxu0
        %832 = vmatprep.mubr.bf16.mxu0 0
        %833 = vmatmul.mubr.bf16.gmra.mxu0 %v711
        %v834 = vpop.f32.mrf.mxu0
        %v835 = vadd.f32 0.0, %v834
        %v836 = vpop.f32.mrf.mxu0
        %v837 = vpop.f32.mrf.mxu0
        %v838 = vadd.f32 0.0, %v837
        %v839 = vpop.f32.mrf.mxu0
        %840 = vmatprep.mubr.bf16.mxu0 0
        %841 = vmatmul.mubr.bf16.gmra.mxu0 %v712
        %v842 = vpop.f32.mrf.mxu0
        %v843 = vadd.f32 0.0, %v842
        %v844 = vpop.f32.mrf.mxu0
        %v845 = vpop.f32.mrf.mxu0
        %v846 = vadd.f32 0.0, %v845
        %v847 = vpop.f32.mrf.mxu0
        %848 = vmatprep.mubr.bf16.mxu0 0
        %849 = vmatmul.mubr.bf16.gmra.mxu0 %v713
        %v850 = vpop.f32.mrf.mxu0
        %v851 = vadd.f32 0.0, %v850
        %v852 = vpop.f32.mrf.mxu0
        %v853 = vpop.f32.mrf.mxu0
        %v854 = vadd.f32 0.0, %v853
        %v855 = vpop.f32.mrf.mxu0
        %856 = vmatprep.mubr.bf16.mxu0 0
        %857 = vmatmul.mubr.bf16.gmra.mxu0 %v714
        %v858 = vpop.f32.mrf.mxu0
        %v859 = vadd.f32 0.0, %v858
        %v860 = vpop.f32.mrf.mxu0
        %v861 = vpop.f32.mrf.mxu0
        %v862 = vadd.f32 0.0, %v861
        %v863 = vpop.f32.mrf.mxu0
        %864 = vmatprep.mubr.bf16.mxu0 0
        %865 = vmatmul.mubr.bf16.gmra.mxu0 %v715
        %v866 = vpop.f32.mrf.mxu0
        %v867 = vadd.f32 0.0, %v866
        %v868 = vpop.f32.mrf.mxu0
        %v869 = vpop.f32.mrf.mxu0
        %v870 = vadd.f32 0.0, %v869
        %v871 = vpop.f32.mrf.mxu0
        %872 = vmatprep.mubr.bf16.mxu0 0
        %873 = vmatmul.mubr.bf16.gmra.mxu0 %v716
        %v874 = vpop.f32.mrf.mxu0
        %v875 = vadd.f32 0.0, %v874
        %v876 = vpop.f32.mrf.mxu0
        %v877 = vpop.f32.mrf.mxu0
        %v878 = vadd.f32 0.0, %v877
        %v879 = vpop.f32.mrf.mxu0
        %880 = vmatprep.mubr.bf16.mxu0 0
        %881 = vmatmul.mubr.bf16.gmra.mxu0 %v717
        %v882 = vpop.f32.mrf.mxu0
        %v883 = vadd.f32 0.0, %v882
        %v884 = vpop.f32.mrf.mxu0
        %v885 = vpop.f32.mrf.mxu0
        %v886 = vadd.f32 0.0, %v885
        %v887 = vpop.f32.mrf.mxu0
        %888 = vdwg.mxu0
        %v889 = vld [vmem:[%s6] sm:$0x1]
        %v891 = vlaneseq
        %v892 = vshrl.u32 %v891, 7
        %v893 = vsub.s32 0, %v892
        %v894 = vrot.slane %v889, %v893
        %v896 = vmul.f32 %v811, %v894
        %v897 = vmul.f32 %v814, %v894
        %v898 = vmul.f32 %v819, %v894
        %v899 = vmul.f32 %v822, %v894
        %v900 = vmul.f32 %v827, %v894
        %v901 = vmul.f32 %v830, %v894
        %v902 = vmul.f32 %v835, %v894
        %v903 = vmul.f32 %v838, %v894
        %v904 = vmul.f32 %v843, %v894
        %v905 = vmul.f32 %v846, %v894
        %v906 = vmul.f32 %v851, %v894
        %v907 = vmul.f32 %v854, %v894
        %v908 = vmul.f32 %v859, %v894
        %v909 = vmul.f32 %v862, %v894
        %v910 = vmul.f32 %v867, %v894
        %v911 = vmul.f32 %v870, %v894
        %v912 = vmul.f32 %v875, %v894
        %v913 = vmul.f32 %v878, %v894
        %v914 = vmul.f32 %v883, %v894
        %v915 = vmul.f32 %v886, %v894
        %v916 = vld [vmem:[%s7] sm:$0x1]
        %v918 = vlaneseq
        %v919 = vshrl.u32 %v918, 7
        %v920 = vsub.s32 0, %v919
        %v921 = vrot.slane %v916, %v920
        %v923 = vadd.f32 %v896, %v921
        %v924 = vadd.f32 %v897, %v921
        %v925 = vadd.f32 %v898, %v921
        %v926 = vadd.f32 %v899, %v921
        %v927 = vadd.f32 %v900, %v921
        %v928 = vadd.f32 %v901, %v921
        %v929 = vadd.f32 %v902, %v921
        %v930 = vadd.f32 %v903, %v921
        %v931 = vadd.f32 %v904, %v921
        %v932 = vadd.f32 %v905, %v921
        %v933 = vadd.f32 %v906, %v921
        %v934 = vadd.f32 %v907, %v921
        %v935 = vadd.f32 %v908, %v921
        %v936 = vadd.f32 %v909, %v921
        %v937 = vadd.f32 %v910, %v921
        %v938 = vadd.f32 %v911, %v921
        %v939 = vadd.f32 %v912, %v921
        %v940 = vadd.f32 %v913, %v921
        %v941 = vadd.f32 %v914, %v921
        %v942 = vadd.f32 %v915, %v921
        %v943 = vmax.f32 %v923, 0.0
        %v944 = vmax.f32 %v924, 0.0
        %v945 = vmax.f32 %v925, 0.0
        %v946 = vmax.f32 %v926, 0.0
        %v947 = vmax.f32 %v927, 0.0
        %v948 = vmax.f32 %v928, 0.0
        %v949 = vmax.f32 %v929, 0.0
        %v950 = vmax.f32 %v930, 0.0
        %v951 = vmax.f32 %v931, 0.0
        %v952 = vmax.f32 %v932, 0.0
        %v953 = vmax.f32 %v933, 0.0
        %v954 = vmax.f32 %v934, 0.0
        %v955 = vmax.f32 %v935, 0.0
        %v956 = vmax.f32 %v936, 0.0
        %v957 = vmax.f32 %v937, 0.0
        %v958 = vmax.f32 %v938, 0.0
        %v959 = vmax.f32 %v939, 0.0
        %v960 = vmax.f32 %v940, 0.0
        %v961 = vmax.f32 %v941, 0.0
        %v962 = vmax.f32 %v942, 0.0
        %v963 = vpack.c.bf16 %v944, %v943
        %v964 = vpack.c.bf16 %v946, %v945
        %v965 = vpack.c.bf16 %v948, %v947
        %v966 = vpack.c.bf16 %v950, %v949
        %v967 = vpack.c.bf16 %v952, %v951
        %v968 = vpack.c.bf16 %v954, %v953
        %v969 = vpack.c.bf16 %v956, %v955
        %v970 = vpack.c.bf16 %v958, %v957
        %v971 = vpack.c.bf16 %v960, %v959
        %v972 = vpack.c.bf16 %v962, %v961
        %v983 = vunpack.c.l.b16 %v963
        %v984 = vunpack.c.h.b16 %v963
        %v985 = vunpack.c.l.b16 %v964
        %v986 = vunpack.c.h.b16 %v964
        %v987 = vunpack.c.l.b16 %v965
        %v988 = vunpack.c.h.b16 %v965
        %v989 = vunpack.c.l.b16 %v966
        %v990 = vunpack.c.h.b16 %v966
        %v991 = vunpack.c.l.b16 %v967
        %v992 = vunpack.c.h.b16 %v967
        %v993 = vunpack.c.l.b16 %v968
        %v994 = vunpack.c.h.b16 %v968
        %v995 = vunpack.c.l.b16 %v969
        %v996 = vunpack.c.h.b16 %v969
        %v997 = vunpack.c.l.b16 %v970
        %v998 = vunpack.c.h.b16 %v970
        %v999 = vunpack.c.l.b16 %v971
        %v1000 = vunpack.c.h.b16 %v971
        %v1001 = vunpack.c.l.b16 %v972
        %v1002 = vunpack.c.h.b16 %v972
        %v1003 = vpack.c.b16 %v983, %v983
        %v1004 = vpack.c.b16 %v984, %v984
        %v1005 = vpack.c.b16 %v985, %v985
        %v1006 = vpack.c.b16 %v986, %v986
        %v1007 = vpack.c.b16 %v987, %v987
        %v1008 = vpack.c.b16 %v988, %v988
        %v1009 = vpack.c.b16 %v989, %v989
        %v1010 = vpack.c.b16 %v990, %v990
        %v1011 = vpack.c.b16 %v991, %v991
        %v1012 = vpack.c.b16 %v992, %v992
        %v1013 = vpack.c.b16 %v993, %v993
        %v1014 = vpack.c.b16 %v994, %v994
        %v1015 = vpack.c.b16 %v995, %v995
        %v1016 = vpack.c.b16 %v996, %v996
        %v1017 = vpack.c.b16 %v997, %v997
        %v1018 = vpack.c.b16 %v998, %v998
        %v1019 = vpack.c.b16 %v999, %v999
        %v1020 = vpack.c.b16 %v1000, %v1000
        %v1021 = vpack.c.b16 %v1001, %v1001
        %v1022 = vpack.c.b16 %v1002, %v1002
        %vm1023 = vsmask.f32 4368
        %vm1024 = vmor %vm568, %vm1023
        %v1026 = vshrl.u32 %v1003, 16
        %v1028 = vrot.slane %v1026, 7
        %v1029 = vshll.u32 %v1003, 16
        %v1031 = vor.u32 %v1028, %v1029
        %v1032 = vrot.slane %v1028, 4
        %v1034 = vshrl.u32 %v1004, 16
        %v1036 = vrot.slane %v1034, 7
        %v1037 = vshll.u32 %v1004, 16
        %v1039 = vor.u32 %v1036, %v1037
        %v1040 = vsel %vm1024, %v1032, %v1039
        %v1041 = vrot.slane %v1036, 4
        %v1043 = vshrl.u32 %v1005, 16
        %v1045 = vrot.slane %v1043, 7
        %v1046 = vshll.u32 %v1005, 16
        %v1048 = vor.u32 %v1045, %v1046
        %v1049 = vrot.slane %v1045, 4
        %v1051 = vshrl.u32 %v1006, 16
        %v1053 = vrot.slane %v1051, 7
        %v1054 = vshll.u32 %v1006, 16
        %v1056 = vor.u32 %v1053, %v1054
        %v1057 = vsel %vm1024, %v1049, %v1056
        %v1058 = vrot.slane %v1053, 4
        %v1060 = vshrl.u32 %v1007, 16
        %v1062 = vrot.slane %v1060, 7
        %v1063 = vshll.u32 %v1007, 16
        %v1065 = vor.u32 %v1062, %v1063
        %v1066 = vrot.slane %v1062, 4
        %v1068 = vshrl.u32 %v1008, 16
        %v1070 = vrot.slane %v1068, 7
        %v1071 = vshll.u32 %v1008, 16
        %v1073 = vor.u32 %v1070, %v1071
        %v1074 = vsel %vm1024, %v1066, %v1073
        %v1075 = vrot.slane %v1070, 4
        %v1077 = vshrl.u32 %v1009, 16
        %v1079 = vrot.slane %v1077, 7
        %v1080 = vshll.u32 %v1009, 16
        %v1082 = vor.u32 %v1079, %v1080
        %v1083 = vrot.slane %v1079, 4
        %v1085 = vshrl.u32 %v1010, 16
        %v1087 = vrot.slane %v1085, 7
        %v1088 = vshll.u32 %v1010, 16
        %v1090 = vor.u32 %v1087, %v1088
        %v1091 = vsel %vm1024, %v1083, %v1090
        %v1092 = vrot.slane %v1087, 4
        %v1094 = vshrl.u32 %v1011, 16
        %v1096 = vrot.slane %v1094, 7
        %v1097 = vshll.u32 %v1011, 16
        %v1099 = vor.u32 %v1096, %v1097
        %v1100 = vrot.slane %v1096, 4
        %v1102 = vshrl.u32 %v1012, 16
        %v1104 = vrot.slane %v1102, 7
        %v1105 = vshll.u32 %v1012, 16
        %v1107 = vor.u32 %v1104, %v1105
        %v1108 = vsel %vm1024, %v1100, %v1107
        %v1109 = vrot.slane %v1104, 4
        %v1111 = vshrl.u32 %v1013, 16
        %v1113 = vrot.slane %v1111, 7
        %v1114 = vshll.u32 %v1013, 16
        %v1116 = vor.u32 %v1113, %v1114
        %v1117 = vrot.slane %v1113, 4
        %v1119 = vshrl.u32 %v1014, 16
        %v1121 = vrot.slane %v1119, 7
        %v1122 = vshll.u32 %v1014, 16
        %v1124 = vor.u32 %v1121, %v1122
        %v1125 = vsel %vm1024, %v1117, %v1124
        %v1126 = vrot.slane %v1121, 4
        %v1128 = vshrl.u32 %v1015, 16
        %v1130 = vrot.slane %v1128, 7
        %v1131 = vshll.u32 %v1015, 16
        %v1133 = vor.u32 %v1130, %v1131
        %v1134 = vrot.slane %v1130, 4
        %v1136 = vshrl.u32 %v1016, 16
        %v1138 = vrot.slane %v1136, 7
        %v1139 = vshll.u32 %v1016, 16
        %v1141 = vor.u32 %v1138, %v1139
        %v1142 = vsel %vm1024, %v1134, %v1141
        %v1143 = vrot.slane %v1138, 4
        %v1145 = vshrl.u32 %v1017, 16
        %v1147 = vrot.slane %v1145, 7
        %v1148 = vshll.u32 %v1017, 16
        %v1150 = vor.u32 %v1147, %v1148
        %v1151 = vrot.slane %v1147, 4
        %v1153 = vshrl.u32 %v1018, 16
        %v1155 = vrot.slane %v1153, 7
        %v1156 = vshll.u32 %v1018, 16
        %v1158 = vor.u32 %v1155, %v1156
        %v1159 = vsel %vm1024, %v1151, %v1158
        %v1160 = vrot.slane %v1155, 4
        %v1162 = vshrl.u32 %v1019, 16
        %v1164 = vrot.slane %v1162, 7
        %v1165 = vshll.u32 %v1019, 16
        %v1167 = vor.u32 %v1164, %v1165
        %v1168 = vrot.slane %v1164, 4
        %v1170 = vshrl.u32 %v1020, 16
        %v1172 = vrot.slane %v1170, 7
        %v1173 = vshll.u32 %v1020, 16
        %v1175 = vor.u32 %v1172, %v1173
        %v1176 = vsel %vm1024, %v1168, %v1175
        %v1177 = vrot.slane %v1172, 4
        %v1179 = vshrl.u32 %v1021, 16
        %v1181 = vrot.slane %v1179, 7
        %v1182 = vshll.u32 %v1021, 16
        %v1184 = vor.u32 %v1181, %v1182
        %v1185 = vrot.slane %v1181, 4
        %v1187 = vshrl.u32 %v1022, 16
        %v1189 = vrot.slane %v1187, 7
        %v1190 = vshll.u32 %v1022, 16
        %v1192 = vor.u32 %v1189, %v1190
        %v1193 = vsel %vm1024, %v1185, %v1192
        %v1194 = vrot.slane %v1189, 4
        %vm1225 = vcmask 257024
        %vm1226 = vmand %vm1225, %vm600
        %v1227 = vld [vmem:[#allocation2] sm:$0xf]
        %v1228 = vsel %vm1226, %v1031, %v1227
        %1229 = vst [vmem:[#allocation2] sm:$0xf] %v1228
        %vm1230 = vcmask 257024
        %1231 = vst.msk [vmem:[#allocation2 + $0x4] sm:$0xf] %vm1230, %v1040
        %v1232 = vld [vmem:[#allocation2 + $0x8] sm:$0x1]
        %v1233 = vsel %vm569, %v1041, %v1232
        %1234 = vst [vmem:[#allocation2 + $0x8] sm:$0x1] %v1233
        %v1235 = vld [vmem:[#allocation2 + $0xc] sm:$0xf]
        %v1236 = vsel %vm1226, %v1048, %v1235
        %1237 = vst [vmem:[#allocation2 + $0xc] sm:$0xf] %v1236
        %1238 = vst.msk [vmem:[#allocation2 + $0x10] sm:$0xf] %vm1230, %v1057
        %v1239 = vld [vmem:[#allocation2 + $0x14] sm:$0x1]
        %v1240 = vsel %vm569, %v1058, %v1239
        %1241 = vst [vmem:[#allocation2 + $0x14] sm:$0x1] %v1240
        %v1242 = vld [vmem:[#allocation2 + $0x18] sm:$0xf]
        %v1243 = vsel %vm1226, %v1065, %v1242
        %1244 = vst [vmem:[#allocation2 + $0x18] sm:$0xf] %v1243
        %1245 = vst.msk [vmem:[#allocation2 + $0x1c] sm:$0xf] %vm1230, %v1074
        %v1246 = vld [vmem:[#allocation2 + $0x20] sm:$0x1]
        %v1247 = vsel %vm569, %v1075, %v1246
        %1248 = vst [vmem:[#allocation2 + $0x20] sm:$0x1] %v1247
        %v1249 = vld [vmem:[#allocation2 + $0x24] sm:$0xf]
        %v1250 = vsel %vm1226, %v1082, %v1249
        %1251 = vst [vmem:[#allocation2 + $0x24] sm:$0xf] %v1250
        %1252 = vst.msk [vmem:[#allocation2 + $0x28] sm:$0xf] %vm1230, %v1091
        %v1253 = vld [vmem:[#allocation2 + $0x2c] sm:$0x1]
        %v1254 = vsel %vm569, %v1092, %v1253
        %1255 = vst [vmem:[#allocation2 + $0x2c] sm:$0x1] %v1254
        %v1256 = vld [vmem:[#allocation2 + $0x30] sm:$0xf]
        %v1257 = vsel %vm1226, %v1099, %v1256
        %1258 = vst [vmem:[#allocation2 + $0x30] sm:$0xf] %v1257
        %1259 = vst.msk [vmem:[#allocation2 + $0x34] sm:$0xf] %vm1230, %v1108
        %v1260 = vld [vmem:[#allocation2 + $0x38] sm:$0x1]
        %v1261 = vsel %vm569, %v1109, %v1260
        %1262 = vst [vmem:[#allocation2 + $0x38] sm:$0x1] %v1261
        %v1263 = vld [vmem:[#allocation2 + $0x3c] sm:$0xf]
        %v1264 = vsel %vm1226, %v1116, %v1263
        %1265 = vst [vmem:[#allocation2 + $0x3c] sm:$0xf] %v1264
        %1266 = vst.msk [vmem:[#allocation2 + $0x40] sm:$0xf] %vm1230, %v1125
        %v1267 = vld [vmem:[#allocation2 + $0x44] sm:$0x1]
        %v1268 = vsel %vm569, %v1126, %v1267
        %1269 = vst [vmem:[#allocation2 + $0x44] sm:$0x1] %v1268
        %v1270 = vld [vmem:[#allocation2 + $0x48] sm:$0xf]
        %v1271 = vsel %vm1226, %v1133, %v1270
        %1272 = vst [vmem:[#allocation2 + $0x48] sm:$0xf] %v1271
        %1273 = vst.msk [vmem:[#allocation2 + $0x4c] sm:$0xf] %vm1230, %v1142
        %v1274 = vld [vmem:[#allocation2 + $0x50] sm:$0x1]
        %v1275 = vsel %vm569, %v1143, %v1274
        %1276 = vst [vmem:[#allocation2 + $0x50] sm:$0x1] %v1275
        %v1277 = vld [vmem:[#allocation2 + $0x54] sm:$0xf]
        %v1278 = vsel %vm1226, %v1150, %v1277
        %1279 = vst [vmem:[#allocation2 + $0x54] sm:$0xf] %v1278
        %1280 = vst.msk [vmem:[#allocation2 + $0x58] sm:$0xf] %vm1230, %v1159
        %v1281 = vld [vmem:[#allocation2 + $0x5c] sm:$0x1]
        %v1282 = vsel %vm569, %v1160, %v1281
        %1283 = vst [vmem:[#allocation2 + $0x5c] sm:$0x1] %v1282
        %v1284 = vld [vmem:[#allocation2 + $0x60] sm:$0xf]
        %v1285 = vsel %vm1226, %v1167, %v1284
        %1286 = vst [vmem:[#allocation2 + $0x60] sm:$0xf] %v1285
        %1287 = vst.msk [vmem:[#allocation2 + $0x64] sm:$0xf] %vm1230, %v1176
        %v1288 = vld [vmem:[#allocation2 + $0x68] sm:$0x1]
        %v1289 = vsel %vm569, %v1177, %v1288
        %1290 = vst [vmem:[#allocation2 + $0x68] sm:$0x1] %v1289
        %v1291 = vld [vmem:[#allocation2 + $0x6c] sm:$0xf]
        %v1292 = vsel %vm1226, %v1184, %v1291
        %1293 = vst [vmem:[#allocation2 + $0x6c] sm:$0xf] %v1292
        %1294 = vst.msk [vmem:[#allocation2 + $0x70] sm:$0xf] %vm1230, %v1193
        %v1295 = vld [vmem:[#allocation2 + $0x74] sm:$0x1]
        %v1296 = vsel %vm569, %v1194, %v1295
        %1297 = vst [vmem:[#allocation2 + $0x74] sm:$0x1] %v1296
        %p1298 = scmp.eq.s32.totalorder %s37, 0
        // Predicated region
        $region77: #{tpu_custom_call.1} parent=67 // pred_check
          %p1299 = pneg %p1298
        $region78: #{tpu_custom_call.1} parent=67 // pred_check_branch
          %1301 = sbr.rel (%p1299) target = $region80
        $region79: #{tpu_custom_call.1} parent=67 // pred_region
          %v1302 = vld [vmem:[#allocation2] sm:$0xf]
          %v1303 = vsel %vm1226, 0, %v1302
          %1304 = vst [vmem:[#allocation2] sm:$0xf] %v1303
          %1305 = vst.msk [vmem:[#allocation2 + $0x4] sm:$0xf] %vm1230, 0
          %v1306 = vld [vmem:[#allocation2 + $0x8] sm:$0x1]
          %v1307 = vsel %vm569, 0, %v1306
          %1308 = vst [vmem:[#allocation2 + $0x8] sm:$0x1] %v1307
        $region80: #{tpu_custom_call.1} parent=67 // pred_fallthru
          _
        %p1309 = scmp.eq.s32.totalorder %s37, 1
        // Predicated region
        $region81: #{tpu_custom_call.1} parent=67 // pred_check
          %p1310 = pneg %p1309
        $region82: #{tpu_custom_call.1} parent=67 // pred_check_branch
          %1312 = sbr.rel (%p1310) target = $region84
        $region83: #{tpu_custom_call.1} parent=67 // pred_region
          %s1313 = scalar_lea.vmem [#allocation2], 108
          %v1314 = vld [vmem:[%s1313] sm:$0xf]
          %v1315 = vsel %vm1226, 0, %v1314
          %1316 = vst [vmem:[%s1313] sm:$0xf] %v1315
          %1317 = vst.msk [vmem:[%s1313 + $0x4] sm:$0xf] %vm1230, 0
          %v1318 = vld [vmem:[%s1313 + $0x8] sm:$0x1]
          %v1319 = vsel %vm569, 0, %v1318
          %1320 = vst [vmem:[%s1313 + $0x8] sm:$0x1] %v1319
        $region84: #{tpu_custom_call.1} parent=67 // pred_fallthru
          _
        %v1321 = vld [vmem:[#allocation2] sm:$0xf]
        %v1322 = vld [vmem:[#allocation2 + $0x4] sm:$0xf]
        %v1323 = vld [vmem:[#allocation2 + $0xc] sm:$0xf]
        %v1324 = vld [vmem:[#allocation2 + $0x10] sm:$0xf]
        %v1325 = vld [vmem:[#allocation2 + $0x18] sm:$0xf]
        %v1326 = vld [vmem:[#allocation2 + $0x1c] sm:$0xf]
        %v1327 = vld [vmem:[#allocation2 + $0x24] sm:$0xf]
        %v1328 = vld [vmem:[#allocation2 + $0x28] sm:$0xf]
        %v1329 = vld [vmem:[#allocation2 + $0x30] sm:$0xf]
        %v1330 = vld [vmem:[#allocation2 + $0x34] sm:$0xf]
        %v1331 = vld [vmem:[#allocation2 + $0x3c] sm:$0xf]
        %v1332 = vld [vmem:[#allocation2 + $0x40] sm:$0xf]
        %v1333 = vld [vmem:[#allocation2 + $0x48] sm:$0xf]
        %v1334 = vld [vmem:[#allocation2 + $0x4c] sm:$0xf]
        %v1335 = vld [vmem:[#allocation2 + $0x54] sm:$0xf]
        %v1336 = vld [vmem:[#allocation2 + $0x58] sm:$0xf]
        %v1337 = vld [vmem:[%s4] sm:$0xf]
        %v1338 = vld [vmem:[%s4 + $0x4] sm:$0xf]
        %v1339 = vld [vmem:[%s4 + $0x8] sm:$0xf]
        %v1340 = vld [vmem:[%s4 + $0xc] sm:$0xf]
        %v1341 = vld [vmem:[#allocation2 + $0x8] sm:$0x1]
        %v1342 = vld [vmem:[#allocation2 + $0x14] sm:$0x1]
        %v1343 = vld [vmem:[#allocation2 + $0x20] sm:$0x1]
        %v1344 = vld [vmem:[#allocation2 + $0x2c] sm:$0x1]
        %v1345 = vld [vmem:[#allocation2 + $0x38] sm:$0x1]
        %v1346 = vld [vmem:[#allocation2 + $0x44] sm:$0x1]
        %v1347 = vld [vmem:[#allocation2 + $0x50] sm:$0x1]
        %v1348 = vld [vmem:[#allocation2 + $0x5c] sm:$0x1]
        %vm1349 = vsmask.f32 3328
        %vm1350 = vsmask.f32 7440
        %vm1351 = vmor %vm1349, %vm1350
        %v1353 = vshrl.u32 %v1321, 16
        %v1355 = vrot.slane %v1353, 4
        %v1356 = vshll.u32 %v1321, 16
        %v1358 = vrot.slane %v1356, 5
        %v1359 = vor.u32 %v1355, %v1358
        %v1360 = vrot.slane %v1359, 4
        %v1362 = vshll.u32 %v1322, 16
        %v1364 = vrot.slane %v1362, 5
        %v1365 = vsel %vm1351, %v1360, %v1364
        %v1366 = vshrl.u32 %v1322, 16
        %v1368 = vrot.slane %v1366, 4
        %v1369 = vor.u32 %v1368, %v1364
        %v1370 = vrot.slane %v1369, 4
        %v1372 = vshll.u32 %v1341, 16
        %v1374 = vrot.slane %v1372, 5
        %v1375 = vsel %vm1351, %v1370, %v1374
        %v1377 = vshrl.u32 %v1323, 16
        %v1379 = vrot.slane %v1377, 4
        %v1380 = vshll.u32 %v1323, 16
        %v1382 = vrot.slane %v1380, 5
        %v1383 = vor.u32 %v1379, %v1382
        %v1384 = vrot.slane %v1383, 4
        %v1386 = vshll.u32 %v1324, 16
        %v1388 = vrot.slane %v1386, 5
        %v1389 = vsel %vm1351, %v1384, %v1388
        %v1390 = vshrl.u32 %v1324, 16
        %v1392 = vrot.slane %v1390, 4
        %v1393 = vor.u32 %v1392, %v1388
        %v1394 = vrot.slane %v1393, 4
        %v1396 = vshll.u32 %v1342, 16
        %v1398 = vrot.slane %v1396, 5
        %v1399 = vsel %vm1351, %v1394, %v1398
        %v1401 = vshrl.u32 %v1325, 16
        %v1403 = vrot.slane %v1401, 4
        %v1404 = vshll.u32 %v1325, 16
        %v1406 = vrot.slane %v1404, 5
        %v1407 = vor.u32 %v1403, %v1406
        %v1408 = vrot.slane %v1407, 4
        %v1410 = vshll.u32 %v1326, 16
        %v1412 = vrot.slane %v1410, 5
        %v1413 = vsel %vm1351, %v1408, %v1412
        %v1414 = vshrl.u32 %v1326, 16
        %v1416 = vrot.slane %v1414, 4
        %v1417 = vor.u32 %v1416, %v1412
        %v1418 = vrot.slane %v1417, 4
        %v1420 = vshll.u32 %v1343, 16
        %v1422 = vrot.slane %v1420, 5
        %v1423 = vsel %vm1351, %v1418, %v1422
        %v1425 = vshrl.u32 %v1327, 16
        %v1427 = vrot.slane %v1425, 4
        %v1428 = vshll.u32 %v1327, 16
        %v1430 = vrot.slane %v1428, 5
        %v1431 = vor.u32 %v1427, %v1430
        %v1432 = vrot.slane %v1431, 4
        %v1434 = vshll.u32 %v1328, 16
        %v1436 = vrot.slane %v1434, 5
        %v1437 = vsel %vm1351, %v1432, %v1436
        %v1438 = vshrl.u32 %v1328, 16
        %v1440 = vrot.slane %v1438, 4
        %v1441 = vor.u32 %v1440, %v1436
        %v1442 = vrot.slane %v1441, 4
        %v1444 = vshll.u32 %v1344, 16
        %v1446 = vrot.slane %v1444, 5
        %v1447 = vsel %vm1351, %v1442, %v1446
        %v1449 = vshrl.u32 %v1329, 16
        %v1451 = vrot.slane %v1449, 4
        %v1452 = vshll.u32 %v1329, 16
        %v1454 = vrot.slane %v1452, 5
        %v1455 = vor.u32 %v1451, %v1454
        %v1456 = vrot.slane %v1455, 4
        %v1458 = vshll.u32 %v1330, 16
        %v1460 = vrot.slane %v1458, 5
        %v1461 = vsel %vm1351, %v1456, %v1460
        %v1462 = vshrl.u32 %v1330, 16
        %v1464 = vrot.slane %v1462, 4
        %v1465 = vor.u32 %v1464, %v1460
        %v1466 = vrot.slane %v1465, 4
        %v1468 = vshll.u32 %v1345, 16
        %v1470 = vrot.slane %v1468, 5
        %v1471 = vsel %vm1351, %v1466, %v1470
        %v1473 = vshrl.u32 %v1331, 16
        %v1475 = vrot.slane %v1473, 4
        %v1476 = vshll.u32 %v1331, 16
        %v1478 = vrot.slane %v1476, 5
        %v1479 = vor.u32 %v1475, %v1478
        %v1480 = vrot.slane %v1479, 4
        %v1482 = vshll.u32 %v1332, 16
        %v1484 = vrot.slane %v1482, 5
        %v1485 = vsel %vm1351, %v1480, %v1484
        %v1486 = vshrl.u32 %v1332, 16
        %v1488 = vrot.slane %v1486, 4
        %v1489 = vor.u32 %v1488, %v1484
        %v1490 = vrot.slane %v1489, 4
        %v1492 = vshll.u32 %v1346, 16
        %v1494 = vrot.slane %v1492, 5
        %v1495 = vsel %vm1351, %v1490, %v1494
        %v1497 = vshrl.u32 %v1333, 16
        %v1499 = vrot.slane %v1497, 4
        %v1500 = vshll.u32 %v1333, 16
        %v1502 = vrot.slane %v1500, 5
        %v1503 = vor.u32 %v1499, %v1502
        %v1504 = vrot.slane %v1503, 4
        %v1506 = vshll.u32 %v1334, 16
        %v1508 = vrot.slane %v1506, 5
        %v1509 = vsel %vm1351, %v1504, %v1508
        %v1510 = vshrl.u32 %v1334, 16
        %v1512 = vrot.slane %v1510, 4
        %v1513 = vor.u32 %v1512, %v1508
        %v1514 = vrot.slane %v1513, 4
        %v1516 = vshll.u32 %v1347, 16
        %v1518 = vrot.slane %v1516, 5
        %v1519 = vsel %vm1351, %v1514, %v1518
        %v1521 = vshrl.u32 %v1335, 16
        %v1523 = vrot.slane %v1521, 4
        %v1524 = vshll.u32 %v1335, 16
        %v1526 = vrot.slane %v1524, 5
        %v1527 = vor.u32 %v1523, %v1526
        %v1528 = vrot.slane %v1527, 4
        %v1530 = vshll.u32 %v1336, 16
        %v1532 = vrot.slane %v1530, 5
        %v1533 = vsel %vm1351, %v1528, %v1532
        %v1534 = vshrl.u32 %v1336, 16
        %v1536 = vrot.slane %v1534, 4
        %v1537 = vor.u32 %v1536, %v1532
        %v1538 = vrot.slane %v1537, 4
        %v1540 = vshll.u32 %v1348, 16
        %v1542 = vrot.slane %v1540, 5
        %v1543 = vsel %vm1351, %v1538, %v1542
        %v1544 = vld [vmem:[%s4 + $0x10] sm:$0xf]
        %v1545 = vld [vmem:[%s4 + $0x14] sm:$0xf]
        %v1546 = vld [vmem:[%s4 + $0x18] sm:$0xf]
        %v1547 = vld [vmem:[%s4 + $0x1c] sm:$0xf]
        %v1548 = vunpack.c.l.b16 %v1365
        %v1549 = vunpack.c.l.b16 %v1375
        %v1550 = vunpack.c.l.b16 %v1389
        %v1551 = vunpack.c.l.b16 %v1399
        %v1552 = vunpack.c.l.b16 %v1413
        %v1553 = vunpack.c.l.b16 %v1423
        %v1554 = vunpack.c.l.b16 %v1437
        %v1555 = vunpack.c.l.b16 %v1447
        %v1556 = vunpack.c.l.b16 %v1461
        %v1557 = vunpack.c.l.b16 %v1471
        %v1558 = vunpack.c.l.b16 %v1485
        %v1559 = vunpack.c.l.b16 %v1495
        %v1560 = vunpack.c.l.b16 %v1509
        %v1561 = vunpack.c.l.b16 %v1519
        %v1562 = vunpack.c.l.b16 %v1533
        %v1563 = vunpack.c.l.b16 %v1543
        %v1564 = vpack.c.b16 %v1549, %v1548
        %v1565 = vpack.c.b16 %v1551, %v1550
        %v1566 = vpack.c.b16 %v1553, %v1552
        %v1567 = vpack.c.b16 %v1555, %v1554
        %v1568 = vpack.c.b16 %v1557, %v1556
        %v1569 = vpack.c.b16 %v1559, %v1558
        %v1570 = vpack.c.b16 %v1561, %v1560
        %v1571 = vpack.c.b16 %v1563, %v1562
        %v1576 = vunpack.c.l.b16 %v1544
        %v1577 = vunpack.c.l.b16 %v1545
        %v1578 = vunpack.c.l.b16 %v1546
        %v1579 = vunpack.c.l.b16 %v1547
        %v1580 = vpack.c.b16 %v1577, %v1576
        %v1581 = vpack.c.b16 %v1579, %v1578
        %vm1584 = vcmask 261120
        %v1586 = vsel %vm1584, %v1564, 0
        %v1589 = vsel %vm1584, %v1565, 0
        %v1592 = vsel %vm1584, %v1566, 0
        %v1595 = vsel %vm1584, %v1567, 0
        %v1598 = vsel %vm1584, %v1568, 0
        %v1601 = vsel %vm1584, %v1569, 0
        %v1604 = vsel %vm1584, %v1570, 0
        %v1607 = vsel %vm1584, %v1571, 0
        %1609 = vmatprep.subr.bf16.mxu0 0
        %1610 = vmatpush1.bf16.msra.mxu0 0
        %1611 = vmatprep.subr.bf16.mxu0 0
        %1612 = vmatpush1.bf16.msra.mxu0 0
        %1613 = vmatprep.subr.bf16.mxu0 0
        %1614 = vmatpush1.bf16.msra.mxu0 0
        %1615 = vmatprep.subr.bf16.mxu0 0
        %1616 = vmatpush1.bf16.msra.mxu0 0
        %1617 = vmatprep.subr.bf16.mxu0 0
        %1618 = vmatpush1.bf16.msra.mxu0 0
        %1619 = vmatprep.subr.bf16.mxu0 0
        %1620 = vmatpush1.bf16.msra.mxu0 0
        %1621 = vmatprep.subr.bf16.mxu0 0
        %1622 = vmatpush1.bf16.msra.mxu0 %v1581
        %1623 = vmatprep.subr.bf16.mxu0 0
        %1624 = vmatpush1.bf16.msra.mxu0 %v1580
        %1625 = vmatprep.subr.bf16.mxu0 0
        %1626 = vmatpush2.bf16.msra.mxu0 0
        %1627 = vmatprep.subr.bf16.mxu0 0
        %1628 = vmatpush2.bf16.msra.mxu0 0
        %1629 = vmatprep.subr.bf16.mxu0 0
        %1630 = vmatpush2.bf16.msra.mxu0 0
        %1631 = vmatprep.subr.bf16.mxu0 0
        %1632 = vmatpush2.bf16.msra.mxu0 0
        %1633 = vmatprep.subr.bf16.mxu0 0
        %1634 = vmatpush2.bf16.msra.mxu0 0
        %1635 = vmatprep.subr.bf16.mxu0 0
        %1636 = vmatpush2.bf16.msra.mxu0 0
        %1637 = vmatprep.subr.bf16.mxu0 0
        %1638 = vmatpush2.bf16.msra.mxu0 0
        %1639 = vmatprep.subr.bf16.mxu0 0
        %1640 = vmatpush2.bf16.msra.mxu0 0
        %1641 = vmatprep.mubr.bf16.mxu0 0
        %1642 = vmatmul.mubr.bf16.gmra.mxu0 %v1586
        %v1643 = vpop.f32.mrf.mxu0
        %v1644 = vadd.f32 0.0, %v1643
        %v1645 = vpop.f32.mrf.mxu0
        %v1646 = vpop.f32.mrf.mxu0
        %v1647 = vadd.f32 0.0, %v1646
        %v1648 = vpop.f32.mrf.mxu0
        %1649 = vmatprep.mubr.bf16.mxu0 0
        %1650 = vmatmul.mubr.bf16.gmra.mxu0 %v1589
        %v1651 = vpop.f32.mrf.mxu0
        %v1652 = vadd.f32 0.0, %v1651
        %v1653 = vpop.f32.mrf.mxu0
        %v1654 = vpop.f32.mrf.mxu0
        %v1655 = vadd.f32 0.0, %v1654
        %v1656 = vpop.f32.mrf.mxu0
        %1657 = vmatprep.mubr.bf16.mxu0 0
        %1658 = vmatmul.mubr.bf16.gmra.mxu0 %v1592
        %v1659 = vpop.f32.mrf.mxu0
        %v1660 = vadd.f32 0.0, %v1659
        %v1661 = vpop.f32.mrf.mxu0
        %v1662 = vpop.f32.mrf.mxu0
        %v1663 = vadd.f32 0.0, %v1662
        %v1664 = vpop.f32.mrf.mxu0
        %1665 = vmatprep.mubr.bf16.mxu0 0
        %1666 = vmatmul.mubr.bf16.gmra.mxu0 %v1595
        %v1667 = vpop.f32.mrf.mxu0
        %v1668 = vadd.f32 0.0, %v1667
        %v1669 = vpop.f32.mrf.mxu0
        %v1670 = vpop.f32.mrf.mxu0
        %v1671 = vadd.f32 0.0, %v1670
        %v1672 = vpop.f32.mrf.mxu0
        %1673 = vmatprep.mubr.bf16.mxu0 0
        %1674 = vmatmul.mubr.bf16.gmra.mxu0 %v1598
        %v1675 = vpop.f32.mrf.mxu0
        %v1676 = vadd.f32 0.0, %v1675
        %v1677 = vpop.f32.mrf.mxu0
        %v1678 = vpop.f32.mrf.mxu0
        %v1679 = vadd.f32 0.0, %v1678
        %v1680 = vpop.f32.mrf.mxu0
        %1681 = vmatprep.mubr.bf16.mxu0 0
        %1682 = vmatmul.mubr.bf16.gmra.mxu0 %v1601
        %v1683 = vpop.f32.mrf.mxu0
        %v1684 = vadd.f32 0.0, %v1683
        %v1685 = vpop.f32.mrf.mxu0
        %v1686 = vpop.f32.mrf.mxu0
        %v1687 = vadd.f32 0.0, %v1686
        %v1688 = vpop.f32.mrf.mxu0
        %1689 = vmatprep.mubr.bf16.mxu0 0
        %1690 = vmatmul.mubr.bf16.gmra.mxu0 %v1604
        %v1691 = vpop.f32.mrf.mxu0
        %v1692 = vadd.f32 0.0, %v1691
        %v1693 = vpop.f32.mrf.mxu0
        %v1694 = vpop.f32.mrf.mxu0
        %v1695 = vadd.f32 0.0, %v1694
        %v1696 = vpop.f32.mrf.mxu0
        %1697 = vmatprep.mubr.bf16.mxu0 0
        %1698 = vmatmul.mubr.bf16.gmra.mxu0 %v1607
        %v1699 = vpop.f32.mrf.mxu0
        %v1700 = vadd.f32 0.0, %v1699
        %v1701 = vpop.f32.mrf.mxu0
        %v1702 = vpop.f32.mrf.mxu0
        %v1703 = vadd.f32 0.0, %v1702
        %v1704 = vpop.f32.mrf.mxu0
        %1705 = vdwg.mxu0
        %v1722 = vunpack.c.l.b16 %v1321
        %v1723 = vunpack.c.l.b16 %v1322
        %v1724 = vunpack.c.l.b16 %v1323
        %v1725 = vunpack.c.l.b16 %v1324
        %v1726 = vunpack.c.l.b16 %v1325
        %v1727 = vunpack.c.l.b16 %v1326
        %v1728 = vunpack.c.l.b16 %v1327
        %v1729 = vunpack.c.l.b16 %v1328
        %v1730 = vunpack.c.l.b16 %v1329
        %v1731 = vunpack.c.l.b16 %v1330
        %v1732 = vunpack.c.l.b16 %v1331
        %v1733 = vunpack.c.l.b16 %v1332
        %v1734 = vunpack.c.l.b16 %v1333
        %v1735 = vunpack.c.l.b16 %v1334
        %v1736 = vunpack.c.l.b16 %v1335
        %v1737 = vunpack.c.l.b16 %v1336
        %v1738 = vpack.c.b16 %v1723, %v1722
        %v1739 = vpack.c.b16 %v1725, %v1724
        %v1740 = vpack.c.b16 %v1727, %v1726
        %v1741 = vpack.c.b16 %v1729, %v1728
        %v1742 = vpack.c.b16 %v1731, %v1730
        %v1743 = vpack.c.b16 %v1733, %v1732
        %v1744 = vpack.c.b16 %v1735, %v1734
        %v1745 = vpack.c.b16 %v1737, %v1736
        %v1750 = vunpack.c.l.b16 %v1337
        %v1751 = vunpack.c.l.b16 %v1338
        %v1752 = vunpack.c.l.b16 %v1339
        %v1753 = vunpack.c.l.b16 %v1340
        %v1754 = vpack.c.b16 %v1751, %v1750
        %v1755 = vpack.c.b16 %v1753, %v1752
        %v1759 = vsel %vm1584, %v1738, 0
        %v1762 = vsel %vm1584, %v1739, 0
        %v1765 = vsel %vm1584, %v1740, 0
        %v1768 = vsel %vm1584, %v1741, 0
        %v1771 = vsel %vm1584, %v1742, 0
        %v1774 = vsel %vm1584, %v1743, 0
        %v1777 = vsel %vm1584, %v1744, 0
        %v1780 = vsel %vm1584, %v1745, 0
        %1782 = vmatprep.subr.bf16.mxu0 0
        %1783 = vmatpush1.bf16.msra.mxu0 0
        %1784 = vmatprep.subr.bf16.mxu0 0
        %1785 = vmatpush1.bf16.msra.mxu0 0
        %1786 = vmatprep.subr.bf16.mxu0 0
        %1787 = vmatpush1.bf16.msra.mxu0 0
        %1788 = vmatprep.subr.bf16.mxu0 0
        %1789 = vmatpush1.bf16.msra.mxu0 0
        %1790 = vmatprep.subr.bf16.mxu0 0
        %1791 = vmatpush1.bf16.msra.mxu0 0
        %1792 = vmatprep.subr.bf16.mxu0 0
        %1793 = vmatpush1.bf16.msra.mxu0 0
        %1794 = vmatprep.subr.bf16.mxu0 0
        %1795 = vmatpush1.bf16.msra.mxu0 %v1755
        %1796 = vmatprep.subr.bf16.mxu0 0
        %1797 = vmatpush1.bf16.msra.mxu0 %v1754
        %1798 = vmatprep.subr.bf16.mxu0 0
        %1799 = vmatpush2.bf16.msra.mxu0 0
        %1800 = vmatprep.subr.bf16.mxu0 0
        %1801 = vmatpush2.bf16.msra.mxu0 0
        %1802 = vmatprep.subr.bf16.mxu0 0
        %1803 = vmatpush2.bf16.msra.mxu0 0
        %1804 = vmatprep.subr.bf16.mxu0 0
        %1805 = vmatpush2.bf16.msra.mxu0 0
        %1806 = vmatprep.subr.bf16.mxu0 0
        %1807 = vmatpush2.bf16.msra.mxu0 0
        %1808 = vmatprep.subr.bf16.mxu0 0
        %1809 = vmatpush2.bf16.msra.mxu0 0
        %1810 = vmatprep.subr.bf16.mxu0 0
        %1811 = vmatpush2.bf16.msra.mxu0 0
        %1812 = vmatprep.subr.bf16.mxu0 0
        %1813 = vmatpush2.bf16.msra.mxu0 0
        %1814 = vmatprep.mubr.bf16.mxu0 0
        %1815 = vmatmul.mubr.bf16.gmra.mxu0 %v1759
        %v1816 = vpop.f32.mrf.mxu0
        %v1817 = vadd.f32 %v1644, %v1816
        %v1818 = vpop.f32.mrf.mxu0
        %v1819 = vpop.f32.mrf.mxu0
        %v1820 = vadd.f32 %v1647, %v1819
        %v1821 = vpop.f32.mrf.mxu0
        %1822 = vmatprep.mubr.bf16.mxu0 0
        %1823 = vmatmul.mubr.bf16.gmra.mxu0 %v1762
        %v1824 = vpop.f32.mrf.mxu0
        %v1825 = vadd.f32 %v1652, %v1824
        %v1826 = vpop.f32.mrf.mxu0
        %v1827 = vpop.f32.mrf.mxu0
        %v1828 = vadd.f32 %v1655, %v1827
        %v1829 = vpop.f32.mrf.mxu0
        %1830 = vmatprep.mubr.bf16.mxu0 0
        %1831 = vmatmul.mubr.bf16.gmra.mxu0 %v1765
        %v1832 = vpop.f32.mrf.mxu0
        %v1833 = vadd.f32 %v1660, %v1832
        %v1834 = vpop.f32.mrf.mxu0
        %v1835 = vpop.f32.mrf.mxu0
        %v1836 = vadd.f32 %v1663, %v1835
        %v1837 = vpop.f32.mrf.mxu0
        %1838 = vmatprep.mubr.bf16.mxu0 0
        %1839 = vmatmul.mubr.bf16.gmra.mxu0 %v1768
        %v1840 = vpop.f32.mrf.mxu0
        %v1841 = vadd.f32 %v1668, %v1840
        %v1842 = vpop.f32.mrf.mxu0
        %v1843 = vpop.f32.mrf.mxu0
        %v1844 = vadd.f32 %v1671, %v1843
        %v1845 = vpop.f32.mrf.mxu0
        %1846 = vmatprep.mubr.bf16.mxu0 0
        %1847 = vmatmul.mubr.bf16.gmra.mxu0 %v1771
        %v1848 = vpop.f32.mrf.mxu0
        %v1849 = vadd.f32 %v1676, %v1848
        %v1850 = vpop.f32.mrf.mxu0
        %v1851 = vpop.f32.mrf.mxu0
        %v1852 = vadd.f32 %v1679, %v1851
        %v1853 = vpop.f32.mrf.mxu0
        %1854 = vmatprep.mubr.bf16.mxu0 0
        %1855 = vmatmul.mubr.bf16.gmra.mxu0 %v1774
        %v1856 = vpop.f32.mrf.mxu0
        %v1857 = vadd.f32 %v1684, %v1856
        %v1858 = vpop.f32.mrf.mxu0
        %v1859 = vpop.f32.mrf.mxu0
        %v1860 = vadd.f32 %v1687, %v1859
        %v1861 = vpop.f32.mrf.mxu0
        %1862 = vmatprep.mubr.bf16.mxu0 0
        %1863 = vmatmul.mubr.bf16.gmra.mxu0 %v1777
        %v1864 = vpop.f32.mrf.mxu0
        %v1865 = vadd.f32 %v1692, %v1864
        %v1866 = vpop.f32.mrf.mxu0
        %v1867 = vpop.f32.mrf.mxu0
        %v1868 = vadd.f32 %v1695, %v1867
        %v1869 = vpop.f32.mrf.mxu0
        %1870 = vmatprep.mubr.bf16.mxu0 0
        %1871 = vmatmul.mubr.bf16.gmra.mxu0 %v1780
        %v1872 = vpop.f32.mrf.mxu0
        %v1873 = vadd.f32 %v1700, %v1872
        %v1874 = vpop.f32.mrf.mxu0
        %v1875 = vpop.f32.mrf.mxu0
        %v1876 = vadd.f32 %v1703, %v1875
        %v1877 = vpop.f32.mrf.mxu0
        %1878 = vdwg.mxu0
        %v1879 = vld [vmem:[#allocation2] sm:$0xe]
        %v1880 = vld [vmem:[#allocation2 + $0xc] sm:$0xe]
        %v1881 = vld [vmem:[#allocation2 + $0x18] sm:$0xe]
        %v1882 = vld [vmem:[#allocation2 + $0x24] sm:$0xe]
        %v1883 = vld [vmem:[#allocation2 + $0x30] sm:$0xe]
        %v1884 = vld [vmem:[#allocation2 + $0x3c] sm:$0xe]
        %v1885 = vld [vmem:[#allocation2 + $0x48] sm:$0xe]
        %v1886 = vld [vmem:[#allocation2 + $0x54] sm:$0xe]
        %vm1903 = vcmask 1042432
        %vm1904 = vcmask 1046532
        %vm1905 = vmor %vm1903, %vm1904
        %v1906 = vrot.slane %v1879, 5
        %v1907 = vrot.slane %v1906, 4
        %v1908 = vrot.slane %v1322, 5
        %v1909 = vsel %vm1905, %v1907, %v1908
        %v1910 = vrot.slane %v1908, 4
        %v1911 = vrot.slane %v1341, 5
        %v1912 = vsel %vm1905, %v1910, %v1911
        %v1913 = vrot.slane %v1880, 5
        %v1914 = vrot.slane %v1913, 4
        %v1915 = vrot.slane %v1324, 5
        %v1916 = vsel %vm1905, %v1914, %v1915
        %v1917 = vrot.slane %v1915, 4
        %v1918 = vrot.slane %v1342, 5
        %v1919 = vsel %vm1905, %v1917, %v1918
        %v1920 = vrot.slane %v1881, 5
        %v1921 = vrot.slane %v1920, 4
        %v1922 = vrot.slane %v1326, 5
        %v1923 = vsel %vm1905, %v1921, %v1922
        %v1924 = vrot.slane %v1922, 4
        %v1925 = vrot.slane %v1343, 5
        %v1926 = vsel %vm1905, %v1924, %v1925
        %v1927 = vrot.slane %v1882, 5
        %v1928 = vrot.slane %v1927, 4
        %v1929 = vrot.slane %v1328, 5
        %v1930 = vsel %vm1905, %v1928, %v1929
        %v1931 = vrot.slane %v1929, 4
        %v1932 = vrot.slane %v1344, 5
        %v1933 = vsel %vm1905, %v1931, %v1932
        %v1934 = vrot.slane %v1883, 5
        %v1935 = vrot.slane %v1934, 4
        %v1936 = vrot.slane %v1330, 5
        %v1937 = vsel %vm1905, %v1935, %v1936
        %v1938 = vrot.slane %v1936, 4
        %v1939 = vrot.slane %v1345, 5
        %v1940 = vsel %vm1905, %v1938, %v1939
        %v1941 = vrot.slane %v1884, 5
        %v1942 = vrot.slane %v1941, 4
        %v1943 = vrot.slane %v1332, 5
        %v1944 = vsel %vm1905, %v1942, %v1943
        %v1945 = vrot.slane %v1943, 4
        %v1946 = vrot.slane %v1346, 5
        %v1947 = vsel %vm1905, %v1945, %v1946
        %v1948 = vrot.slane %v1885, 5
        %v1949 = vrot.slane %v1948, 4
        %v1950 = vrot.slane %v1334, 5
        %v1951 = vsel %vm1905, %v1949, %v1950
        %v1952 = vrot.slane %v1950, 4
        %v1953 = vrot.slane %v1347, 5
        %v1954 = vsel %vm1905, %v1952, %v1953
        %v1955 = vrot.slane %v1886, 5
        %v1956 = vrot.slane %v1955, 4
        %v1957 = vrot.slane %v1336, 5
        %v1958 = vsel %vm1905, %v1956, %v1957
        %v1959 = vrot.slane %v1957, 4
        %v1960 = vrot.slane %v1348, 5
        %v1961 = vsel %vm1905, %v1959, %v1960
        %v1962 = vld [vmem:[%s4 + $0x20] sm:$0xf]
        %v1963 = vld [vmem:[%s4 + $0x24] sm:$0xf]
        %v1964 = vld [vmem:[%s4 + $0x28] sm:$0xf]
        %v1965 = vld [vmem:[%s4 + $0x2c] sm:$0xf]
        %v1966 = vunpack.c.l.b16 %v1909
        %v1967 = vunpack.c.l.b16 %v1912
        %v1968 = vunpack.c.l.b16 %v1916
        %v1969 = vunpack.c.l.b16 %v1919
        %v1970 = vunpack.c.l.b16 %v1923
        %v1971 = vunpack.c.l.b16 %v1926
        %v1972 = vunpack.c.l.b16 %v1930
        %v1973 = vunpack.c.l.b16 %v1933
        %v1974 = vunpack.c.l.b16 %v1937
        %v1975 = vunpack.c.l.b16 %v1940
        %v1976 = vunpack.c.l.b16 %v1944
        %v1977 = vunpack.c.l.b16 %v1947
        %v1978 = vunpack.c.l.b16 %v1951
        %v1979 = vunpack.c.l.b16 %v1954
        %v1980 = vunpack.c.l.b16 %v1958
        %v1981 = vunpack.c.l.b16 %v1961
        %v1982 = vpack.c.b16 %v1967, %v1966
        %v1983 = vpack.c.b16 %v1969, %v1968
        %v1984 = vpack.c.b16 %v1971, %v1970
        %v1985 = vpack.c.b16 %v1973, %v1972
        %v1986 = vpack.c.b16 %v1975, %v1974
        %v1987 = vpack.c.b16 %v1977, %v1976
        %v1988 = vpack.c.b16 %v1979, %v1978
        %v1989 = vpack.c.b16 %v1981, %v1980
        %v1994 = vunpack.c.l.b16 %v1962
        %v1995 = vunpack.c.l.b16 %v1963
        %v1996 = vunpack.c.l.b16 %v1964
        %v1997 = vunpack.c.l.b16 %v1965
        %v1998 = vpack.c.b16 %v1995, %v1994
        %v1999 = vpack.c.b16 %v1997, %v1996
        %v2003 = vsel %vm1584, %v1982, 0
        %v2006 = vsel %vm1584, %v1983, 0
        %v2009 = vsel %vm1584, %v1984, 0
        %v2012 = vsel %vm1584, %v1985, 0
        %v2015 = vsel %vm1584, %v1986, 0
        %v2018 = vsel %vm1584, %v1987, 0
        %v2021 = vsel %vm1584, %v1988, 0
        %v2024 = vsel %vm1584, %v1989, 0
        %2026 = vmatprep.subr.bf16.mxu0 0
        %2027 = vmatpush1.bf16.msra.mxu0 0
        %2028 = vmatprep.subr.bf16.mxu0 0
        %2029 = vmatpush1.bf16.msra.mxu0 0
        %2030 = vmatprep.subr.bf16.mxu0 0
        %2031 = vmatpush1.bf16.msra.mxu0 0
        %2032 = vmatprep.subr.bf16.mxu0 0
        %2033 = vmatpush1.bf16.msra.mxu0 0
        %2034 = vmatprep.subr.bf16.mxu0 0
        %2035 = vmatpush1.bf16.msra.mxu0 0
        %2036 = vmatprep.subr.bf16.mxu0 0
        %2037 = vmatpush1.bf16.msra.mxu0 0
        %2038 = vmatprep.subr.bf16.mxu0 0
        %2039 = vmatpush1.bf16.msra.mxu0 %v1999
        %2040 = vmatprep.subr.bf16.mxu0 0
        %2041 = vmatpush1.bf16.msra.mxu0 %v1998
        %2042 = vmatprep.subr.bf16.mxu0 0
        %2043 = vmatpush2.bf16.msra.mxu0 0
        %2044 = vmatprep.subr.bf16.mxu0 0
        %2045 = vmatpush2.bf16.msra.mxu0 0
        %2046 = vmatprep.subr.bf16.mxu0 0
        %2047 = vmatpush2.bf16.msra.mxu0 0
        %2048 = vmatprep.subr.bf16.mxu0 0
        %2049 = vmatpush2.bf16.msra.mxu0 0
        %2050 = vmatprep.subr.bf16.mxu0 0
        %2051 = vmatpush2.bf16.msra.mxu0 0
        %2052 = vmatprep.subr.bf16.mxu0 0
        %2053 = vmatpush2.bf16.msra.mxu0 0
        %2054 = vmatprep.subr.bf16.mxu0 0
        %2055 = vmatpush2.bf16.msra.mxu0 0
        %2056 = vmatprep.subr.bf16.mxu0 0
        %2057 = vmatpush2.bf16.msra.mxu0 0
        %2058 = vmatprep.mubr.bf16.mxu0 0
        %2059 = vmatmul.mubr.bf16.gmra.mxu0 %v2003
        %v2060 = vpop.f32.mrf.mxu0
        %v2061 = vadd.f32 0.0, %v2060
        %v2062 = vpop.f32.mrf.mxu0
        %v2063 = vpop.f32.mrf.mxu0
        %v2064 = vadd.f32 0.0, %v2063
        %v2065 = vpop.f32.mrf.mxu0
        %2066 = vmatprep.mubr.bf16.mxu0 0
        %2067 = vmatmul.mubr.bf16.gmra.mxu0 %v2006
        %v2068 = vpop.f32.mrf.mxu0
        %v2069 = vadd.f32 0.0, %v2068
        %v2070 = vpop.f32.mrf.mxu0
        %v2071 = vpop.f32.mrf.mxu0
        %v2072 = vadd.f32 0.0, %v2071
        %v2073 = vpop.f32.mrf.mxu0
        %2074 = vmatprep.mubr.bf16.mxu0 0
        %2075 = vmatmul.mubr.bf16.gmra.mxu0 %v2009
        %v2076 = vpop.f32.mrf.mxu0
        %v2077 = vadd.f32 0.0, %v2076
        %v2078 = vpop.f32.mrf.mxu0
        %v2079 = vpop.f32.mrf.mxu0
        %v2080 = vadd.f32 0.0, %v2079
        %v2081 = vpop.f32.mrf.mxu0
        %2082 = vmatprep.mubr.bf16.mxu0 0
        %2083 = vmatmul.mubr.bf16.gmra.mxu0 %v2012
        %v2084 = vpop.f32.mrf.mxu0
        %v2085 = vadd.f32 0.0, %v2084
        %v2086 = vpop.f32.mrf.mxu0
        %v2087 = vpop.f32.mrf.mxu0
        %v2088 = vadd.f32 0.0, %v2087
        %v2089 = vpop.f32.mrf.mxu0
        %2090 = vmatprep.mubr.bf16.mxu0 0
        %2091 = vmatmul.mubr.bf16.gmra.mxu0 %v2015
        %v2092 = vpop.f32.mrf.mxu0
        %v2093 = vadd.f32 0.0, %v2092
        %v2094 = vpop.f32.mrf.mxu0
        %v2095 = vpop.f32.mrf.mxu0
        %v2096 = vadd.f32 0.0, %v2095
        %v2097 = vpop.f32.mrf.mxu0
        %2098 = vmatprep.mubr.bf16.mxu0 0
        %2099 = vmatmul.mubr.bf16.gmra.mxu0 %v2018
        %v2100 = vpop.f32.mrf.mxu0
        %v2101 = vadd.f32 0.0, %v2100
        %v2102 = vpop.f32.mrf.mxu0
        %v2103 = vpop.f32.mrf.mxu0
        %v2104 = vadd.f32 0.0, %v2103
        %v2105 = vpop.f32.mrf.mxu0
        %2106 = vmatprep.mubr.bf16.mxu0 0
        %2107 = vmatmul.mubr.bf16.gmra.mxu0 %v2021
        %v2108 = vpop.f32.mrf.mxu0
        %v2109 = vadd.f32 0.0, %v2108
        %v2110 = vpop.f32.mrf.mxu0
        %v2111 = vpop.f32.mrf.mxu0
        %v2112 = vadd.f32 0.0, %v2111
        %v2113 = vpop.f32.mrf.mxu0
        %2114 = vmatprep.mubr.bf16.mxu0 0
        %2115 = vmatmul.mubr.bf16.gmra.mxu0 %v2024
        %v2116 = vpop.f32.mrf.mxu0
        %v2117 = vadd.f32 0.0, %v2116
        %v2118 = vpop.f32.mrf.mxu0
        %v2119 = vpop.f32.mrf.mxu0
        %v2120 = vadd.f32 0.0, %v2119
        %v2121 = vpop.f32.mrf.mxu0
        %2122 = vdwg.mxu0
        %v2123 = vadd.f32 %v1817, %v2061
        %v2124 = vadd.f32 %v1820, %v2064
        %v2125 = vadd.f32 %v1825, %v2069
        %v2126 = vadd.f32 %v1828, %v2072
        %v2127 = vadd.f32 %v1833, %v2077
        %v2128 = vadd.f32 %v1836, %v2080
        %v2129 = vadd.f32 %v1841, %v2085
        %v2130 = vadd.f32 %v1844, %v2088
        %v2131 = vadd.f32 %v1849, %v2093
        %v2132 = vadd.f32 %v1852, %v2096
        %v2133 = vadd.f32 %v1857, %v2101
        %v2134 = vadd.f32 %v1860, %v2104
        %v2135 = vadd.f32 %v1865, %v2109
        %v2136 = vadd.f32 %v1868, %v2112
        %v2137 = vadd.f32 %v1873, %v2117
        %v2138 = vadd.f32 %v1876, %v2120
        %s2139 = scalar_lea.vmem [#allocation2], 12
        %v2140 = vld [vmem:[%s2139] sm:$0xf]
        %v2141 = vld [vmem:[%s2139 + $0x4] sm:$0xf]
        %v2142 = vld [vmem:[%s2139 + $0xc] sm:$0xf]
        %v2143 = vld [vmem:[%s2139 + $0x10] sm:$0xf]
        %v2144 = vld [vmem:[%s2139 + $0x18] sm:$0xf]
        %v2145 = vld [vmem:[%s2139 + $0x1c] sm:$0xf]
        %v2146 = vld [vmem:[%s2139 + $0x24] sm:$0xf]
        %v2147 = vld [vmem:[%s2139 + $0x28] sm:$0xf]
        %v2148 = vld [vmem:[%s2139 + $0x30] sm:$0xf]
        %v2149 = vld [vmem:[%s2139 + $0x34] sm:$0xf]
        %v2150 = vld [vmem:[%s2139 + $0x3c] sm:$0xf]
        %v2151 = vld [vmem:[%s2139 + $0x40] sm:$0xf]
        %v2152 = vld [vmem:[%s2139 + $0x48] sm:$0xf]
        %v2153 = vld [vmem:[%s2139 + $0x4c] sm:$0xf]
        %v2154 = vld [vmem:[%s2139 + $0x54] sm:$0xf]
        %v2155 = vld [vmem:[%s2139 + $0x58] sm:$0xf]
        %v2156 = vld [vmem:[%s4 + $0x30] sm:$0xf]
        %v2157 = vld [vmem:[%s4 + $0x34] sm:$0xf]
        %v2158 = vld [vmem:[%s4 + $0x38] sm:$0xf]
        %v2159 = vld [vmem:[%s4 + $0x3c] sm:$0xf]
        %v2176 = vunpack.c.l.b16 %v2140
        %v2177 = vunpack.c.l.b16 %v2141
        %v2178 = vunpack.c.l.b16 %v2142
        %v2179 = vunpack.c.l.b16 %v2143
        %v2180 = vunpack.c.l.b16 %v2144
        %v2181 = vunpack.c.l.b16 %v2145
        %v2182 = vunpack.c.l.b16 %v2146
        %v2183 = vunpack.c.l.b16 %v2147
        %v2184 = vunpack.c.l.b16 %v2148
        %v2185 = vunpack.c.l.b16 %v2149
        %v2186 = vunpack.c.l.b16 %v2150
        %v2187 = vunpack.c.l.b16 %v2151
        %v2188 = vunpack.c.l.b16 %v2152
        %v2189 = vunpack.c.l.b16 %v2153
        %v2190 = vunpack.c.l.b16 %v2154
        %v2191 = vunpack.c.l.b16 %v2155
        %v2192 = vpack.c.b16 %v2177, %v2176
        %v2193 = vpack.c.b16 %v2179, %v2178
        %v2194 = vpack.c.b16 %v2181, %v2180
        %v2195 = vpack.c.b16 %v2183, %v2182
        %v2196 = vpack.c.b16 %v2185, %v2184
        %v2197 = vpack.c.b16 %v2187, %v2186
        %v2198 = vpack.c.b16 %v2189, %v2188
        %v2199 = vpack.c.b16 %v2191, %v2190
        %v2204 = vunpack.c.l.b16 %v2156
        %v2205 = vunpack.c.l.b16 %v2157
        %v2206 = vunpack.c.l.b16 %v2158
        %v2207 = vunpack.c.l.b16 %v2159
        %v2208 = vpack.c.b16 %v2205, %v2204
        %v2209 = vpack.c.b16 %v2207, %v2206
        %v2213 = vsel %vm1584, %v2192, 0
        %v2216 = vsel %vm1584, %v2193, 0
        %v2219 = vsel %vm1584, %v2194, 0
        %v2222 = vsel %vm1584, %v2195, 0
        %v2225 = vsel %vm1584, %v2196, 0
        %v2228 = vsel %vm1584, %v2197, 0
        %v2231 = vsel %vm1584, %v2198, 0
        %v2234 = vsel %vm1584, %v2199, 0
        %2236 = vmatprep.subr.bf16.mxu0 0
        %2237 = vmatpush1.bf16.msra.mxu0 0
        %2238 = vmatprep.subr.bf16.mxu0 0
        %2239 = vmatpush1.bf16.msra.mxu0 0
        %2240 = vmatprep.subr.bf16.mxu0 0
        %2241 = vmatpush1.bf16.msra.mxu0 0
        %2242 = vmatprep.subr.bf16.mxu0 0
        %2243 = vmatpush1.bf16.msra.mxu0 0
        %2244 = vmatprep.subr.bf16.mxu0 0
        %2245 = vmatpush1.bf16.msra.mxu0 0
        %2246 = vmatprep.subr.bf16.mxu0 0
        %2247 = vmatpush1.bf16.msra.mxu0 0
        %2248 = vmatprep.subr.bf16.mxu0 0
        %2249 = vmatpush1.bf16.msra.mxu0 %v2209
        %2250 = vmatprep.subr.bf16.mxu0 0
        %2251 = vmatpush1.bf16.msra.mxu0 %v2208
        %2252 = vmatprep.subr.bf16.mxu0 0
        %2253 = vmatpush2.bf16.msra.mxu0 0
        %2254 = vmatprep.subr.bf16.mxu0 0
        %2255 = vmatpush2.bf16.msra.mxu0 0
        %2256 = vmatprep.subr.bf16.mxu0 0
        %2257 = vmatpush2.bf16.msra.mxu0 0
        %2258 = vmatprep.subr.bf16.mxu0 0
        %2259 = vmatpush2.bf16.msra.mxu0 0
        %2260 = vmatprep.subr.bf16.mxu0 0
        %2261 = vmatpush2.bf16.msra.mxu0 0
        %2262 = vmatprep.subr.bf16.mxu0 0
        %2263 = vmatpush2.bf16.msra.mxu0 0
        %2264 = vmatprep.subr.bf16.mxu0 0
        %2265 = vmatpush2.bf16.msra.mxu0 0
        %2266 = vmatprep.subr.bf16.mxu0 0
        %2267 = vmatpush2.bf16.msra.mxu0 0
        %2268 = vmatprep.mubr.bf16.mxu0 0
        %2269 = vmatmul.mubr.bf16.gmra.mxu0 %v2213
        %v2270 = vpop.f32.mrf.mxu0
        %v2271 = vadd.f32 0.0, %v2270
        %v2272 = vpop.f32.mrf.mxu0
        %v2273 = vpop.f32.mrf.mxu0
        %v2274 = vadd.f32 0.0, %v2273
        %v2275 = vpop.f32.mrf.mxu0
        %2276 = vmatprep.mubr.bf16.mxu0 0
        %2277 = vmatmul.mubr.bf16.gmra.mxu0 %v2216
        %v2278 = vpop.f32.mrf.mxu0
        %v2279 = vadd.f32 0.0, %v2278
        %v2280 = vpop.f32.mrf.mxu0
        %v2281 = vpop.f32.mrf.mxu0
        %v2282 = vadd.f32 0.0, %v2281
        %v2283 = vpop.f32.mrf.mxu0
        %2284 = vmatprep.mubr.bf16.mxu0 0
        %2285 = vmatmul.mubr.bf16.gmra.mxu0 %v2219
        %v2286 = vpop.f32.mrf.mxu0
        %v2287 = vadd.f32 0.0, %v2286
        %v2288 = vpop.f32.mrf.mxu0
        %v2289 = vpop.f32.mrf.mxu0
        %v2290 = vadd.f32 0.0, %v2289
        %v2291 = vpop.f32.mrf.mxu0
        %2292 = vmatprep.mubr.bf16.mxu0 0
        %2293 = vmatmul.mubr.bf16.gmra.mxu0 %v2222
        %v2294 = vpop.f32.mrf.mxu0
        %v2295 = vadd.f32 0.0, %v2294
        %v2296 = vpop.f32.mrf.mxu0
        %v2297 = vpop.f32.mrf.mxu0
        %v2298 = vadd.f32 0.0, %v2297
        %v2299 = vpop.f32.mrf.mxu0
        %2300 = vmatprep.mubr.bf16.mxu0 0
        %2301 = vmatmul.mubr.bf16.gmra.mxu0 %v2225
        %v2302 = vpop.f32.mrf.mxu0
        %v2303 = vadd.f32 0.0, %v2302
        %v2304 = vpop.f32.mrf.mxu0
        %v2305 = vpop.f32.mrf.mxu0
        %v2306 = vadd.f32 0.0, %v2305
        %v2307 = vpop.f32.mrf.mxu0
        %2308 = vmatprep.mubr.bf16.mxu0 0
        %2309 = vmatmul.mubr.bf16.gmra.mxu0 %v2228
        %v2310 = vpop.f32.mrf.mxu0
        %v2311 = vadd.f32 0.0, %v2310
        %v2312 = vpop.f32.mrf.mxu0
        %v2313 = vpop.f32.mrf.mxu0
        %v2314 = vadd.f32 0.0, %v2313
        %v2315 = vpop.f32.mrf.mxu0
        %2316 = vmatprep.mubr.bf16.mxu0 0
        %2317 = vmatmul.mubr.bf16.gmra.mxu0 %v2231
        %v2318 = vpop.f32.mrf.mxu0
        %v2319 = vadd.f32 0.0, %v2318
        %v2320 = vpop.f32.mrf.mxu0
        %v2321 = vpop.f32.mrf.mxu0
        %v2322 = vadd.f32 0.0, %v2321
        %v2323 = vpop.f32.mrf.mxu0
        %2324 = vmatprep.mubr.bf16.mxu0 0
        %2325 = vmatmul.mubr.bf16.gmra.mxu0 %v2234
        %v2326 = vpop.f32.mrf.mxu0
        %v2327 = vadd.f32 0.0, %v2326
        %v2328 = vpop.f32.mrf.mxu0
        %v2329 = vpop.f32.mrf.mxu0
        %v2330 = vadd.f32 0.0, %v2329
        %v2331 = vpop.f32.mrf.mxu0
        %2332 = vdwg.mxu0
        %v2333 = vadd.f32 %v2123, %v2271
        %v2334 = vadd.f32 %v2124, %v2274
        %v2335 = vadd.f32 %v2125, %v2279
        %v2336 = vadd.f32 %v2126, %v2282
        %v2337 = vadd.f32 %v2127, %v2287
        %v2338 = vadd.f32 %v2128, %v2290
        %v2339 = vadd.f32 %v2129, %v2295
        %v2340 = vadd.f32 %v2130, %v2298
        %v2341 = vadd.f32 %v2131, %v2303
        %v2342 = vadd.f32 %v2132, %v2306
        %v2343 = vadd.f32 %v2133, %v2311
        %v2344 = vadd.f32 %v2134, %v2314
        %v2345 = vadd.f32 %v2135, %v2319
        %v2346 = vadd.f32 %v2136, %v2322
        %v2347 = vadd.f32 %v2137, %v2327
        %v2348 = vadd.f32 %v2138, %v2330
        %v2349 = vld [vmem:[%s2139] sm:$0xf]
        %v2350 = vld [vmem:[%s2139 + $0x4] sm:$0xf]
        %v2351 = vld [vmem:[%s2139 + $0x8] sm:$0x1]
        %v2352 = vld [vmem:[%s2139 + $0xc] sm:$0xf]
        %v2353 = vld [vmem:[%s2139 + $0x10] sm:$0xf]
        %v2354 = vld [vmem:[%s2139 + $0x14] sm:$0x1]
        %v2355 = vld [vmem:[%s2139 + $0x18] sm:$0xf]
        %v2356 = vld [vmem:[%s2139 + $0x1c] sm:$0xf]
        %v2357 = vld [vmem:[%s2139 + $0x20] sm:$0x1]
        %v2358 = vld [vmem:[%s2139 + $0x24] sm:$0xf]
        %v2359 = vld [vmem:[%s2139 + $0x28] sm:$0xf]
        %v2360 = vld [vmem:[%s2139 + $0x2c] sm:$0x1]
        %v2361 = vld [vmem:[%s2139 + $0x30] sm:$0xf]
        %v2362 = vld [vmem:[%s2139 + $0x34] sm:$0xf]
        %v2363 = vld [vmem:[%s2139 + $0x38] sm:$0x1]
        %v2364 = vld [vmem:[%s2139 + $0x3c] sm:$0xf]
        %v2365 = vld [vmem:[%s2139 + $0x40] sm:$0xf]
        %v2366 = vld [vmem:[%s2139 + $0x44] sm:$0x1]
        %v2367 = vld [vmem:[%s2139 + $0x48] sm:$0xf]
        %v2368 = vld [vmem:[%s2139 + $0x4c] sm:$0xf]
        %v2369 = vld [vmem:[%s2139 + $0x50] sm:$0x1]
        %v2370 = vld [vmem:[%s2139 + $0x54] sm:$0xf]
        %v2371 = vld [vmem:[%s2139 + $0x58] sm:$0xf]
        %v2372 = vld [vmem:[%s2139 + $0x5c] sm:$0x1]
        %v2374 = vshrl.u32 %v2349, 16
        %v2376 = vrot.slane %v2374, 4
        %v2377 = vshll.u32 %v2349, 16
        %v2379 = vrot.slane %v2377, 5
        %v2380 = vor.u32 %v2376, %v2379
        %v2381 = vrot.slane %v2380, 4
        %v2383 = vshll.u32 %v2350, 16
        %v2385 = vrot.slane %v2383, 5
        %v2386 = vsel %vm1351, %v2381, %v2385
        %v2387 = vshrl.u32 %v2350, 16
        %v2389 = vrot.slane %v2387, 4
        %v2390 = vor.u32 %v2389, %v2385
        %v2391 = vrot.slane %v2390, 4
        %v2393 = vshll.u32 %v2351, 16
        %v2395 = vrot.slane %v2393, 5
        %v2396 = vsel %vm1351, %v2391, %v2395
        %v2398 = vshrl.u32 %v2352, 16
        %v2400 = vrot.slane %v2398, 4
        %v2401 = vshll.u32 %v2352, 16
        %v2403 = vrot.slane %v2401, 5
        %v2404 = vor.u32 %v2400, %v2403
        %v2405 = vrot.slane %v2404, 4
        %v2407 = vshll.u32 %v2353, 16
        %v2409 = vrot.slane %v2407, 5
        %v2410 = vsel %vm1351, %v2405, %v2409
        %v2411 = vshrl.u32 %v2353, 16
        %v2413 = vrot.slane %v2411, 4
        %v2414 = vor.u32 %v2413, %v2409
        %v2415 = vrot.slane %v2414, 4
        %v2417 = vshll.u32 %v2354, 16
        %v2419 = vrot.slane %v2417, 5
        %v2420 = vsel %vm1351, %v2415, %v2419
        %v2422 = vshrl.u32 %v2355, 16
        %v2424 = vrot.slane %v2422, 4
        %v2425 = vshll.u32 %v2355, 16
        %v2427 = vrot.slane %v2425, 5
        %v2428 = vor.u32 %v2424, %v2427
        %v2429 = vrot.slane %v2428, 4
        %v2431 = vshll.u32 %v2356, 16
        %v2433 = vrot.slane %v2431, 5
        %v2434 = vsel %vm1351, %v2429, %v2433
        %v2435 = vshrl.u32 %v2356, 16
        %v2437 = vrot.slane %v2435, 4
        %v2438 = vor.u32 %v2437, %v2433
        %v2439 = vrot.slane %v2438, 4
        %v2441 = vshll.u32 %v2357, 16
        %v2443 = vrot.slane %v2441, 5
        %v2444 = vsel %vm1351, %v2439, %v2443
        %v2446 = vshrl.u32 %v2358, 16
        %v2448 = vrot.slane %v2446, 4
        %v2449 = vshll.u32 %v2358, 16
        %v2451 = vrot.slane %v2449, 5
        %v2452 = vor.u32 %v2448, %v2451
        %v2453 = vrot.slane %v2452, 4
        %v2455 = vshll.u32 %v2359, 16
        %v2457 = vrot.slane %v2455, 5
        %v2458 = vsel %vm1351, %v2453, %v2457
        %v2459 = vshrl.u32 %v2359, 16
        %v2461 = vrot.slane %v2459, 4
        %v2462 = vor.u32 %v2461, %v2457
        %v2463 = vrot.slane %v2462, 4
        %v2465 = vshll.u32 %v2360, 16
        %v2467 = vrot.slane %v2465, 5
        %v2468 = vsel %vm1351, %v2463, %v2467
        %v2470 = vshrl.u32 %v2361, 16
        %v2472 = vrot.slane %v2470, 4
        %v2473 = vshll.u32 %v2361, 16
        %v2475 = vrot.slane %v2473, 5
        %v2476 = vor.u32 %v2472, %v2475
        %v2477 = vrot.slane %v2476, 4
        %v2479 = vshll.u32 %v2362, 16
        %v2481 = vrot.slane %v2479, 5
        %v2482 = vsel %vm1351, %v2477, %v2481
        %v2483 = vshrl.u32 %v2362, 16
        %v2485 = vrot.slane %v2483, 4
        %v2486 = vor.u32 %v2485, %v2481
        %v2487 = vrot.slane %v2486, 4
        %v2489 = vshll.u32 %v2363, 16
        %v2491 = vrot.slane %v2489, 5
        %v2492 = vsel %vm1351, %v2487, %v2491
        %v2494 = vshrl.u32 %v2364, 16
        %v2496 = vrot.slane %v2494, 4
        %v2497 = vshll.u32 %v2364, 16
        %v2499 = vrot.slane %v2497, 5
        %v2500 = vor.u32 %v2496, %v2499
        %v2501 = vrot.slane %v2500, 4
        %v2503 = vshll.u32 %v2365, 16
        %v2505 = vrot.slane %v2503, 5
        %v2506 = vsel %vm1351, %v2501, %v2505
        %v2507 = vshrl.u32 %v2365, 16
        %v2509 = vrot.slane %v2507, 4
        %v2510 = vor.u32 %v2509, %v2505
        %v2511 = vrot.slane %v2510, 4
        %v2513 = vshll.u32 %v2366, 16
        %v2515 = vrot.slane %v2513, 5
        %v2516 = vsel %vm1351, %v2511, %v2515
        %v2518 = vshrl.u32 %v2367, 16
        %v2520 = vrot.slane %v2518, 4
        %v2521 = vshll.u32 %v2367, 16
        %v2523 = vrot.slane %v2521, 5
        %v2524 = vor.u32 %v2520, %v2523
        %v2525 = vrot.slane %v2524, 4
        %v2527 = vshll.u32 %v2368, 16
        %v2529 = vrot.slane %v2527, 5
        %v2530 = vsel %vm1351, %v2525, %v2529
        %v2531 = vshrl.u32 %v2368, 16
        %v2533 = vrot.slane %v2531, 4
        %v2534 = vor.u32 %v2533, %v2529
        %v2535 = vrot.slane %v2534, 4
        %v2537 = vshll.u32 %v2369, 16
        %v2539 = vrot.slane %v2537, 5
        %v2540 = vsel %vm1351, %v2535, %v2539
        %v2542 = vshrl.u32 %v2370, 16
        %v2544 = vrot.slane %v2542, 4
        %v2545 = vshll.u32 %v2370, 16
        %v2547 = vrot.slane %v2545, 5
        %v2548 = vor.u32 %v2544, %v2547
        %v2549 = vrot.slane %v2548, 4
        %v2551 = vshll.u32 %v2371, 16
        %v2553 = vrot.slane %v2551, 5
        %v2554 = vsel %vm1351, %v2549, %v2553
        %v2555 = vshrl.u32 %v2371, 16
        %v2557 = vrot.slane %v2555, 4
        %v2558 = vor.u32 %v2557, %v2553
        %v2559 = vrot.slane %v2558, 4
        %v2561 = vshll.u32 %v2372, 16
        %v2563 = vrot.slane %v2561, 5
        %v2564 = vsel %vm1351, %v2559, %v2563
        %v2565 = vld [vmem:[%s4 + $0x40] sm:$0xf]
        %v2566 = vld [vmem:[%s4 + $0x44] sm:$0xf]
        %v2567 = vld [vmem:[%s4 + $0x48] sm:$0xf]
        %v2568 = vld [vmem:[%s4 + $0x4c] sm:$0xf]
        %v2569 = vunpack.c.l.b16 %v2386
        %v2570 = vunpack.c.l.b16 %v2396
        %v2571 = vunpack.c.l.b16 %v2410
        %v2572 = vunpack.c.l.b16 %v2420
        %v2573 = vunpack.c.l.b16 %v2434
        %v2574 = vunpack.c.l.b16 %v2444
        %v2575 = vunpack.c.l.b16 %v2458
        %v2576 = vunpack.c.l.b16 %v2468
        %v2577 = vunpack.c.l.b16 %v2482
        %v2578 = vunpack.c.l.b16 %v2492
        %v2579 = vunpack.c.l.b16 %v2506
        %v2580 = vunpack.c.l.b16 %v2516
        %v2581 = vunpack.c.l.b16 %v2530
        %v2582 = vunpack.c.l.b16 %v2540
        %v2583 = vunpack.c.l.b16 %v2554
        %v2584 = vunpack.c.l.b16 %v2564
        %v2585 = vpack.c.b16 %v2570, %v2569
        %v2586 = vpack.c.b16 %v2572, %v2571
        %v2587 = vpack.c.b16 %v2574, %v2573
        %v2588 = vpack.c.b16 %v2576, %v2575
        %v2589 = vpack.c.b16 %v2578, %v2577
        %v2590 = vpack.c.b16 %v2580, %v2579
        %v2591 = vpack.c.b16 %v2582, %v2581
        %v2592 = vpack.c.b16 %v2584, %v2583
        %v2597 = vunpack.c.l.b16 %v2565
        %v2598 = vunpack.c.l.b16 %v2566
        %v2599 = vunpack.c.l.b16 %v2567
        %v2600 = vunpack.c.l.b16 %v2568
        %v2601 = vpack.c.b16 %v2598, %v2597
        %v2602 = vpack.c.b16 %v2600, %v2599
        %v2606 = vsel %vm1584, %v2585, 0
        %v2609 = vsel %vm1584, %v2586, 0
        %v2612 = vsel %vm1584, %v2587, 0
        %v2615 = vsel %vm1584, %v2588, 0
        %v2618 = vsel %vm1584, %v2589, 0
        %v2621 = vsel %vm1584, %v2590, 0
        %v2624 = vsel %vm1584, %v2591, 0
        %v2627 = vsel %vm1584, %v2592, 0
        %2629 = vmatprep.subr.bf16.mxu0 0
        %2630 = vmatpush1.bf16.msra.mxu0 0
        %2631 = vmatprep.subr.bf16.mxu0 0
        %2632 = vmatpush1.bf16.msra.mxu0 0
        %2633 = vmatprep.subr.bf16.mxu0 0
        %2634 = vmatpush1.bf16.msra.mxu0 0
        %2635 = vmatprep.subr.bf16.mxu0 0
        %2636 = vmatpush1.bf16.msra.mxu0 0
        %2637 = vmatprep.subr.bf16.mxu0 0
        %2638 = vmatpush1.bf16.msra.mxu0 0
        %2639 = vmatprep.subr.bf16.mxu0 0
        %2640 = vmatpush1.bf16.msra.mxu0 0
        %2641 = vmatprep.subr.bf16.mxu0 0
        %2642 = vmatpush1.bf16.msra.mxu0 %v2602
        %2643 = vmatprep.subr.bf16.mxu0 0
        %2644 = vmatpush1.bf16.msra.mxu0 %v2601
        %2645 = vmatprep.subr.bf16.mxu0 0
        %2646 = vmatpush2.bf16.msra.mxu0 0
        %2647 = vmatprep.subr.bf16.mxu0 0
        %2648 = vmatpush2.bf16.msra.mxu0 0
        %2649 = vmatprep.subr.bf16.mxu0 0
        %2650 = vmatpush2.bf16.msra.mxu0 0
        %2651 = vmatprep.subr.bf16.mxu0 0
        %2652 = vmatpush2.bf16.msra.mxu0 0
        %2653 = vmatprep.subr.bf16.mxu0 0
        %2654 = vmatpush2.bf16.msra.mxu0 0
        %2655 = vmatprep.subr.bf16.mxu0 0
        %2656 = vmatpush2.bf16.msra.mxu0 0
        %2657 = vmatprep.subr.bf16.mxu0 0
        %2658 = vmatpush2.bf16.msra.mxu0 0
        %2659 = vmatprep.subr.bf16.mxu0 0
        %2660 = vmatpush2.bf16.msra.mxu0 0
        %2661 = vmatprep.mubr.bf16.mxu0 0
        %2662 = vmatmul.mubr.bf16.gmra.mxu0 %v2606
        %v2663 = vpop.f32.mrf.mxu0
        %v2664 = vadd.f32 0.0, %v2663
        %v2665 = vpop.f32.mrf.mxu0
        %v2666 = vpop.f32.mrf.mxu0
        %v2667 = vadd.f32 0.0, %v2666
        %v2668 = vpop.f32.mrf.mxu0
        %2669 = vmatprep.mubr.bf16.mxu0 0
        %2670 = vmatmul.mubr.bf16.gmra.mxu0 %v2609
        %v2671 = vpop.f32.mrf.mxu0
        %v2672 = vadd.f32 0.0, %v2671
        %v2673 = vpop.f32.mrf.mxu0
        %v2674 = vpop.f32.mrf.mxu0
        %v2675 = vadd.f32 0.0, %v2674
        %v2676 = vpop.f32.mrf.mxu0
        %2677 = vmatprep.mubr.bf16.mxu0 0
        %2678 = vmatmul.mubr.bf16.gmra.mxu0 %v2612
        %v2679 = vpop.f32.mrf.mxu0
        %v2680 = vadd.f32 0.0, %v2679
        %v2681 = vpop.f32.mrf.mxu0
        %v2682 = vpop.f32.mrf.mxu0
        %v2683 = vadd.f32 0.0, %v2682
        %v2684 = vpop.f32.mrf.mxu0
        %2685 = vmatprep.mubr.bf16.mxu0 0
        %2686 = vmatmul.mubr.bf16.gmra.mxu0 %v2615
        %v2687 = vpop.f32.mrf.mxu0
        %v2688 = vadd.f32 0.0, %v2687
        %v2689 = vpop.f32.mrf.mxu0
        %v2690 = vpop.f32.mrf.mxu0
        %v2691 = vadd.f32 0.0, %v2690
        %v2692 = vpop.f32.mrf.mxu0
        %2693 = vmatprep.mubr.bf16.mxu0 0
        %2694 = vmatmul.mubr.bf16.gmra.mxu0 %v2618
        %v2695 = vpop.f32.mrf.mxu0
        %v2696 = vadd.f32 0.0, %v2695
        %v2697 = vpop.f32.mrf.mxu0
        %v2698 = vpop.f32.mrf.mxu0
        %v2699 = vadd.f32 0.0, %v2698
        %v2700 = vpop.f32.mrf.mxu0
        %2701 = vmatprep.mubr.bf16.mxu0 0
        %2702 = vmatmul.mubr.bf16.gmra.mxu0 %v2621
        %v2703 = vpop.f32.mrf.mxu0
        %v2704 = vadd.f32 0.0, %v2703
        %v2705 = vpop.f32.mrf.mxu0
        %v2706 = vpop.f32.mrf.mxu0
        %v2707 = vadd.f32 0.0, %v2706
        %v2708 = vpop.f32.mrf.mxu0
        %2709 = vmatprep.mubr.bf16.mxu0 0
        %2710 = vmatmul.mubr.bf16.gmra.mxu0 %v2624
        %v2711 = vpop.f32.mrf.mxu0
        %v2712 = vadd.f32 0.0, %v2711
        %v2713 = vpop.f32.mrf.mxu0
        %v2714 = vpop.f32.mrf.mxu0
        %v2715 = vadd.f32 0.0, %v2714
        %v2716 = vpop.f32.mrf.mxu0
        %2717 = vmatprep.mubr.bf16.mxu0 0
        %2718 = vmatmul.mubr.bf16.gmra.mxu0 %v2627
        %v2719 = vpop.f32.mrf.mxu0
        %v2720 = vadd.f32 0.0, %v2719
        %v2721 = vpop.f32.mrf.mxu0
        %v2722 = vpop.f32.mrf.mxu0
        %v2723 = vadd.f32 0.0, %v2722
        %v2724 = vpop.f32.mrf.mxu0
        %2725 = vdwg.mxu0
        %v2726 = vadd.f32 %v2333, %v2664
        %v2727 = vadd.f32 %v2334, %v2667
        %v2728 = vadd.f32 %v2335, %v2672
        %v2729 = vadd.f32 %v2336, %v2675
        %v2730 = vadd.f32 %v2337, %v2680
        %v2731 = vadd.f32 %v2338, %v2683
        %v2732 = vadd.f32 %v2339, %v2688
        %v2733 = vadd.f32 %v2340, %v2691
        %v2734 = vadd.f32 %v2341, %v2696
        %v2735 = vadd.f32 %v2342, %v2699
        %v2736 = vadd.f32 %v2343, %v2704
        %v2737 = vadd.f32 %v2344, %v2707
        %v2738 = vadd.f32 %v2345, %v2712
        %v2739 = vadd.f32 %v2346, %v2715
        %v2740 = vadd.f32 %v2347, %v2720
        %v2741 = vadd.f32 %v2348, %v2723
        %v2742 = vld [vmem:[%s2139] sm:$0xe]
        %v2743 = vld [vmem:[%s2139 + $0xc] sm:$0xe]
        %v2744 = vld [vmem:[%s2139 + $0x18] sm:$0xe]
        %v2745 = vld [vmem:[%s2139 + $0x24] sm:$0xe]
        %v2746 = vld [vmem:[%s2139 + $0x30] sm:$0xe]
        %v2747 = vld [vmem:[%s2139 + $0x3c] sm:$0xe]
        %v2748 = vld [vmem:[%s2139 + $0x48] sm:$0xe]
        %v2749 = vld [vmem:[%s2139 + $0x54] sm:$0xe]
        %v2774 = vrot.slane %v2742, 5
        %v2775 = vrot.slane %v2774, 4
        %v2776 = vrot.slane %v2350, 5
        %v2777 = vsel %vm1905, %v2775, %v2776
        %v2778 = vrot.slane %v2776, 4
        %v2779 = vrot.slane %v2351, 5
        %v2780 = vsel %vm1905, %v2778, %v2779
        %v2781 = vrot.slane %v2743, 5
        %v2782 = vrot.slane %v2781, 4
        %v2783 = vrot.slane %v2353, 5
        %v2784 = vsel %vm1905, %v2782, %v2783
        %v2785 = vrot.slane %v2783, 4
        %v2786 = vrot.slane %v2354, 5
        %v2787 = vsel %vm1905, %v2785, %v2786
        %v2788 = vrot.slane %v2744, 5
        %v2789 = vrot.slane %v2788, 4
        %v2790 = vrot.slane %v2356, 5
        %v2791 = vsel %vm1905, %v2789, %v2790
        %v2792 = vrot.slane %v2790, 4
        %v2793 = vrot.slane %v2357, 5
        %v2794 = vsel %vm1905, %v2792, %v2793
        %v2795 = vrot.slane %v2745, 5
        %v2796 = vrot.slane %v2795, 4
        %v2797 = vrot.slane %v2359, 5
        %v2798 = vsel %vm1905, %v2796, %v2797
        %v2799 = vrot.slane %v2797, 4
        %v2800 = vrot.slane %v2360, 5
        %v2801 = vsel %vm1905, %v2799, %v2800
        %v2802 = vrot.slane %v2746, 5
        %v2803 = vrot.slane %v2802, 4
        %v2804 = vrot.slane %v2362, 5
        %v2805 = vsel %vm1905, %v2803, %v2804
        %v2806 = vrot.slane %v2804, 4
        %v2807 = vrot.slane %v2363, 5
        %v2808 = vsel %vm1905, %v2806, %v2807
        %v2809 = vrot.slane %v2747, 5
        %v2810 = vrot.slane %v2809, 4
        %v2811 = vrot.slane %v2365, 5
        %v2812 = vsel %vm1905, %v2810, %v2811
        %v2813 = vrot.slane %v2811, 4
        %v2814 = vrot.slane %v2366, 5
        %v2815 = vsel %vm1905, %v2813, %v2814
        %v2816 = vrot.slane %v2748, 5
        %v2817 = vrot.slane %v2816, 4
        %v2818 = vrot.slane %v2368, 5
        %v2819 = vsel %vm1905, %v2817, %v2818
        %v2820 = vrot.slane %v2818, 4
        %v2821 = vrot.slane %v2369, 5
        %v2822 = vsel %vm1905, %v2820, %v2821
        %v2823 = vrot.slane %v2749, 5
        %v2824 = vrot.slane %v2823, 4
        %v2825 = vrot.slane %v2371, 5
        %v2826 = vsel %vm1905, %v2824, %v2825
        %v2827 = vrot.slane %v2825, 4
        %v2828 = vrot.slane %v2372, 5
        %v2829 = vsel %vm1905, %v2827, %v2828
        %v2830 = vld [vmem:[%s4 + $0x50] sm:$0xf]
        %v2831 = vld [vmem:[%s4 + $0x54] sm:$0xf]
        %v2832 = vld [vmem:[%s4 + $0x58] sm:$0xf]
        %v2833 = vld [vmem:[%s4 + $0x5c] sm:$0xf]
        %v2834 = vunpack.c.l.b16 %v2777
        %v2835 = vunpack.c.l.b16 %v2780
        %v2836 = vunpack.c.l.b16 %v2784
        %v2837 = vunpack.c.l.b16 %v2787
        %v2838 = vunpack.c.l.b16 %v2791
        %v2839 = vunpack.c.l.b16 %v2794
        %v2840 = vunpack.c.l.b16 %v2798
        %v2841 = vunpack.c.l.b16 %v2801
        %v2842 = vunpack.c.l.b16 %v2805
        %v2843 = vunpack.c.l.b16 %v2808
        %v2844 = vunpack.c.l.b16 %v2812
        %v2845 = vunpack.c.l.b16 %v2815
        %v2846 = vunpack.c.l.b16 %v2819
        %v2847 = vunpack.c.l.b16 %v2822
        %v2848 = vunpack.c.l.b16 %v2826
        %v2849 = vunpack.c.l.b16 %v2829
        %v2850 = vpack.c.b16 %v2835, %v2834
        %v2851 = vpack.c.b16 %v2837, %v2836
        %v2852 = vpack.c.b16 %v2839, %v2838
        %v2853 = vpack.c.b16 %v2841, %v2840
        %v2854 = vpack.c.b16 %v2843, %v2842
        %v2855 = vpack.c.b16 %v2845, %v2844
        %v2856 = vpack.c.b16 %v2847, %v2846
        %v2857 = vpack.c.b16 %v2849, %v2848
        %v2862 = vunpack.c.l.b16 %v2830
        %v2863 = vunpack.c.l.b16 %v2831
        %v2864 = vunpack.c.l.b16 %v2832
        %v2865 = vunpack.c.l.b16 %v2833
        %v2866 = vpack.c.b16 %v2863, %v2862
        %v2867 = vpack.c.b16 %v2865, %v2864
        %v2871 = vsel %vm1584, %v2850, 0
        %v2874 = vsel %vm1584, %v2851, 0
        %v2877 = vsel %vm1584, %v2852, 0
        %v2880 = vsel %vm1584, %v2853, 0
        %v2883 = vsel %vm1584, %v2854, 0
        %v2886 = vsel %vm1584, %v2855, 0
        %v2889 = vsel %vm1584, %v2856, 0
        %v2892 = vsel %vm1584, %v2857, 0
        %2894 = vmatprep.subr.bf16.mxu0 0
        %2895 = vmatpush1.bf16.msra.mxu0 0
        %2896 = vmatprep.subr.bf16.mxu0 0
        %2897 = vmatpush1.bf16.msra.mxu0 0
        %2898 = vmatprep.subr.bf16.mxu0 0
        %2899 = vmatpush1.bf16.msra.mxu0 0
        %2900 = vmatprep.subr.bf16.mxu0 0
        %2901 = vmatpush1.bf16.msra.mxu0 0
        %2902 = vmatprep.subr.bf16.mxu0 0
        %2903 = vmatpush1.bf16.msra.mxu0 0
        %2904 = vmatprep.subr.bf16.mxu0 0
        %2905 = vmatpush1.bf16.msra.mxu0 0
        %2906 = vmatprep.subr.bf16.mxu0 0
        %2907 = vmatpush1.bf16.msra.mxu0 %v2867
        %2908 = vmatprep.subr.bf16.mxu0 0
        %2909 = vmatpush1.bf16.msra.mxu0 %v2866
        %2910 = vmatprep.subr.bf16.mxu0 0
        %2911 = vmatpush2.bf16.msra.mxu0 0
        %2912 = vmatprep.subr.bf16.mxu0 0
        %2913 = vmatpush2.bf16.msra.mxu0 0
        %2914 = vmatprep.subr.bf16.mxu0 0
        %2915 = vmatpush2.bf16.msra.mxu0 0
        %2916 = vmatprep.subr.bf16.mxu0 0
        %2917 = vmatpush2.bf16.msra.mxu0 0
        %2918 = vmatprep.subr.bf16.mxu0 0
        %2919 = vmatpush2.bf16.msra.mxu0 0
        %2920 = vmatprep.subr.bf16.mxu0 0
        %2921 = vmatpush2.bf16.msra.mxu0 0
        %2922 = vmatprep.subr.bf16.mxu0 0
        %2923 = vmatpush2.bf16.msra.mxu0 0
        %2924 = vmatprep.subr.bf16.mxu0 0
        %2925 = vmatpush2.bf16.msra.mxu0 0
        %2926 = vmatprep.mubr.bf16.mxu0 0
        %2927 = vmatmul.mubr.bf16.gmra.mxu0 %v2871
        %v2928 = vpop.f32.mrf.mxu0
        %v2929 = vadd.f32 0.0, %v2928
        %v2930 = vpop.f32.mrf.mxu0
        %v2931 = vpop.f32.mrf.mxu0
        %v2932 = vadd.f32 0.0, %v2931
        %v2933 = vpop.f32.mrf.mxu0
        %2934 = vmatprep.mubr.bf16.mxu0 0
        %2935 = vmatmul.mubr.bf16.gmra.mxu0 %v2874
        %v2936 = vpop.f32.mrf.mxu0
        %v2937 = vadd.f32 0.0, %v2936
        %v2938 = vpop.f32.mrf.mxu0
        %v2939 = vpop.f32.mrf.mxu0
        %v2940 = vadd.f32 0.0, %v2939
        %v2941 = vpop.f32.mrf.mxu0
        %2942 = vmatprep.mubr.bf16.mxu0 0
        %2943 = vmatmul.mubr.bf16.gmra.mxu0 %v2877
        %v2944 = vpop.f32.mrf.mxu0
        %v2945 = vadd.f32 0.0, %v2944
        %v2946 = vpop.f32.mrf.mxu0
        %v2947 = vpop.f32.mrf.mxu0
        %v2948 = vadd.f32 0.0, %v2947
        %v2949 = vpop.f32.mrf.mxu0
        %2950 = vmatprep.mubr.bf16.mxu0 0
        %2951 = vmatmul.mubr.bf16.gmra.mxu0 %v2880
        %v2952 = vpop.f32.mrf.mxu0
        %v2953 = vadd.f32 0.0, %v2952
        %v2954 = vpop.f32.mrf.mxu0
        %v2955 = vpop.f32.mrf.mxu0
        %v2956 = vadd.f32 0.0, %v2955
        %v2957 = vpop.f32.mrf.mxu0
        %2958 = vmatprep.mubr.bf16.mxu0 0
        %2959 = vmatmul.mubr.bf16.gmra.mxu0 %v2883
        %v2960 = vpop.f32.mrf.mxu0
        %v2961 = vadd.f32 0.0, %v2960
        %v2962 = vpop.f32.mrf.mxu0
        %v2963 = vpop.f32.mrf.mxu0
        %v2964 = vadd.f32 0.0, %v2963
        %v2965 = vpop.f32.mrf.mxu0
        %2966 = vmatprep.mubr.bf16.mxu0 0
        %2967 = vmatmul.mubr.bf16.gmra.mxu0 %v2886
        %v2968 = vpop.f32.mrf.mxu0
        %v2969 = vadd.f32 0.0, %v2968
        %v2970 = vpop.f32.mrf.mxu0
        %v2971 = vpop.f32.mrf.mxu0
        %v2972 = vadd.f32 0.0, %v2971
        %v2973 = vpop.f32.mrf.mxu0
        %2974 = vmatprep.mubr.bf16.mxu0 0
        %2975 = vmatmul.mubr.bf16.gmra.mxu0 %v2889
        %v2976 = vpop.f32.mrf.mxu0
        %v2977 = vadd.f32 0.0, %v2976
        %v2978 = vpop.f32.mrf.mxu0
        %v2979 = vpop.f32.mrf.mxu0
        %v2980 = vadd.f32 0.0, %v2979
        %v2981 = vpop.f32.mrf.mxu0
        %2982 = vmatprep.mubr.bf16.mxu0 0
        %2983 = vmatmul.mubr.bf16.gmra.mxu0 %v2892
        %v2984 = vpop.f32.mrf.mxu0
        %v2985 = vadd.f32 0.0, %v2984
        %v2986 = vpop.f32.mrf.mxu0
        %v2987 = vpop.f32.mrf.mxu0
        %v2988 = vadd.f32 0.0, %v2987
        %v2989 = vpop.f32.mrf.mxu0
        %2990 = vdwg.mxu0
        %v2991 = vadd.f32 %v2726, %v2929
        %v2992 = vadd.f32 %v2727, %v2932
        %v2993 = vadd.f32 %v2728, %v2937
        %v2994 = vadd.f32 %v2729, %v2940
        %v2995 = vadd.f32 %v2730, %v2945
        %v2996 = vadd.f32 %v2731, %v2948
        %v2997 = vadd.f32 %v2732, %v2953
        %v2998 = vadd.f32 %v2733, %v2956
        %v2999 = vadd.f32 %v2734, %v2961
        %v3000 = vadd.f32 %v2735, %v2964
        %v3001 = vadd.f32 %v2736, %v2969
        %v3002 = vadd.f32 %v2737, %v2972
        %v3003 = vadd.f32 %v2738, %v2977
        %v3004 = vadd.f32 %v2739, %v2980
        %v3005 = vadd.f32 %v2740, %v2985
        %v3006 = vadd.f32 %v2741, %v2988
        %s3007 = scalar_lea.vmem [#allocation2], 24
        %v3008 = vld [vmem:[%s3007] sm:$0xf]
        %v3009 = vld [vmem:[%s3007 + $0x4] sm:$0xf]
        %v3010 = vld [vmem:[%s3007 + $0xc] sm:$0xf]
        %v3011 = vld [vmem:[%s3007 + $0x10] sm:$0xf]
        %v3012 = vld [vmem:[%s3007 + $0x18] sm:$0xf]
        %v3013 = vld [vmem:[%s3007 + $0x1c] sm:$0xf]
        %v3014 = vld [vmem:[%s3007 + $0x24] sm:$0xf]
        %v3015 = vld [vmem:[%s3007 + $0x28] sm:$0xf]
        %v3016 = vld [vmem:[%s3007 + $0x30] sm:$0xf]
        %v3017 = vld [vmem:[%s3007 + $0x34] sm:$0xf]
        %v3018 = vld [vmem:[%s3007 + $0x3c] sm:$0xf]
        %v3019 = vld [vmem:[%s3007 + $0x40] sm:$0xf]
        %v3020 = vld [vmem:[%s3007 + $0x48] sm:$0xf]
        %v3021 = vld [vmem:[%s3007 + $0x4c] sm:$0xf]
        %v3022 = vld [vmem:[%s3007 + $0x54] sm:$0xf]
        %v3023 = vld [vmem:[%s3007 + $0x58] sm:$0xf]
        %v3024 = vld [vmem:[%s4 + $0x60] sm:$0xf]
        %v3025 = vld [vmem:[%s4 + $0x64] sm:$0xf]
        %v3026 = vld [vmem:[%s4 + $0x68] sm:$0xf]
        %v3027 = vld [vmem:[%s4 + $0x6c] sm:$0xf]
        %v3044 = vunpack.c.l.b16 %v3008
        %v3045 = vunpack.c.l.b16 %v3009
        %v3046 = vunpack.c.l.b16 %v3010
        %v3047 = vunpack.c.l.b16 %v3011
        %v3048 = vunpack.c.l.b16 %v3012
        %v3049 = vunpack.c.l.b16 %v3013
        %v3050 = vunpack.c.l.b16 %v3014
        %v3051 = vunpack.c.l.b16 %v3015
        %v3052 = vunpack.c.l.b16 %v3016
        %v3053 = vunpack.c.l.b16 %v3017
        %v3054 = vunpack.c.l.b16 %v3018
        %v3055 = vunpack.c.l.b16 %v3019
        %v3056 = vunpack.c.l.b16 %v3020
        %v3057 = vunpack.c.l.b16 %v3021
        %v3058 = vunpack.c.l.b16 %v3022
        %v3059 = vunpack.c.l.b16 %v3023
        %v3060 = vpack.c.b16 %v3045, %v3044
        %v3061 = vpack.c.b16 %v3047, %v3046
        %v3062 = vpack.c.b16 %v3049, %v3048
        %v3063 = vpack.c.b16 %v3051, %v3050
        %v3064 = vpack.c.b16 %v3053, %v3052
        %v3065 = vpack.c.b16 %v3055, %v3054
        %v3066 = vpack.c.b16 %v3057, %v3056
        %v3067 = vpack.c.b16 %v3059, %v3058
        %v3072 = vunpack.c.l.b16 %v3024
        %v3073 = vunpack.c.l.b16 %v3025
        %v3074 = vunpack.c.l.b16 %v3026
        %v3075 = vunpack.c.l.b16 %v3027
        %v3076 = vpack.c.b16 %v3073, %v3072
        %v3077 = vpack.c.b16 %v3075, %v3074
        %v3081 = vsel %vm1584, %v3060, 0
        %v3084 = vsel %vm1584, %v3061, 0
        %v3087 = vsel %vm1584, %v3062, 0
        %v3090 = vsel %vm1584, %v3063, 0
        %v3093 = vsel %vm1584, %v3064, 0
        %v3096 = vsel %vm1584, %v3065, 0
        %v3099 = vsel %vm1584, %v3066, 0
        %v3102 = vsel %vm1584, %v3067, 0
        %3104 = vmatprep.subr.bf16.mxu0 0
        %3105 = vmatpush1.bf16.msra.mxu0 0
        %3106 = vmatprep.subr.bf16.mxu0 0
        %3107 = vmatpush1.bf16.msra.mxu0 0
        %3108 = vmatprep.subr.bf16.mxu0 0
        %3109 = vmatpush1.bf16.msra.mxu0 0
        %3110 = vmatprep.subr.bf16.mxu0 0
        %3111 = vmatpush1.bf16.msra.mxu0 0
        %3112 = vmatprep.subr.bf16.mxu0 0
        %3113 = vmatpush1.bf16.msra.mxu0 0
        %3114 = vmatprep.subr.bf16.mxu0 0
        %3115 = vmatpush1.bf16.msra.mxu0 0
        %3116 = vmatprep.subr.bf16.mxu0 0
        %3117 = vmatpush1.bf16.msra.mxu0 %v3077
        %3118 = vmatprep.subr.bf16.mxu0 0
        %3119 = vmatpush1.bf16.msra.mxu0 %v3076
        %3120 = vmatprep.subr.bf16.mxu0 0
        %3121 = vmatpush2.bf16.msra.mxu0 0
        %3122 = vmatprep.subr.bf16.mxu0 0
        %3123 = vmatpush2.bf16.msra.mxu0 0
        %3124 = vmatprep.subr.bf16.mxu0 0
        %3125 = vmatpush2.bf16.msra.mxu0 0
        %3126 = vmatprep.subr.bf16.mxu0 0
        %3127 = vmatpush2.bf16.msra.mxu0 0
        %3128 = vmatprep.subr.bf16.mxu0 0
        %3129 = vmatpush2.bf16.msra.mxu0 0
        %3130 = vmatprep.subr.bf16.mxu0 0
        %3131 = vmatpush2.bf16.msra.mxu0 0
        %3132 = vmatprep.subr.bf16.mxu0 0
        %3133 = vmatpush2.bf16.msra.mxu0 0
        %3134 = vmatprep.subr.bf16.mxu0 0
        %3135 = vmatpush2.bf16.msra.mxu0 0
        %3136 = vmatprep.mubr.bf16.mxu0 0
        %3137 = vmatmul.mubr.bf16.gmra.mxu0 %v3081
        %v3138 = vpop.f32.mrf.mxu0
        %v3139 = vadd.f32 0.0, %v3138
        %v3140 = vpop.f32.mrf.mxu0
        %v3141 = vpop.f32.mrf.mxu0
        %v3142 = vadd.f32 0.0, %v3141
        %v3143 = vpop.f32.mrf.mxu0
        %3144 = vmatprep.mubr.bf16.mxu0 0
        %3145 = vmatmul.mubr.bf16.gmra.mxu0 %v3084
        %v3146 = vpop.f32.mrf.mxu0
        %v3147 = vadd.f32 0.0, %v3146
        %v3148 = vpop.f32.mrf.mxu0
        %v3149 = vpop.f32.mrf.mxu0
        %v3150 = vadd.f32 0.0, %v3149
        %v3151 = vpop.f32.mrf.mxu0
        %3152 = vmatprep.mubr.bf16.mxu0 0
        %3153 = vmatmul.mubr.bf16.gmra.mxu0 %v3087
        %v3154 = vpop.f32.mrf.mxu0
        %v3155 = vadd.f32 0.0, %v3154
        %v3156 = vpop.f32.mrf.mxu0
        %v3157 = vpop.f32.mrf.mxu0
        %v3158 = vadd.f32 0.0, %v3157
        %v3159 = vpop.f32.mrf.mxu0
        %3160 = vmatprep.mubr.bf16.mxu0 0
        %3161 = vmatmul.mubr.bf16.gmra.mxu0 %v3090
        %v3162 = vpop.f32.mrf.mxu0
        %v3163 = vadd.f32 0.0, %v3162
        %v3164 = vpop.f32.mrf.mxu0
        %v3165 = vpop.f32.mrf.mxu0
        %v3166 = vadd.f32 0.0, %v3165
        %v3167 = vpop.f32.mrf.mxu0
        %3168 = vmatprep.mubr.bf16.mxu0 0
        %3169 = vmatmul.mubr.bf16.gmra.mxu0 %v3093
        %v3170 = vpop.f32.mrf.mxu0
        %v3171 = vadd.f32 0.0, %v3170
        %v3172 = vpop.f32.mrf.mxu0
        %v3173 = vpop.f32.mrf.mxu0
        %v3174 = vadd.f32 0.0, %v3173
        %v3175 = vpop.f32.mrf.mxu0
        %3176 = vmatprep.mubr.bf16.mxu0 0
        %3177 = vmatmul.mubr.bf16.gmra.mxu0 %v3096
        %v3178 = vpop.f32.mrf.mxu0
        %v3179 = vadd.f32 0.0, %v3178
        %v3180 = vpop.f32.mrf.mxu0
        %v3181 = vpop.f32.mrf.mxu0
        %v3182 = vadd.f32 0.0, %v3181
        %v3183 = vpop.f32.mrf.mxu0
        %3184 = vmatprep.mubr.bf16.mxu0 0
        %3185 = vmatmul.mubr.bf16.gmra.mxu0 %v3099
        %v3186 = vpop.f32.mrf.mxu0
        %v3187 = vadd.f32 0.0, %v3186
        %v3188 = vpop.f32.mrf.mxu0
        %v3189 = vpop.f32.mrf.mxu0
        %v3190 = vadd.f32 0.0, %v3189
        %v3191 = vpop.f32.mrf.mxu0
        %3192 = vmatprep.mubr.bf16.mxu0 0
        %3193 = vmatmul.mubr.bf16.gmra.mxu0 %v3102
        %v3194 = vpop.f32.mrf.mxu0
        %v3195 = vadd.f32 0.0, %v3194
        %v3196 = vpop.f32.mrf.mxu0
        %v3197 = vpop.f32.mrf.mxu0
        %v3198 = vadd.f32 0.0, %v3197
        %v3199 = vpop.f32.mrf.mxu0
        %3200 = vdwg.mxu0
        %v3201 = vadd.f32 %v2991, %v3139
        %v3202 = vadd.f32 %v2992, %v3142
        %v3203 = vadd.f32 %v2993, %v3147
        %v3204 = vadd.f32 %v2994, %v3150
        %v3205 = vadd.f32 %v2995, %v3155
        %v3206 = vadd.f32 %v2996, %v3158
        %v3207 = vadd.f32 %v2997, %v3163
        %v3208 = vadd.f32 %v2998, %v3166
        %v3209 = vadd.f32 %v2999, %v3171
        %v3210 = vadd.f32 %v3000, %v3174
        %v3211 = vadd.f32 %v3001, %v3179
        %v3212 = vadd.f32 %v3002, %v3182
        %v3213 = vadd.f32 %v3003, %v3187
        %v3214 = vadd.f32 %v3004, %v3190
        %v3215 = vadd.f32 %v3005, %v3195
        %v3216 = vadd.f32 %v3006, %v3198
        %v3217 = vld [vmem:[%s3007] sm:$0xf]
        %v3218 = vld [vmem:[%s3007 + $0x4] sm:$0xf]
        %v3219 = vld [vmem:[%s3007 + $0x8] sm:$0x1]
        %v3220 = vld [vmem:[%s3007 + $0xc] sm:$0xf]
        %v3221 = vld [vmem:[%s3007 + $0x10] sm:$0xf]
        %v3222 = vld [vmem:[%s3007 + $0x14] sm:$0x1]
        %v3223 = vld [vmem:[%s3007 + $0x18] sm:$0xf]
        %v3224 = vld [vmem:[%s3007 + $0x1c] sm:$0xf]
        %v3225 = vld [vmem:[%s3007 + $0x20] sm:$0x1]
        %v3226 = vld [vmem:[%s3007 + $0x24] sm:$0xf]
        %v3227 = vld [vmem:[%s3007 + $0x28] sm:$0xf]
        %v3228 = vld [vmem:[%s3007 + $0x2c] sm:$0x1]
        %v3229 = vld [vmem:[%s3007 + $0x30] sm:$0xf]
        %v3230 = vld [vmem:[%s3007 + $0x34] sm:$0xf]
        %v3231 = vld [vmem:[%s3007 + $0x38] sm:$0x1]
        %v3232 = vld [vmem:[%s3007 + $0x3c] sm:$0xf]
        %v3233 = vld [vmem:[%s3007 + $0x40] sm:$0xf]
        %v3234 = vld [vmem:[%s3007 + $0x44] sm:$0x1]
        %v3235 = vld [vmem:[%s3007 + $0x48] sm:$0xf]
        %v3236 = vld [vmem:[%s3007 + $0x4c] sm:$0xf]
        %v3237 = vld [vmem:[%s3007 + $0x50] sm:$0x1]
        %v3238 = vld [vmem:[%s3007 + $0x54] sm:$0xf]
        %v3239 = vld [vmem:[%s3007 + $0x58] sm:$0xf]
        %v3240 = vld [vmem:[%s3007 + $0x5c] sm:$0x1]
        %v3242 = vshrl.u32 %v3217, 16
        %v3244 = vrot.slane %v3242, 4
        %v3245 = vshll.u32 %v3217, 16
        %v3247 = vrot.slane %v3245, 5
        %v3248 = vor.u32 %v3244, %v3247
        %v3249 = vrot.slane %v3248, 4
        %v3251 = vshll.u32 %v3218, 16
        %v3253 = vrot.slane %v3251, 5
        %v3254 = vsel %vm1351, %v3249, %v3253
        %v3255 = vshrl.u32 %v3218, 16
        %v3257 = vrot.slane %v3255, 4
        %v3258 = vor.u32 %v3257, %v3253
        %v3259 = vrot.slane %v3258, 4
        %v3261 = vshll.u32 %v3219, 16
        %v3263 = vrot.slane %v3261, 5
        %v3264 = vsel %vm1351, %v3259, %v3263
        %v3266 = vshrl.u32 %v3220, 16
        %v3268 = vrot.slane %v3266, 4
        %v3269 = vshll.u32 %v3220, 16
        %v3271 = vrot.slane %v3269, 5
        %v3272 = vor.u32 %v3268, %v3271
        %v3273 = vrot.slane %v3272, 4
        %v3275 = vshll.u32 %v3221, 16
        %v3277 = vrot.slane %v3275, 5
        %v3278 = vsel %vm1351, %v3273, %v3277
        %v3279 = vshrl.u32 %v3221, 16
        %v3281 = vrot.slane %v3279, 4
        %v3282 = vor.u32 %v3281, %v3277
        %v3283 = vrot.slane %v3282, 4
        %v3285 = vshll.u32 %v3222, 16
        %v3287 = vrot.slane %v3285, 5
        %v3288 = vsel %vm1351, %v3283, %v3287
        %v3290 = vshrl.u32 %v3223, 16
        %v3292 = vrot.slane %v3290, 4
        %v3293 = vshll.u32 %v3223, 16
        %v3295 = vrot.slane %v3293, 5
        %v3296 = vor.u32 %v3292, %v3295
        %v3297 = vrot.slane %v3296, 4
        %v3299 = vshll.u32 %v3224, 16
        %v3301 = vrot.slane %v3299, 5
        %v3302 = vsel %vm1351, %v3297, %v3301
        %v3303 = vshrl.u32 %v3224, 16
        %v3305 = vrot.slane %v3303, 4
        %v3306 = vor.u32 %v3305, %v3301
        %v3307 = vrot.slane %v3306, 4
        %v3309 = vshll.u32 %v3225, 16
        %v3311 = vrot.slane %v3309, 5
        %v3312 = vsel %vm1351, %v3307, %v3311
        %v3314 = vshrl.u32 %v3226, 16
        %v3316 = vrot.slane %v3314, 4
        %v3317 = vshll.u32 %v3226, 16
        %v3319 = vrot.slane %v3317, 5
        %v3320 = vor.u32 %v3316, %v3319
        %v3321 = vrot.slane %v3320, 4
        %v3323 = vshll.u32 %v3227, 16
        %v3325 = vrot.slane %v3323, 5
        %v3326 = vsel %vm1351, %v3321, %v3325
        %v3327 = vshrl.u32 %v3227, 16
        %v3329 = vrot.slane %v3327, 4
        %v3330 = vor.u32 %v3329, %v3325
        %v3331 = vrot.slane %v3330, 4
        %v3333 = vshll.u32 %v3228, 16
        %v3335 = vrot.slane %v3333, 5
        %v3336 = vsel %vm1351, %v3331, %v3335
        %v3338 = vshrl.u32 %v3229, 16
        %v3340 = vrot.slane %v3338, 4
        %v3341 = vshll.u32 %v3229, 16
        %v3343 = vrot.slane %v3341, 5
        %v3344 = vor.u32 %v3340, %v3343
        %v3345 = vrot.slane %v3344, 4
        %v3347 = vshll.u32 %v3230, 16
        %v3349 = vrot.slane %v3347, 5
        %v3350 = vsel %vm1351, %v3345, %v3349
        %v3351 = vshrl.u32 %v3230, 16
        %v3353 = vrot.slane %v3351, 4
        %v3354 = vor.u32 %v3353, %v3349
        %v3355 = vrot.slane %v3354, 4
        %v3357 = vshll.u32 %v3231, 16
        %v3359 = vrot.slane %v3357, 5
        %v3360 = vsel %vm1351, %v3355, %v3359
        %v3362 = vshrl.u32 %v3232, 16
        %v3364 = vrot.slane %v3362, 4
        %v3365 = vshll.u32 %v3232, 16
        %v3367 = vrot.slane %v3365, 5
        %v3368 = vor.u32 %v3364, %v3367
        %v3369 = vrot.slane %v3368, 4
        %v3371 = vshll.u32 %v3233, 16
        %v3373 = vrot.slane %v3371, 5
        %v3374 = vsel %vm1351, %v3369, %v3373
        %v3375 = vshrl.u32 %v3233, 16
        %v3377 = vrot.slane %v3375, 4
        %v3378 = vor.u32 %v3377, %v3373
        %v3379 = vrot.slane %v3378, 4
        %v3381 = vshll.u32 %v3234, 16
        %v3383 = vrot.slane %v3381, 5
        %v3384 = vsel %vm1351, %v3379, %v3383
        %v3386 = vshrl.u32 %v3235, 16
        %v3388 = vrot.slane %v3386, 4
        %v3389 = vshll.u32 %v3235, 16
        %v3391 = vrot.slane %v3389, 5
        %v3392 = vor.u32 %v3388, %v3391
        %v3393 = vrot.slane %v3392, 4
        %v3395 = vshll.u32 %v3236, 16
        %v3397 = vrot.slane %v3395, 5
        %v3398 = vsel %vm1351, %v3393, %v3397
        %v3399 = vshrl.u32 %v3236, 16
        %v3401 = vrot.slane %v3399, 4
        %v3402 = vor.u32 %v3401, %v3397
        %v3403 = vrot.slane %v3402, 4
        %v3405 = vshll.u32 %v3237, 16
        %v3407 = vrot.slane %v3405, 5
        %v3408 = vsel %vm1351, %v3403, %v3407
        %v3410 = vshrl.u32 %v3238, 16
        %v3412 = vrot.slane %v3410, 4
        %v3413 = vshll.u32 %v3238, 16
        %v3415 = vrot.slane %v3413, 5
        %v3416 = vor.u32 %v3412, %v3415
        %v3417 = vrot.slane %v3416, 4
        %v3419 = vshll.u32 %v3239, 16
        %v3421 = vrot.slane %v3419, 5
        %v3422 = vsel %vm1351, %v3417, %v3421
        %v3423 = vshrl.u32 %v3239, 16
        %v3425 = vrot.slane %v3423, 4
        %v3426 = vor.u32 %v3425, %v3421
        %v3427 = vrot.slane %v3426, 4
        %v3429 = vshll.u32 %v3240, 16
        %v3431 = vrot.slane %v3429, 5
        %v3432 = vsel %vm1351, %v3427, %v3431
        %v3433 = vld [vmem:[%s4 + $0x70] sm:$0xf]
        %v3434 = vld [vmem:[%s4 + $0x74] sm:$0xf]
        %v3435 = vld [vmem:[%s4 + $0x78] sm:$0xf]
        %v3436 = vld [vmem:[%s4 + $0x7c] sm:$0xf]
        %v3437 = vunpack.c.l.b16 %v3254
        %v3438 = vunpack.c.l.b16 %v3264
        %v3439 = vunpack.c.l.b16 %v3278
        %v3440 = vunpack.c.l.b16 %v3288
        %v3441 = vunpack.c.l.b16 %v3302
        %v3442 = vunpack.c.l.b16 %v3312
        %v3443 = vunpack.c.l.b16 %v3326
        %v3444 = vunpack.c.l.b16 %v3336
        %v3445 = vunpack.c.l.b16 %v3350
        %v3446 = vunpack.c.l.b16 %v3360
        %v3447 = vunpack.c.l.b16 %v3374
        %v3448 = vunpack.c.l.b16 %v3384
        %v3449 = vunpack.c.l.b16 %v3398
        %v3450 = vunpack.c.l.b16 %v3408
        %v3451 = vunpack.c.l.b16 %v3422
        %v3452 = vunpack.c.l.b16 %v3432
        %v3453 = vpack.c.b16 %v3438, %v3437
        %v3454 = vpack.c.b16 %v3440, %v3439
        %v3455 = vpack.c.b16 %v3442, %v3441
        %v3456 = vpack.c.b16 %v3444, %v3443
        %v3457 = vpack.c.b16 %v3446, %v3445
        %v3458 = vpack.c.b16 %v3448, %v3447
        %v3459 = vpack.c.b16 %v3450, %v3449
        %v3460 = vpack.c.b16 %v3452, %v3451
        %v3465 = vunpack.c.l.b16 %v3433
        %v3466 = vunpack.c.l.b16 %v3434
        %v3467 = vunpack.c.l.b16 %v3435
        %v3468 = vunpack.c.l.b16 %v3436
        %v3469 = vpack.c.b16 %v3466, %v3465
        %v3470 = vpack.c.b16 %v3468, %v3467
        %v3474 = vsel %vm1584, %v3453, 0
        %v3477 = vsel %vm1584, %v3454, 0
        %v3480 = vsel %vm1584, %v3455, 0
        %v3483 = vsel %vm1584, %v3456, 0
        %v3486 = vsel %vm1584, %v3457, 0
        %v3489 = vsel %vm1584, %v3458, 0
        %v3492 = vsel %vm1584, %v3459, 0
        %v3495 = vsel %vm1584, %v3460, 0
        %3497 = vmatprep.subr.bf16.mxu0 0
        %3498 = vmatpush1.bf16.msra.mxu0 0
        %3499 = vmatprep.subr.bf16.mxu0 0
        %3500 = vmatpush1.bf16.msra.mxu0 0
        %3501 = vmatprep.subr.bf16.mxu0 0
        %3502 = vmatpush1.bf16.msra.mxu0 0
        %3503 = vmatprep.subr.bf16.mxu0 0
        %3504 = vmatpush1.bf16.msra.mxu0 0
        %3505 = vmatprep.subr.bf16.mxu0 0
        %3506 = vmatpush1.bf16.msra.mxu0 0
        %3507 = vmatprep.subr.bf16.mxu0 0
        %3508 = vmatpush1.bf16.msra.mxu0 0
        %3509 = vmatprep.subr.bf16.mxu0 0
        %3510 = vmatpush1.bf16.msra.mxu0 %v3470
        %3511 = vmatprep.subr.bf16.mxu0 0
        %3512 = vmatpush1.bf16.msra.mxu0 %v3469
        %3513 = vmatprep.subr.bf16.mxu0 0
        %3514 = vmatpush2.bf16.msra.mxu0 0
        %3515 = vmatprep.subr.bf16.mxu0 0
        %3516 = vmatpush2.bf16.msra.mxu0 0
        %3517 = vmatprep.subr.bf16.mxu0 0
        %3518 = vmatpush2.bf16.msra.mxu0 0
        %3519 = vmatprep.subr.bf16.mxu0 0
        %3520 = vmatpush2.bf16.msra.mxu0 0
        %3521 = vmatprep.subr.bf16.mxu0 0
        %3522 = vmatpush2.bf16.msra.mxu0 0
        %3523 = vmatprep.subr.bf16.mxu0 0
        %3524 = vmatpush2.bf16.msra.mxu0 0
        %3525 = vmatprep.subr.bf16.mxu0 0
        %3526 = vmatpush2.bf16.msra.mxu0 0
        %3527 = vmatprep.subr.bf16.mxu0 0
        %3528 = vmatpush2.bf16.msra.mxu0 0
        %3529 = vmatprep.mubr.bf16.mxu0 0
        %3530 = vmatmul.mubr.bf16.gmra.mxu0 %v3474
        %v3531 = vpop.f32.mrf.mxu0
        %v3532 = vadd.f32 0.0, %v3531
        %v3533 = vpop.f32.mrf.mxu0
        %v3534 = vpop.f32.mrf.mxu0
        %v3535 = vadd.f32 0.0, %v3534
        %v3536 = vpop.f32.mrf.mxu0
        %3537 = vmatprep.mubr.bf16.mxu0 0
        %3538 = vmatmul.mubr.bf16.gmra.mxu0 %v3477
        %v3539 = vpop.f32.mrf.mxu0
        %v3540 = vadd.f32 0.0, %v3539
        %v3541 = vpop.f32.mrf.mxu0
        %v3542 = vpop.f32.mrf.mxu0
        %v3543 = vadd.f32 0.0, %v3542
        %v3544 = vpop.f32.mrf.mxu0
        %3545 = vmatprep.mubr.bf16.mxu0 0
        %3546 = vmatmul.mubr.bf16.gmra.mxu0 %v3480
        %v3547 = vpop.f32.mrf.mxu0
        %v3548 = vadd.f32 0.0, %v3547
        %v3549 = vpop.f32.mrf.mxu0
        %v3550 = vpop.f32.mrf.mxu0
        %v3551 = vadd.f32 0.0, %v3550
        %v3552 = vpop.f32.mrf.mxu0
        %3553 = vmatprep.mubr.bf16.mxu0 0
        %3554 = vmatmul.mubr.bf16.gmra.mxu0 %v3483
        %v3555 = vpop.f32.mrf.mxu0
        %v3556 = vadd.f32 0.0, %v3555
        %v3557 = vpop.f32.mrf.mxu0
        %v3558 = vpop.f32.mrf.mxu0
        %v3559 = vadd.f32 0.0, %v3558
        %v3560 = vpop.f32.mrf.mxu0
        %3561 = vmatprep.mubr.bf16.mxu0 0
        %3562 = vmatmul.mubr.bf16.gmra.mxu0 %v3486
        %v3563 = vpop.f32.mrf.mxu0
        %v3564 = vadd.f32 0.0, %v3563
        %v3565 = vpop.f32.mrf.mxu0
        %v3566 = vpop.f32.mrf.mxu0
        %v3567 = vadd.f32 0.0, %v3566
        %v3568 = vpop.f32.mrf.mxu0
        %3569 = vmatprep.mubr.bf16.mxu0 0
        %3570 = vmatmul.mubr.bf16.gmra.mxu0 %v3489
        %v3571 = vpop.f32.mrf.mxu0
        %v3572 = vadd.f32 0.0, %v3571
        %v3573 = vpop.f32.mrf.mxu0
        %v3574 = vpop.f32.mrf.mxu0
        %v3575 = vadd.f32 0.0, %v3574
        %v3576 = vpop.f32.mrf.mxu0
        %3577 = vmatprep.mubr.bf16.mxu0 0
        %3578 = vmatmul.mubr.bf16.gmra.mxu0 %v3492
        %v3579 = vpop.f32.mrf.mxu0
        %v3580 = vadd.f32 0.0, %v3579
        %v3581 = vpop.f32.mrf.mxu0
        %v3582 = vpop.f32.mrf.mxu0
        %v3583 = vadd.f32 0.0, %v3582
        %v3584 = vpop.f32.mrf.mxu0
        %3585 = vmatprep.mubr.bf16.mxu0 0
        %3586 = vmatmul.mubr.bf16.gmra.mxu0 %v3495
        %v3587 = vpop.f32.mrf.mxu0
        %v3588 = vadd.f32 0.0, %v3587
        %v3589 = vpop.f32.mrf.mxu0
        %v3590 = vpop.f32.mrf.mxu0
        %v3591 = vadd.f32 0.0, %v3590
        %v3592 = vpop.f32.mrf.mxu0
        %3593 = vdwg.mxu0
        %v3594 = vadd.f32 %v3201, %v3532
        %v3595 = vadd.f32 %v3202, %v3535
        %v3596 = vadd.f32 %v3203, %v3540
        %v3597 = vadd.f32 %v3204, %v3543
        %v3598 = vadd.f32 %v3205, %v3548
        %v3599 = vadd.f32 %v3206, %v3551
        %v3600 = vadd.f32 %v3207, %v3556
        %v3601 = vadd.f32 %v3208, %v3559
        %v3602 = vadd.f32 %v3209, %v3564
        %v3603 = vadd.f32 %v3210, %v3567
        %v3604 = vadd.f32 %v3211, %v3572
        %v3605 = vadd.f32 %v3212, %v3575
        %v3606 = vadd.f32 %v3213, %v3580
        %v3607 = vadd.f32 %v3214, %v3583
        %v3608 = vadd.f32 %v3215, %v3588
        %v3609 = vadd.f32 %v3216, %v3591
        %v3610 = vld [vmem:[%s3007] sm:$0xe]
        %v3611 = vld [vmem:[%s3007 + $0xc] sm:$0xe]
        %v3612 = vld [vmem:[%s3007 + $0x18] sm:$0xe]
        %v3613 = vld [vmem:[%s3007 + $0x24] sm:$0xe]
        %v3614 = vld [vmem:[%s3007 + $0x30] sm:$0xe]
        %v3615 = vld [vmem:[%s3007 + $0x3c] sm:$0xe]
        %v3616 = vld [vmem:[%s3007 + $0x48] sm:$0xe]
        %v3617 = vld [vmem:[%s3007 + $0x54] sm:$0xe]
        %v3642 = vrot.slane %v3610, 5
        %v3643 = vrot.slane %v3642, 4
        %v3644 = vrot.slane %v3218, 5
        %v3645 = vsel %vm1905, %v3643, %v3644
        %v3646 = vrot.slane %v3644, 4
        %v3647 = vrot.slane %v3219, 5
        %v3648 = vsel %vm1905, %v3646, %v3647
        %v3649 = vrot.slane %v3611, 5
        %v3650 = vrot.slane %v3649, 4
        %v3651 = vrot.slane %v3221, 5
        %v3652 = vsel %vm1905, %v3650, %v3651
        %v3653 = vrot.slane %v3651, 4
        %v3654 = vrot.slane %v3222, 5
        %v3655 = vsel %vm1905, %v3653, %v3654
        %v3656 = vrot.slane %v3612, 5
        %v3657 = vrot.slane %v3656, 4
        %v3658 = vrot.slane %v3224, 5
        %v3659 = vsel %vm1905, %v3657, %v3658
        %v3660 = vrot.slane %v3658, 4
        %v3661 = vrot.slane %v3225, 5
        %v3662 = vsel %vm1905, %v3660, %v3661
        %v3663 = vrot.slane %v3613, 5
        %v3664 = vrot.slane %v3663, 4
        %v3665 = vrot.slane %v3227, 5
        %v3666 = vsel %vm1905, %v3664, %v3665
        %v3667 = vrot.slane %v3665, 4
        %v3668 = vrot.slane %v3228, 5
        %v3669 = vsel %vm1905, %v3667, %v3668
        %v3670 = vrot.slane %v3614, 5
        %v3671 = vrot.slane %v3670, 4
        %v3672 = vrot.slane %v3230, 5
        %v3673 = vsel %vm1905, %v3671, %v3672
        %v3674 = vrot.slane %v3672, 4
        %v3675 = vrot.slane %v3231, 5
        %v3676 = vsel %vm1905, %v3674, %v3675
        %v3677 = vrot.slane %v3615, 5
        %v3678 = vrot.slane %v3677, 4
        %v3679 = vrot.slane %v3233, 5
        %v3680 = vsel %vm1905, %v3678, %v3679
        %v3681 = vrot.slane %v3679, 4
        %v3682 = vrot.slane %v3234, 5
        %v3683 = vsel %vm1905, %v3681, %v3682
        %v3684 = vrot.slane %v3616, 5
        %v3685 = vrot.slane %v3684, 4
        %v3686 = vrot.slane %v3236, 5
        %v3687 = vsel %vm1905, %v3685, %v3686
        %v3688 = vrot.slane %v3686, 4
        %v3689 = vrot.slane %v3237, 5
        %v3690 = vsel %vm1905, %v3688, %v3689
        %v3691 = vrot.slane %v3617, 5
        %v3692 = vrot.slane %v3691, 4
        %v3693 = vrot.slane %v3239, 5
        %v3694 = vsel %vm1905, %v3692, %v3693
        %v3695 = vrot.slane %v3693, 4
        %v3696 = vrot.slane %v3240, 5
        %v3697 = vsel %vm1905, %v3695, %v3696
        %v3698 = vld [vmem:[%s4 + $0x80] sm:$0xf]
        %v3699 = vld [vmem:[%s4 + $0x84] sm:$0xf]
        %v3700 = vld [vmem:[%s4 + $0x88] sm:$0xf]
        %v3701 = vld [vmem:[%s4 + $0x8c] sm:$0xf]
        %v3702 = vunpack.c.l.b16 %v3645
        %v3703 = vunpack.c.l.b16 %v3648
        %v3704 = vunpack.c.l.b16 %v3652
        %v3705 = vunpack.c.l.b16 %v3655
        %v3706 = vunpack.c.l.b16 %v3659
        %v3707 = vunpack.c.l.b16 %v3662
        %v3708 = vunpack.c.l.b16 %v3666
        %v3709 = vunpack.c.l.b16 %v3669
        %v3710 = vunpack.c.l.b16 %v3673
        %v3711 = vunpack.c.l.b16 %v3676
        %v3712 = vunpack.c.l.b16 %v3680
        %v3713 = vunpack.c.l.b16 %v3683
        %v3714 = vunpack.c.l.b16 %v3687
        %v3715 = vunpack.c.l.b16 %v3690
        %v3716 = vunpack.c.l.b16 %v3694
        %v3717 = vunpack.c.l.b16 %v3697
        %v3718 = vpack.c.b16 %v3703, %v3702
        %v3719 = vpack.c.b16 %v3705, %v3704
        %v3720 = vpack.c.b16 %v3707, %v3706
        %v3721 = vpack.c.b16 %v3709, %v3708
        %v3722 = vpack.c.b16 %v3711, %v3710
        %v3723 = vpack.c.b16 %v3713, %v3712
        %v3724 = vpack.c.b16 %v3715, %v3714
        %v3725 = vpack.c.b16 %v3717, %v3716
        %v3730 = vunpack.c.l.b16 %v3698
        %v3731 = vunpack.c.l.b16 %v3699
        %v3732 = vunpack.c.l.b16 %v3700
        %v3733 = vunpack.c.l.b16 %v3701
        %v3734 = vpack.c.b16 %v3731, %v3730
        %v3735 = vpack.c.b16 %v3733, %v3732
        %v3739 = vsel %vm1584, %v3718, 0
        %v3742 = vsel %vm1584, %v3719, 0
        %v3745 = vsel %vm1584, %v3720, 0
        %v3748 = vsel %vm1584, %v3721, 0
        %v3751 = vsel %vm1584, %v3722, 0
        %v3754 = vsel %vm1584, %v3723, 0
        %v3757 = vsel %vm1584, %v3724, 0
        %v3760 = vsel %vm1584, %v3725, 0
        %3762 = vmatprep.subr.bf16.mxu0 0
        %3763 = vmatpush1.bf16.msra.mxu0 0
        %3764 = vmatprep.subr.bf16.mxu0 0
        %3765 = vmatpush1.bf16.msra.mxu0 0
        %3766 = vmatprep.subr.bf16.mxu0 0
        %3767 = vmatpush1.bf16.msra.mxu0 0
        %3768 = vmatprep.subr.bf16.mxu0 0
        %3769 = vmatpush1.bf16.msra.mxu0 0
        %3770 = vmatprep.subr.bf16.mxu0 0
        %3771 = vmatpush1.bf16.msra.mxu0 0
        %3772 = vmatprep.subr.bf16.mxu0 0
        %3773 = vmatpush1.bf16.msra.mxu0 0
        %3774 = vmatprep.subr.bf16.mxu0 0
        %3775 = vmatpush1.bf16.msra.mxu0 %v3735
        %3776 = vmatprep.subr.bf16.mxu0 0
        %3777 = vmatpush1.bf16.msra.mxu0 %v3734
        %3778 = vmatprep.subr.bf16.mxu0 0
        %3779 = vmatpush2.bf16.msra.mxu0 0
        %3780 = vmatprep.subr.bf16.mxu0 0
        %3781 = vmatpush2.bf16.msra.mxu0 0
        %3782 = vmatprep.subr.bf16.mxu0 0
        %3783 = vmatpush2.bf16.msra.mxu0 0
        %3784 = vmatprep.subr.bf16.mxu0 0
        %3785 = vmatpush2.bf16.msra.mxu0 0
        %3786 = vmatprep.subr.bf16.mxu0 0
        %3787 = vmatpush2.bf16.msra.mxu0 0
        %3788 = vmatprep.subr.bf16.mxu0 0
        %3789 = vmatpush2.bf16.msra.mxu0 0
        %3790 = vmatprep.subr.bf16.mxu0 0
        %3791 = vmatpush2.bf16.msra.mxu0 0
        %3792 = vmatprep.subr.bf16.mxu0 0
        %3793 = vmatpush2.bf16.msra.mxu0 0
        %3794 = vmatprep.mubr.bf16.mxu0 0
        %3795 = vmatmul.mubr.bf16.gmra.mxu0 %v3739
        %v3796 = vpop.f32.mrf.mxu0
        %v3797 = vadd.f32 0.0, %v3796
        %v3798 = vpop.f32.mrf.mxu0
        %v3799 = vpop.f32.mrf.mxu0
        %v3800 = vadd.f32 0.0, %v3799
        %v3801 = vpop.f32.mrf.mxu0
        %3802 = vmatprep.mubr.bf16.mxu0 0
        %3803 = vmatmul.mubr.bf16.gmra.mxu0 %v3742
        %v3804 = vpop.f32.mrf.mxu0
        %v3805 = vadd.f32 0.0, %v3804
        %v3806 = vpop.f32.mrf.mxu0
        %v3807 = vpop.f32.mrf.mxu0
        %v3808 = vadd.f32 0.0, %v3807
        %v3809 = vpop.f32.mrf.mxu0
        %3810 = vmatprep.mubr.bf16.mxu0 0
        %3811 = vmatmul.mubr.bf16.gmra.mxu0 %v3745
        %v3812 = vpop.f32.mrf.mxu0
        %v3813 = vadd.f32 0.0, %v3812
        %v3814 = vpop.f32.mrf.mxu0
        %v3815 = vpop.f32.mrf.mxu0
        %v3816 = vadd.f32 0.0, %v3815
        %v3817 = vpop.f32.mrf.mxu0
        %3818 = vmatprep.mubr.bf16.mxu0 0
        %3819 = vmatmul.mubr.bf16.gmra.mxu0 %v3748
        %v3820 = vpop.f32.mrf.mxu0
        %v3821 = vadd.f32 0.0, %v3820
        %v3822 = vpop.f32.mrf.mxu0
        %v3823 = vpop.f32.mrf.mxu0
        %v3824 = vadd.f32 0.0, %v3823
        %v3825 = vpop.f32.mrf.mxu0
        %3826 = vmatprep.mubr.bf16.mxu0 0
        %3827 = vmatmul.mubr.bf16.gmra.mxu0 %v3751
        %v3828 = vpop.f32.mrf.mxu0
        %v3829 = vadd.f32 0.0, %v3828
        %v3830 = vpop.f32.mrf.mxu0
        %v3831 = vpop.f32.mrf.mxu0
        %v3832 = vadd.f32 0.0, %v3831
        %v3833 = vpop.f32.mrf.mxu0
        %3834 = vmatprep.mubr.bf16.mxu0 0
        %3835 = vmatmul.mubr.bf16.gmra.mxu0 %v3754
        %v3836 = vpop.f32.mrf.mxu0
        %v3837 = vadd.f32 0.0, %v3836
        %v3838 = vpop.f32.mrf.mxu0
        %v3839 = vpop.f32.mrf.mxu0
        %v3840 = vadd.f32 0.0, %v3839
        %v3841 = vpop.f32.mrf.mxu0
        %3842 = vmatprep.mubr.bf16.mxu0 0
        %3843 = vmatmul.mubr.bf16.gmra.mxu0 %v3757
        %v3844 = vpop.f32.mrf.mxu0
        %v3845 = vadd.f32 0.0, %v3844
        %v3846 = vpop.f32.mrf.mxu0
        %v3847 = vpop.f32.mrf.mxu0
        %v3848 = vadd.f32 0.0, %v3847
        %v3849 = vpop.f32.mrf.mxu0
        %3850 = vmatprep.mubr.bf16.mxu0 0
        %3851 = vmatmul.mubr.bf16.gmra.mxu0 %v3760
        %v3852 = vpop.f32.mrf.mxu0
        %v3853 = vadd.f32 0.0, %v3852
        %v3854 = vpop.f32.mrf.mxu0
        %v3855 = vpop.f32.mrf.mxu0
        %v3856 = vadd.f32 0.0, %v3855
        %v3857 = vpop.f32.mrf.mxu0
        %3858 = vdwg.mxu0
        %v3859 = vadd.f32 %v3594, %v3797
        %v3860 = vadd.f32 %v3595, %v3800
        %v3861 = vadd.f32 %v3596, %v3805
        %v3862 = vadd.f32 %v3597, %v3808
        %v3863 = vadd.f32 %v3598, %v3813
        %v3864 = vadd.f32 %v3599, %v3816
        %v3865 = vadd.f32 %v3600, %v3821
        %v3866 = vadd.f32 %v3601, %v3824
        %v3867 = vadd.f32 %v3602, %v3829
        %v3868 = vadd.f32 %v3603, %v3832
        %v3869 = vadd.f32 %v3604, %v3837
        %v3870 = vadd.f32 %v3605, %v3840
        %v3871 = vadd.f32 %v3606, %v3845
        %v3872 = vadd.f32 %v3607, %v3848
        %v3873 = vadd.f32 %v3608, %v3853
        %v3874 = vadd.f32 %v3609, %v3856
        %v3875 = vld [vmem:[%s8] sm:$0x1]
        %v3877 = vlaneseq
        %v3878 = vshrl.u32 %v3877, 7
        %v3879 = vsub.s32 0, %v3878
        %v3880 = vrot.slane %v3875, %v3879
        %v3882 = vmul.f32 %v3859, %v3880
        %v3883 = vmul.f32 %v3860, %v3880
        %v3884 = vmul.f32 %v3861, %v3880
        %v3885 = vmul.f32 %v3862, %v3880
        %v3886 = vmul.f32 %v3863, %v3880
        %v3887 = vmul.f32 %v3864, %v3880
        %v3888 = vmul.f32 %v3865, %v3880
        %v3889 = vmul.f32 %v3866, %v3880
        %v3890 = vmul.f32 %v3867, %v3880
        %v3891 = vmul.f32 %v3868, %v3880
        %v3892 = vmul.f32 %v3869, %v3880
        %v3893 = vmul.f32 %v3870, %v3880
        %v3894 = vmul.f32 %v3871, %v3880
        %v3895 = vmul.f32 %v3872, %v3880
        %v3896 = vmul.f32 %v3873, %v3880
        %v3897 = vmul.f32 %v3874, %v3880
        %v3898 = vld [vmem:[%s9] sm:$0x1]
        %v3900 = vlaneseq
        %v3901 = vshrl.u32 %v3900, 7
        %v3902 = vsub.s32 0, %v3901
        %v3903 = vrot.slane %v3898, %v3902
        %v3905 = vadd.f32 %v3882, %v3903
        %v3906 = vadd.f32 %v3883, %v3903
        %v3907 = vadd.f32 %v3884, %v3903
        %v3908 = vadd.f32 %v3885, %v3903
        %v3909 = vadd.f32 %v3886, %v3903
        %v3910 = vadd.f32 %v3887, %v3903
        %v3911 = vadd.f32 %v3888, %v3903
        %v3912 = vadd.f32 %v3889, %v3903
        %v3913 = vadd.f32 %v3890, %v3903
        %v3914 = vadd.f32 %v3891, %v3903
        %v3915 = vadd.f32 %v3892, %v3903
        %v3916 = vadd.f32 %v3893, %v3903
        %v3917 = vadd.f32 %v3894, %v3903
        %v3918 = vadd.f32 %v3895, %v3903
        %v3919 = vadd.f32 %v3896, %v3903
        %v3920 = vadd.f32 %v3897, %v3903
        %v3921 = vmax.f32 %v3905, 0.0
        %v3922 = vmax.f32 %v3906, 0.0
        %v3923 = vmax.f32 %v3907, 0.0
        %v3924 = vmax.f32 %v3908, 0.0
        %v3925 = vmax.f32 %v3909, 0.0
        %v3926 = vmax.f32 %v3910, 0.0
        %v3927 = vmax.f32 %v3911, 0.0
        %v3928 = vmax.f32 %v3912, 0.0
        %v3929 = vmax.f32 %v3913, 0.0
        %v3930 = vmax.f32 %v3914, 0.0
        %v3931 = vmax.f32 %v3915, 0.0
        %v3932 = vmax.f32 %v3916, 0.0
        %v3933 = vmax.f32 %v3917, 0.0
        %v3934 = vmax.f32 %v3918, 0.0
        %v3935 = vmax.f32 %v3919, 0.0
        %v3936 = vmax.f32 %v3920, 0.0
        %v3937 = vpack.c.bf16 %v3922, %v3921
        %v3938 = vpack.c.bf16 %v3924, %v3923
        %v3939 = vpack.c.bf16 %v3926, %v3925
        %v3940 = vpack.c.bf16 %v3928, %v3927
        %v3941 = vpack.c.bf16 %v3930, %v3929
        %v3942 = vpack.c.bf16 %v3932, %v3931
        %v3943 = vpack.c.bf16 %v3934, %v3933
        %v3944 = vpack.c.bf16 %v3936, %v3935
        %v3945 = vld [vmem:[%s5] sm:$0xf]
        %v3946 = vld [vmem:[%s5 + $0x4] sm:$0xf]
        %v3947 = vld [vmem:[%s5 + $0x8] sm:$0xf]
        %v3948 = vld [vmem:[%s5 + $0xc] sm:$0xf]
        %v3953 = vunpack.c.l.b16 %v3945
        %v3954 = vunpack.c.l.b16 %v3946
        %v3955 = vunpack.c.l.b16 %v3947
        %v3956 = vunpack.c.l.b16 %v3948
        %v3957 = vpack.c.b16 %v3954, %v3953
        %v3958 = vpack.c.b16 %v3956, %v3955
        %v3962 = vsel %vm1584, %v3937, 0
        %v3965 = vsel %vm1584, %v3938, 0
        %v3968 = vsel %vm1584, %v3939, 0
        %v3971 = vsel %vm1584, %v3940, 0
        %v3974 = vsel %vm1584, %v3941, 0
        %v3977 = vsel %vm1584, %v3942, 0
        %v3980 = vsel %vm1584, %v3943, 0
        %v3983 = vsel %vm1584, %v3944, 0
        %3985 = vmatprep.subr.bf16.mxu0 0
        %3986 = vmatpush1.bf16.msra.mxu0 0
        %3987 = vmatprep.subr.bf16.mxu0 0
        %3988 = vmatpush1.bf16.msra.mxu0 0
        %3989 = vmatprep.subr.bf16.mxu0 0
        %3990 = vmatpush1.bf16.msra.mxu0 0
        %3991 = vmatprep.subr.bf16.mxu0 0
        %3992 = vmatpush1.bf16.msra.mxu0 0
        %3993 = vmatprep.subr.bf16.mxu0 0
        %3994 = vmatpush1.bf16.msra.mxu0 0
        %3995 = vmatprep.subr.bf16.mxu0 0
        %3996 = vmatpush1.bf16.msra.mxu0 0
        %3997 = vmatprep.subr.bf16.mxu0 0
        %3998 = vmatpush1.bf16.msra.mxu0 %v3958
        %3999 = vmatprep.subr.bf16.mxu0 0
        %4000 = vmatpush1.bf16.msra.mxu0 %v3957
        %4001 = vmatprep.subr.bf16.mxu0 0
        %4002 = vmatpush2.bf16.msra.mxu0 0
        %4003 = vmatprep.subr.bf16.mxu0 0
        %4004 = vmatpush2.bf16.msra.mxu0 0
        %4005 = vmatprep.subr.bf16.mxu0 0
        %4006 = vmatpush2.bf16.msra.mxu0 0
        %4007 = vmatprep.subr.bf16.mxu0 0
        %4008 = vmatpush2.bf16.msra.mxu0 0
        %4009 = vmatprep.subr.bf16.mxu0 0
        %4010 = vmatpush2.bf16.msra.mxu0 0
        %4011 = vmatprep.subr.bf16.mxu0 0
        %4012 = vmatpush2.bf16.msra.mxu0 0
        %4013 = vmatprep.subr.bf16.mxu0 0
        %4014 = vmatpush2.bf16.msra.mxu0 0
        %4015 = vmatprep.subr.bf16.mxu0 0
        %4016 = vmatpush2.bf16.msra.mxu0 0
        %4017 = vmatprep.mubr.bf16.mxu0 0
        %4018 = vmatmul.mubr.bf16.gmra.mxu0 %v3962
        %v4019 = vpop.f32.mrf.mxu0
        %v4020 = vadd.f32 0.0, %v4019
        %v4021 = vpop.f32.mrf.mxu0
        %v4022 = vpop.f32.mrf.mxu0
        %v4023 = vadd.f32 0.0, %v4022
        %v4024 = vpop.f32.mrf.mxu0
        %4025 = vmatprep.mubr.bf16.mxu0 0
        %4026 = vmatmul.mubr.bf16.gmra.mxu0 %v3965
        %v4027 = vpop.f32.mrf.mxu0
        %v4028 = vadd.f32 0.0, %v4027
        %v4029 = vpop.f32.mrf.mxu0
        %v4030 = vpop.f32.mrf.mxu0
        %v4031 = vadd.f32 0.0, %v4030
        %v4032 = vpop.f32.mrf.mxu0
        %4033 = vmatprep.mubr.bf16.mxu0 0
        %4034 = vmatmul.mubr.bf16.gmra.mxu0 %v3968
        %v4035 = vpop.f32.mrf.mxu0
        %v4036 = vadd.f32 0.0, %v4035
        %v4037 = vpop.f32.mrf.mxu0
        %v4038 = vpop.f32.mrf.mxu0
        %v4039 = vadd.f32 0.0, %v4038
        %v4040 = vpop.f32.mrf.mxu0
        %4041 = vmatprep.mubr.bf16.mxu0 0
        %4042 = vmatmul.mubr.bf16.gmra.mxu0 %v3971
        %v4043 = vpop.f32.mrf.mxu0
        %v4044 = vadd.f32 0.0, %v4043
        %v4045 = vpop.f32.mrf.mxu0
        %v4046 = vpop.f32.mrf.mxu0
        %v4047 = vadd.f32 0.0, %v4046
        %v4048 = vpop.f32.mrf.mxu0
        %4049 = vmatprep.mubr.bf16.mxu0 0
        %4050 = vmatmul.mubr.bf16.gmra.mxu0 %v3974
        %v4051 = vpop.f32.mrf.mxu0
        %v4052 = vadd.f32 0.0, %v4051
        %v4053 = vpop.f32.mrf.mxu0
        %v4054 = vpop.f32.mrf.mxu0
        %v4055 = vadd.f32 0.0, %v4054
        %v4056 = vpop.f32.mrf.mxu0
        %4057 = vmatprep.mubr.bf16.mxu0 0
        %4058 = vmatmul.mubr.bf16.gmra.mxu0 %v3977
        %v4059 = vpop.f32.mrf.mxu0
        %v4060 = vadd.f32 0.0, %v4059
        %v4061 = vpop.f32.mrf.mxu0
        %v4062 = vpop.f32.mrf.mxu0
        %v4063 = vadd.f32 0.0, %v4062
        %v4064 = vpop.f32.mrf.mxu0
        %4065 = vmatprep.mubr.bf16.mxu0 0
        %4066 = vmatmul.mubr.bf16.gmra.mxu0 %v3980
        %v4067 = vpop.f32.mrf.mxu0
        %v4068 = vadd.f32 0.0, %v4067
        %v4069 = vpop.f32.mrf.mxu0
        %v4070 = vpop.f32.mrf.mxu0
        %v4071 = vadd.f32 0.0, %v4070
        %v4072 = vpop.f32.mrf.mxu0
        %4073 = vmatprep.mubr.bf16.mxu0 0
        %4074 = vmatmul.mubr.bf16.gmra.mxu0 %v3983
        %v4075 = vpop.f32.mrf.mxu0
        %v4076 = vadd.f32 0.0, %v4075
        %v4077 = vpop.f32.mrf.mxu0
        %v4078 = vpop.f32.mrf.mxu0
        %v4079 = vadd.f32 0.0, %v4078
        %v4080 = vpop.f32.mrf.mxu0
        %4081 = vdwg.mxu0
        %v4082 = vld [vmem:[%s10] sm:$0x1]
        %v4084 = vlaneseq
        %v4085 = vshrl.u32 %v4084, 7
        %v4086 = vsub.s32 0, %v4085
        %v4087 = vrot.slane %v4082, %v4086
        %v4089 = vmul.f32 %v4020, %v4087
        %v4090 = vmul.f32 %v4023, %v4087
        %v4091 = vmul.f32 %v4028, %v4087
        %v4092 = vmul.f32 %v4031, %v4087
        %v4093 = vmul.f32 %v4036, %v4087
        %v4094 = vmul.f32 %v4039, %v4087
        %v4095 = vmul.f32 %v4044, %v4087
        %v4096 = vmul.f32 %v4047, %v4087
        %v4097 = vmul.f32 %v4052, %v4087
        %v4098 = vmul.f32 %v4055, %v4087
        %v4099 = vmul.f32 %v4060, %v4087
        %v4100 = vmul.f32 %v4063, %v4087
        %v4101 = vmul.f32 %v4068, %v4087
        %v4102 = vmul.f32 %v4071, %v4087
        %v4103 = vmul.f32 %v4076, %v4087
        %v4104 = vmul.f32 %v4079, %v4087
        %v4105 = vld [vmem:[%s11] sm:$0x1]
        %v4107 = vlaneseq
        %v4108 = vshrl.u32 %v4107, 7
        %v4109 = vsub.s32 0, %v4108
        %v4110 = vrot.slane %v4105, %v4109
        %v4112 = vadd.f32 %v4089, %v4110
        %v4113 = vadd.f32 %v4090, %v4110
        %v4114 = vadd.f32 %v4091, %v4110
        %v4115 = vadd.f32 %v4092, %v4110
        %v4116 = vadd.f32 %v4093, %v4110
        %v4117 = vadd.f32 %v4094, %v4110
        %v4118 = vadd.f32 %v4095, %v4110
        %v4119 = vadd.f32 %v4096, %v4110
        %v4120 = vadd.f32 %v4097, %v4110
        %v4121 = vadd.f32 %v4098, %v4110
        %v4122 = vadd.f32 %v4099, %v4110
        %v4123 = vadd.f32 %v4100, %v4110
        %v4124 = vadd.f32 %v4101, %v4110
        %v4125 = vadd.f32 %v4102, %v4110
        %v4126 = vadd.f32 %v4103, %v4110
        %v4127 = vadd.f32 %v4104, %v4110
        %v4128 = vld [vmem:[%s555] sm:$0xf]
        %v4129 = vld [vmem:[%s555 + $0x4] sm:$0xf]
        %v4130 = vld [vmem:[%s555 + $0x8] sm:$0xf]
        %v4131 = vld [vmem:[%s555 + $0xc] sm:$0xf]
        %v4132 = vld [vmem:[%s555 + $0x10] sm:$0xf]
        %v4133 = vld [vmem:[%s555 + $0x14] sm:$0xf]
        %v4134 = vld [vmem:[%s555 + $0x18] sm:$0xf]
        %v4135 = vld [vmem:[%s555 + $0x1c] sm:$0xf]
        %v4136 = vld [vmem:[%s555 + $0x20] sm:$0xf]
        %v4137 = vld [vmem:[%s555 + $0x24] sm:$0xf]
        %v4138 = vld [vmem:[%s555 + $0x28] sm:$0xf]
        %v4139 = vld [vmem:[%s555 + $0x2c] sm:$0xf]
        %v4140 = vld [vmem:[%s555 + $0x30] sm:$0xf]
        %v4141 = vld [vmem:[%s555 + $0x34] sm:$0xf]
        %v4142 = vld [vmem:[%s555 + $0x38] sm:$0xf]
        %v4143 = vld [vmem:[%s555 + $0x3c] sm:$0xf]
        %v4144 = vunpack.c.l.bf16 %v4128
        %v4145 = vunpack.c.l.bf16 %v4129
        %v4146 = vunpack.c.l.bf16 %v4130
        %v4147 = vunpack.c.l.bf16 %v4131
        %v4148 = vunpack.c.l.bf16 %v4132
        %v4149 = vunpack.c.l.bf16 %v4133
        %v4150 = vunpack.c.l.bf16 %v4134
        %v4151 = vunpack.c.l.bf16 %v4135
        %v4152 = vunpack.c.l.bf16 %v4136
        %v4153 = vunpack.c.l.bf16 %v4137
        %v4154 = vunpack.c.l.bf16 %v4138
        %v4155 = vunpack.c.l.bf16 %v4139
        %v4156 = vunpack.c.l.bf16 %v4140
        %v4157 = vunpack.c.l.bf16 %v4141
        %v4158 = vunpack.c.l.bf16 %v4142
        %v4159 = vunpack.c.l.bf16 %v4143
        %v4160 = vadd.f32 %v4112, %v4144
        %v4161 = vadd.f32 %v4113, %v4145
        %v4162 = vadd.f32 %v4114, %v4146
        %v4163 = vadd.f32 %v4115, %v4147
        %v4164 = vadd.f32 %v4116, %v4148
        %v4165 = vadd.f32 %v4117, %v4149
        %v4166 = vadd.f32 %v4118, %v4150
        %v4167 = vadd.f32 %v4119, %v4151
        %v4168 = vadd.f32 %v4120, %v4152
        %v4169 = vadd.f32 %v4121, %v4153
        %v4170 = vadd.f32 %v4122, %v4154
        %v4171 = vadd.f32 %v4123, %v4155
        %v4172 = vadd.f32 %v4124, %v4156
        %v4173 = vadd.f32 %v4125, %v4157
        %v4174 = vadd.f32 %v4126, %v4158
        %v4175 = vadd.f32 %v4127, %v4159
        %v4176 = vmax.f32 %v4160, 0.0
        %v4177 = vmax.f32 %v4161, 0.0
        %v4178 = vmax.f32 %v4162, 0.0
        %v4179 = vmax.f32 %v4163, 0.0
        %v4180 = vmax.f32 %v4164, 0.0
        %v4181 = vmax.f32 %v4165, 0.0
        %v4182 = vmax.f32 %v4166, 0.0
        %v4183 = vmax.f32 %v4167, 0.0
        %v4184 = vmax.f32 %v4168, 0.0
        %v4185 = vmax.f32 %v4169, 0.0
        %v4186 = vmax.f32 %v4170, 0.0
        %v4187 = vmax.f32 %v4171, 0.0
        %v4188 = vmax.f32 %v4172, 0.0
        %v4189 = vmax.f32 %v4173, 0.0
        %v4190 = vmax.f32 %v4174, 0.0
        %v4191 = vmax.f32 %v4175, 0.0
        %v4192 = vpack.c.bf16 %v4177, %v4176
        %v4193 = vpack.c.bf16 %v4179, %v4178
        %v4194 = vpack.c.bf16 %v4181, %v4180
        %v4195 = vpack.c.bf16 %v4183, %v4182
        %v4196 = vpack.c.bf16 %v4185, %v4184
        %v4197 = vpack.c.bf16 %v4187, %v4186
        %v4198 = vpack.c.bf16 %v4189, %v4188
        %v4199 = vpack.c.bf16 %v4191, %v4190
        %v4208 = vunpack.c.l.b16 %v4192
        %v4209 = vunpack.c.h.b16 %v4192
        %v4210 = vunpack.c.l.b16 %v4193
        %v4211 = vunpack.c.h.b16 %v4193
        %v4212 = vunpack.c.l.b16 %v4194
        %v4213 = vunpack.c.h.b16 %v4194
        %v4214 = vunpack.c.l.b16 %v4195
        %v4215 = vunpack.c.h.b16 %v4195
        %v4216 = vunpack.c.l.b16 %v4196
        %v4217 = vunpack.c.h.b16 %v4196
        %v4218 = vunpack.c.l.b16 %v4197
        %v4219 = vunpack.c.h.b16 %v4197
        %v4220 = vunpack.c.l.b16 %v4198
        %v4221 = vunpack.c.h.b16 %v4198
        %v4222 = vunpack.c.l.b16 %v4199
        %v4223 = vunpack.c.h.b16 %v4199
        %v4224 = vpack.c.b16 %v4208, %v4208
        %v4225 = vpack.c.b16 %v4209, %v4209
        %v4226 = vpack.c.b16 %v4210, %v4210
        %v4227 = vpack.c.b16 %v4211, %v4211
        %v4228 = vpack.c.b16 %v4212, %v4212
        %v4229 = vpack.c.b16 %v4213, %v4213
        %v4230 = vpack.c.b16 %v4214, %v4214
        %v4231 = vpack.c.b16 %v4215, %v4215
        %v4232 = vpack.c.b16 %v4216, %v4216
        %v4233 = vpack.c.b16 %v4217, %v4217
        %v4234 = vpack.c.b16 %v4218, %v4218
        %v4235 = vpack.c.b16 %v4219, %v4219
        %v4236 = vpack.c.b16 %v4220, %v4220
        %v4237 = vpack.c.b16 %v4221, %v4221
        %v4238 = vpack.c.b16 %v4222, %v4222
        %v4239 = vpack.c.b16 %v4223, %v4223
        %4256 = vst [vmem:[%s545] sm:$0xf] %v4224
        %4257 = vst [vmem:[%s545 + $0x4] sm:$0xf] %v4225
        %4258 = vst [vmem:[%s545 + $0x8] sm:$0xf] %v4226
        %4259 = vst [vmem:[%s545 + $0xc] sm:$0xf] %v4227
        %4260 = vst [vmem:[%s545 + $0x10] sm:$0xf] %v4228
        %4261 = vst [vmem:[%s545 + $0x14] sm:$0xf] %v4229
        %4262 = vst [vmem:[%s545 + $0x18] sm:$0xf] %v4230
        %4263 = vst [vmem:[%s545 + $0x1c] sm:$0xf] %v4231
        %4264 = vst [vmem:[%s545 + $0x20] sm:$0xf] %v4232
        %4265 = vst [vmem:[%s545 + $0x24] sm:$0xf] %v4233
        %4266 = vst [vmem:[%s545 + $0x28] sm:$0xf] %v4234
        %4267 = vst [vmem:[%s545 + $0x2c] sm:$0xf] %v4235
        %4268 = vst [vmem:[%s545 + $0x30] sm:$0xf] %v4236
        %4269 = vst [vmem:[%s545 + $0x34] sm:$0xf] %v4237
        %4270 = vst [vmem:[%s545 + $0x38] sm:$0xf] %v4238
        %4271 = vst [vmem:[%s545 + $0x3c] sm:$0xf] %v4239
        %s4272 = sand.u32 %s343, 1
        %s4273 = scalar_lea.sflag [#allocation5], %s4272
        %s4274 = sand.u32 %s343, 1
        %s4275 = smul.addr %s4274, 64
        %s4276 = scalar_lea.vmem [#allocation8], %s4275
        // Predicated region
        $region85: #{tpu_custom_call.1} parent=67 // pred_check
          %p4277 = pneg %p353
        $region86: #{tpu_custom_call.1} parent=67 // pred_check_branch
          %4279 = sbr.rel (%p4277) target = $region88
        $region87: #{tpu_custom_call.1} parent=67 // pred_region
          %s4280 = smul.u32 8, %s37
          %s4282 = ssub.s32 1024, 1024
          %4283 = vsyncadd %s4273, %s4282
          %s4284 = smul.addr %s4280, 2
          %s4285 = smul.addr %s36, 32
          %s4286 = sadd.s32 %s4284, %s4285
          %s4287 = smul.addr %s4286, 64
          %s4288 = scalar_lea.hbm %s12, %s4287
          %s4289 = sshll.u32 %s4276, 4
          %s4290 = int_to_ptr.vmem [resolvable:$true] %s4289
          %4295 = dma.vmem_to_hbm [thread:$0]  %s4290, 1024, %s4288, %s4273, 64, 64, 4
        $region88: #{tpu_custom_call.1} parent=67 // pred_fallthru
          _
      $region68: #{tpu_custom_call.1} parent=5 // pred_fallthru
        _
      %p4296 = scmp.le.s32.totalorder 2, %s27
      // Predicated region
      $region89: #{tpu_custom_call.1} parent=5 // pred_check
        %p4297 = pneg %p4296
      $region90: #{tpu_custom_call.1} parent=5 // pred_check_branch
        %4299 = sbr.rel (%p4297) target = $region92
      $region91: #{tpu_custom_call.1} parent=5 // pred_region
        %s4300 = ssub.s32 %s27, 2
        // Predicated region
        $region93: #{tpu_custom_call.1} parent=91 // pred_check
          %p4301 = pneg %p359
        $region94: #{tpu_custom_call.1} parent=91 // pred_check_branch
          %4303 = sbr.rel (%p4301) target = $region96
        $region95: #{tpu_custom_call.1} parent=91 // pred_region
          %s4304 = sand.u32 %s344, 1
          %s4305 = scalar_lea.sflag [#allocation5], %s4304
          %s4306 = sand.u32 %s344, 1
          %s4307 = smul.addr %s4306, 64
          %s4308 = scalar_lea.vmem [#allocation8], %s4307
          %4309 = dma.done %s4305, 1024
        $region96: #{tpu_custom_call.1} parent=91 // pred_fallthru
          _
      $region92: #{tpu_custom_call.1} parent=5 // pred_fallthru
        _
    $region6: #{tpu_custom_call.1} parent=1 // loop_footer
      %s31 = sadd.s32 1, %s27
    $region7: #{tpu_custom_call.1} parent=1 // loop_footer_branch
      %26 = sbr.rel target = $region3
    $region8: #{tpu_custom_call.1} parent=1 // loop_exit
      _
    %4310 = vsyncpa [#allocation4], 1
    %s4311 = scalar_lea.sflag [#allocation4], 1
    %4312 = vsyncpa %s4311, 1
    %4313 = vsyncpa [#allocation7], 1
    %s4314 = scalar_lea.sflag [#allocation7], 1
    %4315 = vsyncpa %s4314, 1
    %4316 = vsyncpa [#allocation5], 1
    %s4317 = scalar_lea.sflag [#allocation5], 1
    %4318 = vsyncpa %s4317, 1

</llo_original>
